<compile_context>
chip_gen: v7x
topology: tpu7x:2x2x1
jax: 0.10.0
libtpu: 0.0.40
codegen_flags: <defaults>
</compile_context>

<pallas_src>
import functools

import jax
import jax.numpy as jnp
from jax import lax
from jax.experimental import pallas as pl
from jax.experimental.pallas import tpu as pltpu

N_RNNIN = 30          # hardcoded in the PyTorch module (self.n_rnnin = 30)
BN_EPS = 1e-5


def _vmem():
    # Whole-array block resident in VMEM (all shapes here are tiny).
    return pl.BlockSpec(memory_space=pltpu.MemorySpace.VMEM)


# --------------------------- fused forward kernel ----------------------------
def _fused_kernel(S, B, H,
                  x_ref, fc1_w_ref, fc1_b_ref,
                  wih1_ref, whh1_ref, b1_ref,
                  wih2_ref, whh2_ref, b2_ref,
                  h0_ref, c0_ref, out_w_ref, out_b_ref,
                  rnn_ref, dorsal_ref):
    """x_ref rows are time-major: row = t*B + b, shape (S*B, n_in).

    Outputs are time-major 3D: rnn_ref (S, B, H), dorsal_ref (S, B, n_out).
    """
    f32 = jnp.float32
    bf16 = jnp.bfloat16

    # ---- fc1: Linear -> ReLU -> BatchNorm1d(affine=False), training stats ----
    x = x_ref[...]                                            # (S*B, n_in) f32
    y = jnp.dot(x.astype(bf16), fc1_w_ref[...].astype(bf16),
                preferred_element_type=f32) + fc1_b_ref[...]
    y = jnp.maximum(y, 0.0)
    inv_n = 1.0 / y.shape[0]
    s1 = jnp.sum(y, axis=0, keepdims=True)                    # single pass:
    s2 = jnp.sum(y * y, axis=0, keepdims=True)                # sum & sum of squares
    mu = s1 * inv_n
    var = s2 * inv_n - mu * mu                                # biased variance
    rnnin = (y - mu) * lax.rsqrt(var + BN_EPS)                # (S*B, 30) f32
    # TODO(synk): running_mean / running_var buffers are not tracked (matches
    # nn.BatchNorm1d train()-mode forward only).

    # ---- hoisted layer-1 input projection for ALL timesteps (one matmul) ----
    pre1 = (jnp.dot(rnnin.astype(bf16), wih1_ref[...].astype(bf16),
                    preferred_element_type=f32) + b1_ref[...])        # (S*B, 4H)

    # Packed weights, loaded/cast once (bf16 MXU operands, f32 accumulation).
    whh1 = whh1_ref[...].astype(bf16)                         # (H, 4H)
    wih2 = wih2_ref[...].astype(bf16)                         # (H, 4H)
    whh2 = whh2_ref[...].astype(bf16)                         # (H, 4H)
    b2 = b2_ref[...]                                          # (1, 4H) f32
    out_w = out_w_ref[...].astype(bf16)                       # (H, n_out)
    out_b = out_b_ref[...]                                    # (1, n_out) f32

    def cell(gates, c):
        # gates: (B, 4H) f32, lane blocks [i | f | g | o] each H wide.
        sg = jax.nn.sigmoid(gates)                            # full-width EUP op
        tg = jnp.tanh(gates)                                  # full-width EUP op
        gi = sg[:, 0 * H:1 * H]
        gf = sg[:, 1 * H:2 * H]
        gg = tg[:, 2 * H:3 * H]
        go = sg[:, 3 * H:4 * H]
        c_new = gf * c + gi * gg
        h_new = go * jnp.tanh(c_new)
        return h_new, c_new

    h1 = h0_ref[0]
    c1 = c0_ref[0]
    h2 = h0_ref[1]
    c2 = c0_ref[1]

    # Fully-unrolled wavefront: iteration t runs layer-1 step t and layer-2
    # step t-1 (which only needs layer-1's step t-1 output, already available),
    # halving the dependent-chain length and letting the two recurrences'
    # MXU/EUP latencies hide each other.
    for t in range(S + 1):
        x2_in = h1                       # layer-1 output of step t-1 (t >= 1)
        if t < S:
            g1 = (pre1[t * B:(t + 1) * B, :]
                  + jnp.dot(h1.astype(bf16), whh1, preferred_element_type=f32))
            h1, c1 = cell(g1, c1)
        if t >= 1:
            g2 = (jnp.dot(x2_in.astype(bf16), wih2, preferred_element_type=f32)
                  + b2
                  + jnp.dot(h2.astype(bf16), whh2, preferred_element_type=f32))
            h2, c2 = cell(g2, c2)
            rnn_ref[t - 1] = h2                               # aligned slab store
            dorsal_ref[t - 1] = (jnp.dot(h2.astype(bf16), out_w,
                                         preferred_element_type=f32) + out_b)


# ------------------------------- wrapper --------------------------------------
@jax.jit
def dorsal_pathway0_forward(x, params, h0, c0):
    B, S, n_in = x.shape
    H = h0.shape[-1]
    n_out = params["out_w"].shape[-1]

    # Time-major rows (row = t*B + b); only relayout of the tiny input tensor.
    x_tm = jnp.transpose(x, (1, 0, 2)).reshape(S * B, n_in)

    inputs = (x_tm, params["fc1_w"], params["fc1_b"],
              params["wih1"], params["whh1"], params["b1"],
              params["wih2"], params["whh2"], params["b2"],
              h0, c0, params["out_w"], params["out_b"])

    flops = int(2 * S * B * (n_in * N_RNNIN              # fc1
                             + N_RNNIN * 4 * H           # layer-1 input proj (hoisted)
                             + 3 * H * 4 * H             # l1 recur + l2 input + l2 recur
                             + H * n_out))               # output linear
    transcendentals = int(2 * S * B * (2 * 4 * H + H))   # sigmoid+tanh gates + tanh(c)
    bytes_accessed = int(4 * (sum(int(a.size) for a in inputs)
                              + S * B * (H + n_out)))
    cost = pl.CostEstimate(flops=flops, transcendentals=transcendentals,
                           bytes_accessed=bytes_accessed)

    kernel = functools.partial(_fused_kernel, S, B, H)
    rnn_tm, dorsal_tm = pl.pallas_call(
        kernel,
        out_shape=(jax.ShapeDtypeStruct((S, B, H), jnp.float32),
                   jax.ShapeDtypeStruct((S, B, n_out), jnp.float32)),
        in_specs=[_vmem() for _ in range(len(inputs))],
        out_specs=(_vmem(), _vmem()),
        cost_estimate=cost,
    )(*inputs)

    # Module API is batch-major (B, S, .). Consumers that accept time-major
    # (S, B, .) should use rnn_tm / dorsal_tm directly and skip these copies.
    dorsal = jnp.transpose(dorsal_tm, (1, 0, 2))
    rnn_out = jnp.transpose(rnn_tm, (1, 0, 2))
    return dorsal, rnn_out


# ---------------- parameter init (deterministic, PyTorch-style uniform) ------
def init_params(key, n_in, n_out, n_layers=2, n_hidden=30):
    assert n_layers == 2, "fused kernel is written for the module default of 2 layers"
    H = n_hidden

    def unif(k, shape, bound):
        return jax.random.uniform(k, shape, jnp.float32, -bound, bound)

    keys = jax.random.split(key, 12)
    ki = iter(keys)

    p = {}
    b_fc = float(n_in) ** -0.5
    p["fc1_w"] = unif(next(ki), (n_in, N_RNNIN), b_fc)
    p["fc1_b"] = unif(next(ki), (1, N_RNNIN), b_fc)

    b_l = float(H) ** -0.5
    # Packed per-layer weights: lane blocks [i | f | g | o] (PyTorch gate order),
    # stored (in_features, 4H) so the kernel computes x @ W directly on the MXU.
    p["wih1"] = unif(next(ki), (N_RNNIN, 4 * H), b_l)
    p["whh1"] = unif(next(ki), (H, 4 * H), b_l)
    p["b1"] = unif(next(ki), (1, 4 * H), b_l) + unif(next(ki), (1, 4 * H), b_l)  # b_ih + b_hh
    p["wih2"] = unif(next(ki), (H, 4 * H), b_l)
    p["whh2"] = unif(next(ki), (H, 4 * H), b_l)
    p["b2"] = unif(next(ki), (1, 4 * H), b_l) + unif(next(ki), (1, 4 * H), b_l)

    p["out_w"] = unif(next(ki), (H, n_out), b_l)
    p["out_b"] = unif(next(ki), (1, n_out), b_l)
    return p


if __name__ == "__main__":
    key = jax.random.PRNGKey(0)
    B, S = 4, 10                       # seq_len = 10 as in the module
    n_in, n_out, n_layers, n_hidden = 8, 4, 2, 32   # H=32 -> 4H=128 lanes (gate packing)

    k_x, k_p, k_h, k_c = jax.random.split(key, 4)
    x = jax.random.normal(k_x, (B, S, n_in), jnp.float32)
    params = init_params(k_p, n_in, n_out, n_layers, n_hidden)
    # init_state(): torch.randn h0/c0 -> deterministic normals passed in here
    h0 = jax.random.normal(k_h, (n_layers, B, n_hidden), jnp.float32)
    c0 = jax.random.normal(k_c, (n_layers, B, n_hidden), jnp.float32)

    dorsal_out, rnn_out = dorsal_pathway0_forward(x, params, h0, c0)
    jax.block_until_ready((dorsal_out, rnn_out))

    assert dorsal_out.shape == (B, S, n_out)
    assert rnn_out.shape == (B, S, n_hidden)
    assert bool(jnp.isfinite(dorsal_out).all()) and bool(jnp.isfinite(rnn_out).all())
    print("KERNEL_OK")
</pallas_src>

<mosaic_0001>
module attributes {stable_mosaic.version = 11 : i64} {
  func.func @_fused_kernel(%arg0: memref<40x8xf32, #tpu.memory_space<vmem>>, %arg1: memref<8x30xf32, #tpu.memory_space<vmem>>, %arg2: memref<1x30xf32, #tpu.memory_space<vmem>>, %arg3: memref<30x128xf32, #tpu.memory_space<vmem>>, %arg4: memref<32x128xf32, #tpu.memory_space<vmem>>, %arg5: memref<1x128xf32, #tpu.memory_space<vmem>>, %arg6: memref<32x128xf32, #tpu.memory_space<vmem>>, %arg7: memref<32x128xf32, #tpu.memory_space<vmem>>, %arg8: memref<1x128xf32, #tpu.memory_space<vmem>>, %arg9: memref<2x4x32xf32, #tpu.memory_space<vmem>>, %arg10: memref<2x4x32xf32, #tpu.memory_space<vmem>>, %arg11: memref<32x4xf32, #tpu.memory_space<vmem>>, %arg12: memref<1x4xf32, #tpu.memory_space<vmem>>, %arg13: memref<10x4x32xf32, #tpu.memory_space<vmem>>, %arg14: memref<10x4x4xf32, #tpu.memory_space<vmem>>) attributes {dimension_semantics = [], scalar_prefetch = 0 : i64, scratch_operands = 0 : i64, tpu.core_type = #tpu.core_type<tc>} {
    %c0 = arith.constant 0 : index
    %c0_0 = arith.constant 0 : index
    %0 = vector.load %arg0[%c0, %c0_0] : memref<40x8xf32, #tpu.memory_space<vmem>>, vector<40x8xf32>
    %1 = arith.truncf %0 : vector<40x8xf32> to vector<40x8xbf16>
    %c0_1 = arith.constant 0 : index
    %c0_2 = arith.constant 0 : index
    %2 = vector.load %arg1[%c0_1, %c0_2] : memref<8x30xf32, #tpu.memory_space<vmem>>, vector<8x30xf32>
    %3 = arith.truncf %2 : vector<8x30xf32> to vector<8x30xbf16>
    %cst = arith.constant dense<0.000000e+00> : vector<40x30xf32>
    %4 = tpu.matmul %1, %3, %cst {dimension_numbers = #tpu.dot_dimension_numbers<[1], [0], [0], [1], [0, 0, 1, 1], [], []>} : vector<40x8xbf16>, vector<8x30xbf16>, vector<40x30xf32> -> vector<40x30xf32>
    %c0_3 = arith.constant 0 : index
    %c0_4 = arith.constant 0 : index
    %5 = vector.load %arg2[%c0_3, %c0_4] : memref<1x30xf32, #tpu.memory_space<vmem>>, vector<1x30xf32>
    %6 = vector.broadcast %5 : vector<1x30xf32> to vector<40x30xf32>
    %7 = arith.addf %4, %6 : vector<40x30xf32>
    %cst_5 = arith.constant 0.000000e+00 : f32
    %8 = vector.broadcast %cst_5 : f32 to vector<40x30xf32>
    %9 = arith.maximumf %7, %8 : vector<40x30xf32>
    %cst_6 = arith.constant dense<0.000000e+00> : vector<30xf32>
    %10 = vector.multi_reduction <add>, %9, %cst_6 [0] : vector<40x30xf32> to vector<30xf32>
    %11 = vector.shape_cast %10 : vector<30xf32> to vector<1x30xf32>
    %12 = arith.mulf %9, %9 : vector<40x30xf32>
    %cst_7 = arith.constant dense<0.000000e+00> : vector<30xf32>
    %13 = vector.multi_reduction <add>, %12, %cst_7 [0] : vector<40x30xf32> to vector<30xf32>
    %14 = vector.shape_cast %13 : vector<30xf32> to vector<1x30xf32>
    %cst_8 = arith.constant 2.500000e-02 : f32
    %15 = vector.broadcast %cst_8 : f32 to vector<1x30xf32>
    %16 = arith.mulf %11, %15 : vector<1x30xf32>
    %cst_9 = arith.constant 2.500000e-02 : f32
    %17 = vector.broadcast %cst_9 : f32 to vector<1x30xf32>
    %18 = arith.mulf %14, %17 : vector<1x30xf32>
    %19 = arith.mulf %16, %16 : vector<1x30xf32>
    %20 = arith.subf %18, %19 : vector<1x30xf32>
    %21 = vector.broadcast %16 : vector<1x30xf32> to vector<40x30xf32>
    %22 = arith.subf %9, %21 : vector<40x30xf32>
    %cst_10 = arith.constant 9.99999974E-6 : f32
    %23 = vector.broadcast %cst_10 : f32 to vector<1x30xf32>
    %24 = arith.addf %20, %23 : vector<1x30xf32>
    %25 = math.rsqrt %24 : vector<1x30xf32>
    %26 = vector.broadcast %25 : vector<1x30xf32> to vector<40x30xf32>
    %27 = arith.mulf %22, %26 : vector<40x30xf32>
    %28 = arith.truncf %27 : vector<40x30xf32> to vector<40x30xbf16>
    %c0_11 = arith.constant 0 : index
    %c0_12 = arith.constant 0 : index
    %29 = vector.load %arg3[%c0_11, %c0_12] : memref<30x128xf32, #tpu.memory_space<vmem>>, vector<30x128xf32>
    %30 = arith.truncf %29 : vector<30x128xf32> to vector<30x128xbf16>
    %cst_13 = arith.constant dense<0.000000e+00> : vector<40x128xf32>
    %31 = tpu.matmul %28, %30, %cst_13 {dimension_numbers = #tpu.dot_dimension_numbers<[1], [0], [0], [1], [0, 0, 1, 1], [], []>} : vector<40x30xbf16>, vector<30x128xbf16>, vector<40x128xf32> -> vector<40x128xf32>
    %c0_14 = arith.constant 0 : index
    %c0_15 = arith.constant 0 : index
    %32 = vector.load %arg5[%c0_14, %c0_15] : memref<1x128xf32, #tpu.memory_space<vmem>>, vector<1x128xf32>
    %33 = vector.broadcast %32 : vector<1x128xf32> to vector<40x128xf32>
    %34 = arith.addf %31, %33 : vector<40x128xf32>
    %c0_16 = arith.constant 0 : index
    %c0_17 = arith.constant 0 : index
    %35 = vector.load %arg4[%c0_16, %c0_17] : memref<32x128xf32, #tpu.memory_space<vmem>>, vector<32x128xf32>
    %36 = arith.truncf %35 : vector<32x128xf32> to vector<32x128xbf16>
    %c0_18 = arith.constant 0 : index
    %c0_19 = arith.constant 0 : index
    %37 = vector.load %arg6[%c0_18, %c0_19] : memref<32x128xf32, #tpu.memory_space<vmem>>, vector<32x128xf32>
    %38 = arith.truncf %37 : vector<32x128xf32> to vector<32x128xbf16>
    %c0_20 = arith.constant 0 : index
    %c0_21 = arith.constant 0 : index
    %39 = vector.load %arg7[%c0_20, %c0_21] : memref<32x128xf32, #tpu.memory_space<vmem>>, vector<32x128xf32>
    %40 = arith.truncf %39 : vector<32x128xf32> to vector<32x128xbf16>
    %c0_22 = arith.constant 0 : index
    %c0_23 = arith.constant 0 : index
    %41 = vector.load %arg8[%c0_22, %c0_23] : memref<1x128xf32, #tpu.memory_space<vmem>>, vector<1x128xf32>
    %c0_24 = arith.constant 0 : index
    %c0_25 = arith.constant 0 : index
    %42 = vector.load %arg11[%c0_24, %c0_25] : memref<32x4xf32, #tpu.memory_space<vmem>>, vector<32x4xf32>
    %43 = arith.truncf %42 : vector<32x4xf32> to vector<32x4xbf16>
    %c0_26 = arith.constant 0 : index
    %c0_27 = arith.constant 0 : index
    %44 = vector.load %arg12[%c0_26, %c0_27] : memref<1x4xf32, #tpu.memory_space<vmem>>, vector<1x4xf32>
    %c0_28 = arith.constant 0 : index
    %c0_29 = arith.constant 0 : index
    %c0_30 = arith.constant 0 : index
    %45 = vector.load %arg9[%c0_28, %c0_29, %c0_30] : memref<2x4x32xf32, #tpu.memory_space<vmem>>, vector<1x4x32xf32>
    %46 = vector.shape_cast %45 : vector<1x4x32xf32> to vector<4x32xf32>
    %c0_31 = arith.constant 0 : index
    %c0_32 = arith.constant 0 : index
    %c0_33 = arith.constant 0 : index
    %47 = vector.load %arg10[%c0_31, %c0_32, %c0_33] : memref<2x4x32xf32, #tpu.memory_space<vmem>>, vector<1x4x32xf32>
    %48 = vector.shape_cast %47 : vector<1x4x32xf32> to vector<4x32xf32>
    %c1 = arith.constant 1 : index
    %c0_34 = arith.constant 0 : index
    %c0_35 = arith.constant 0 : index
    %49 = vector.load %arg9[%c1, %c0_34, %c0_35] : memref<2x4x32xf32, #tpu.memory_space<vmem>>, vector<1x4x32xf32>
    %50 = vector.shape_cast %49 : vector<1x4x32xf32> to vector<4x32xf32>
    %c1_36 = arith.constant 1 : index
    %c0_37 = arith.constant 0 : index
    %c0_38 = arith.constant 0 : index
    %51 = vector.load %arg10[%c1_36, %c0_37, %c0_38] : memref<2x4x32xf32, #tpu.memory_space<vmem>>, vector<1x4x32xf32>
    %52 = vector.shape_cast %51 : vector<1x4x32xf32> to vector<4x32xf32>
    %53 = vector.extract_strided_slice %34 {offsets = [0, 0], sizes = [4, 128], strides = [1, 1]} : vector<40x128xf32> to vector<4x128xf32>
    %54 = arith.truncf %46 : vector<4x32xf32> to vector<4x32xbf16>
    %cst_39 = arith.constant dense<0.000000e+00> : vector<4x128xf32>
    %55 = tpu.matmul %54, %36, %cst_39 {dimension_numbers = #tpu.dot_dimension_numbers<[1], [0], [0], [1], [0, 0, 1, 1], [], []>} : vector<4x32xbf16>, vector<32x128xbf16>, vector<4x128xf32> -> vector<4x128xf32>
    %56 = arith.addf %53, %55 : vector<4x128xf32>
    %57 = arith.negf %56 : vector<4x128xf32>
    %58 = math.exp %57 : vector<4x128xf32>
    %cst_40 = arith.constant 1.000000e+00 : f32
    %59 = vector.broadcast %cst_40 : f32 to vector<4x128xf32>
    %60 = arith.addf %59, %58 : vector<4x128xf32>
    %61 = arith.divf %59, %60 : vector<4x128xf32>
    %62 = math.tanh %56 : vector<4x128xf32>
    %63 = vector.extract_strided_slice %61 {offsets = [0, 0], sizes = [4, 32], strides = [1, 1]} : vector<4x128xf32> to vector<4x32xf32>
    %64 = vector.extract_strided_slice %61 {offsets = [0, 32], sizes = [4, 32], strides = [1, 1]} : vector<4x128xf32> to vector<4x32xf32>
    %65 = vector.extract_strided_slice %62 {offsets = [0, 64], sizes = [4, 32], strides = [1, 1]} : vector<4x128xf32> to vector<4x32xf32>
    %66 = vector.extract_strided_slice %61 {offsets = [0, 96], sizes = [4, 32], strides = [1, 1]} : vector<4x128xf32> to vector<4x32xf32>
    %67 = arith.mulf %64, %48 : vector<4x32xf32>
    %68 = arith.mulf %63, %65 : vector<4x32xf32>
    %69 = arith.addf %67, %68 : vector<4x32xf32>
    %70 = math.tanh %69 : vector<4x32xf32>
    %71 = arith.mulf %66, %70 : vector<4x32xf32>
    %72 = vector.extract_strided_slice %34 {offsets = [4, 0], sizes = [4, 128], strides = [1, 1]} : vector<40x128xf32> to vector<4x128xf32>
    %73 = arith.truncf %71 : vector<4x32xf32> to vector<4x32xbf16>
    %cst_41 = arith.constant dense<0.000000e+00> : vector<4x128xf32>
    %74 = tpu.matmul %73, %36, %cst_41 {dimension_numbers = #tpu.dot_dimension_numbers<[1], [0], [0], [1], [0, 0, 1, 1], [], []>} : vector<4x32xbf16>, vector<32x128xbf16>, vector<4x128xf32> -> vector<4x128xf32>
    %75 = arith.addf %72, %74 : vector<4x128xf32>
    %76 = arith.negf %75 : vector<4x128xf32>
    %77 = math.exp %76 : vector<4x128xf32>
    %cst_42 = arith.constant 1.000000e+00 : f32
    %78 = vector.broadcast %cst_42 : f32 to vector<4x128xf32>
    %79 = arith.addf %78, %77 : vector<4x128xf32>
    %80 = arith.divf %78, %79 : vector<4x128xf32>
    %81 = math.tanh %75 : vector<4x128xf32>
    %82 = vector.extract_strided_slice %80 {offsets = [0, 0], sizes = [4, 32], strides = [1, 1]} : vector<4x128xf32> to vector<4x32xf32>
    %83 = vector.extract_strided_slice %80 {offsets = [0, 32], sizes = [4, 32], strides = [1, 1]} : vector<4x128xf32> to vector<4x32xf32>
    %84 = vector.extract_strided_slice %81 {offsets = [0, 64], sizes = [4, 32], strides = [1, 1]} : vector<4x128xf32> to vector<4x32xf32>
    %85 = vector.extract_strided_slice %80 {offsets = [0, 96], sizes = [4, 32], strides = [1, 1]} : vector<4x128xf32> to vector<4x32xf32>
    %86 = arith.mulf %83, %69 : vector<4x32xf32>
    %87 = arith.mulf %82, %84 : vector<4x32xf32>
    %88 = arith.addf %86, %87 : vector<4x32xf32>
    %89 = math.tanh %88 : vector<4x32xf32>
    %90 = arith.mulf %85, %89 : vector<4x32xf32>
    %91 = arith.truncf %71 : vector<4x32xf32> to vector<4x32xbf16>
    %cst_43 = arith.constant dense<0.000000e+00> : vector<4x128xf32>
    %92 = tpu.matmul %91, %38, %cst_43 {dimension_numbers = #tpu.dot_dimension_numbers<[1], [0], [0], [1], [0, 0, 1, 1], [], []>} : vector<4x32xbf16>, vector<32x128xbf16>, vector<4x128xf32> -> vector<4x128xf32>
    %93 = vector.broadcast %41 : vector<1x128xf32> to vector<4x128xf32>
    %94 = arith.addf %92, %93 : vector<4x128xf32>
    %95 = arith.truncf %50 : vector<4x32xf32> to vector<4x32xbf16>
    %cst_44 = arith.constant dense<0.000000e+00> : vector<4x128xf32>
    %96 = tpu.matmul %95, %40, %cst_44 {dimension_numbers = #tpu.dot_dimension_numbers<[1], [0], [0], [1], [0, 0, 1, 1], [], []>} : vector<4x32xbf16>, vector<32x128xbf16>, vector<4x128xf32> -> vector<4x128xf32>
    %97 = arith.addf %94, %96 : vector<4x128xf32>
    %98 = arith.negf %97 : vector<4x128xf32>
    %99 = math.exp %98 : vector<4x128xf32>
    %cst_45 = arith.constant 1.000000e+00 : f32
    %100 = vector.broadcast %cst_45 : f32 to vector<4x128xf32>
    %101 = arith.addf %100, %99 : vector<4x128xf32>
    %102 = arith.divf %100, %101 : vector<4x128xf32>
    %103 = math.tanh %97 : vector<4x128xf32>
    %104 = vector.extract_strided_slice %102 {offsets = [0, 0], sizes = [4, 32], strides = [1, 1]} : vector<4x128xf32> to vector<4x32xf32>
    %105 = vector.extract_strided_slice %102 {offsets = [0, 32], sizes = [4, 32], strides = [1, 1]} : vector<4x128xf32> to vector<4x32xf32>
    %106 = vector.extract_strided_slice %103 {offsets = [0, 64], sizes = [4, 32], strides = [1, 1]} : vector<4x128xf32> to vector<4x32xf32>
    %107 = vector.extract_strided_slice %102 {offsets = [0, 96], sizes = [4, 32], strides = [1, 1]} : vector<4x128xf32> to vector<4x32xf32>
    %108 = arith.mulf %105, %52 : vector<4x32xf32>
    %109 = arith.mulf %104, %106 : vector<4x32xf32>
    %110 = arith.addf %108, %109 : vector<4x32xf32>
    %111 = math.tanh %110 : vector<4x32xf32>
    %112 = arith.mulf %107, %111 : vector<4x32xf32>
    %c0_46 = arith.constant 0 : index
    %c0_47 = arith.constant 0 : index
    %c0_48 = arith.constant 0 : index
    %113 = vector.load %arg13[%c0_46, %c0_47, %c0_48] : memref<10x4x32xf32, #tpu.memory_space<vmem>>, vector<1x4x32xf32>
    %114 = vector.shape_cast %113 : vector<1x4x32xf32> to vector<4x32xf32>
    %115 = vector.shape_cast %112 : vector<4x32xf32> to vector<1x4x32xf32>
    tpu.vector_store %arg13[%c0_46, %c0_47, %c0_48], %115 {strides = array<i32>} : memref<10x4x32xf32, #tpu.memory_space<vmem>>, vector<1x4x32xf32>,
    %116 = arith.truncf %112 : vector<4x32xf32> to vector<4x32xbf16>
    %cst_49 = arith.constant dense<0.000000e+00> : vector<4x4xf32>
    %117 = tpu.matmul %116, %43, %cst_49 {dimension_numbers = #tpu.dot_dimension_numbers<[1], [0], [0], [1], [0, 0, 1, 1], [], []>} : vector<4x32xbf16>, vector<32x4xbf16>, vector<4x4xf32> -> vector<4x4xf32>
    %118 = vector.broadcast %44 : vector<1x4xf32> to vector<4x4xf32>
    %119 = arith.addf %117, %118 : vector<4x4xf32>
    %c0_50 = arith.constant 0 : index
    %c0_51 = arith.constant 0 : index
    %c0_52 = arith.constant 0 : index
    %120 = vector.load %arg14[%c0_50, %c0_51, %c0_52] : memref<10x4x4xf32, #tpu.memory_space<vmem>>, vector<1x4x4xf32>
    %121 = vector.shape_cast %120 : vector<1x4x4xf32> to vector<4x4xf32>
    %122 = vector.shape_cast %119 : vector<4x4xf32> to vector<1x4x4xf32>
    tpu.vector_store %arg14[%c0_50, %c0_51, %c0_52], %122 {strides = array<i32>} : memref<10x4x4xf32, #tpu.memory_space<vmem>>, vector<1x4x4xf32>,
    %123 = vector.extract_strided_slice %34 {offsets = [8, 0], sizes = [4, 128], strides = [1, 1]} : vector<40x128xf32> to vector<4x128xf32>
    %124 = arith.truncf %90 : vector<4x32xf32> to vector<4x32xbf16>
    %cst_53 = arith.constant dense<0.000000e+00> : vector<4x128xf32>
    %125 = tpu.matmul %124, %36, %cst_53 {dimension_numbers = #tpu.dot_dimension_numbers<[1], [0], [0], [1], [0, 0, 1, 1], [], []>} : vector<4x32xbf16>, vector<32x128xbf16>, vector<4x128xf32> -> vector<4x128xf32>
    %126 = arith.addf %123, %125 : vector<4x128xf32>
    %127 = arith.negf %126 : vector<4x128xf32>
    %128 = math.exp %127 : vector<4x128xf32>
    %cst_54 = arith.constant 1.000000e+00 : f32
    %129 = vector.broadcast %cst_54 : f32 to vector<4x128xf32>
    %130 = arith.addf %129, %128 : vector<4x128xf32>
    %131 = arith.divf %129, %130 : vector<4x128xf32>
    %132 = math.tanh %126 : vector<4x128xf32>
    %133 = vector.extract_strided_slice %131 {offsets = [0, 0], sizes = [4, 32], strides = [1, 1]} : vector<4x128xf32> to vector<4x32xf32>
    %134 = vector.extract_strided_slice %131 {offsets = [0, 32], sizes = [4, 32], strides = [1, 1]} : vector<4x128xf32> to vector<4x32xf32>
    %135 = vector.extract_strided_slice %132 {offsets = [0, 64], sizes = [4, 32], strides = [1, 1]} : vector<4x128xf32> to vector<4x32xf32>
    %136 = vector.extract_strided_slice %131 {offsets = [0, 96], sizes = [4, 32], strides = [1, 1]} : vector<4x128xf32> to vector<4x32xf32>
    %137 = arith.mulf %134, %88 : vector<4x32xf32>
    %138 = arith.mulf %133, %135 : vector<4x32xf32>
    %139 = arith.addf %137, %138 : vector<4x32xf32>
    %140 = math.tanh %139 : vector<4x32xf32>
    %141 = arith.mulf %136, %140 : vector<4x32xf32>
    %142 = arith.truncf %90 : vector<4x32xf32> to vector<4x32xbf16>
    %cst_55 = arith.constant dense<0.000000e+00> : vector<4x128xf32>
    %143 = tpu.matmul %142, %38, %cst_55 {dimension_numbers = #tpu.dot_dimension_numbers<[1], [0], [0], [1], [0, 0, 1, 1], [], []>} : vector<4x32xbf16>, vector<32x128xbf16>, vector<4x128xf32> -> vector<4x128xf32>
    %144 = vector.broadcast %41 : vector<1x128xf32> to vector<4x128xf32>
    %145 = arith.addf %143, %144 : vector<4x128xf32>
    %146 = arith.truncf %112 : vector<4x32xf32> to vector<4x32xbf16>
    %cst_56 = arith.constant dense<0.000000e+00> : vector<4x128xf32>
    %147 = tpu.matmul %146, %40, %cst_56 {dimension_numbers = #tpu.dot_dimension_numbers<[1], [0], [0], [1], [0, 0, 1, 1], [], []>} : vector<4x32xbf16>, vector<32x128xbf16>, vector<4x128xf32> -> vector<4x128xf32>
    %148 = arith.addf %145, %147 : vector<4x128xf32>
    %149 = arith.negf %148 : vector<4x128xf32>
    %150 = math.exp %149 : vector<4x128xf32>
    %cst_57 = arith.constant 1.000000e+00 : f32
    %151 = vector.broadcast %cst_57 : f32 to vector<4x128xf32>
    %152 = arith.addf %151, %150 : vector<4x128xf32>
    %153 = arith.divf %151, %152 : vector<4x128xf32>
    %154 = math.tanh %148 : vector<4x128xf32>
    %155 = vector.extract_strided_slice %153 {offsets = [0, 0], sizes = [4, 32], strides = [1, 1]} : vector<4x128xf32> to vector<4x32xf32>
    %156 = vector.extract_strided_slice %153 {offsets = [0, 32], sizes = [4, 32], strides = [1, 1]} : vector<4x128xf32> to vector<4x32xf32>
    %157 = vector.extract_strided_slice %154 {offsets = [0, 64], sizes = [4, 32], strides = [1, 1]} : vector<4x128xf32> to vector<4x32xf32>
    %158 = vector.extract_strided_slice %153 {offsets = [0, 96], sizes = [4, 32], strides = [1, 1]} : vector<4x128xf32> to vector<4x32xf32>
    %159 = arith.mulf %156, %110 : vector<4x32xf32>
    %160 = arith.mulf %155, %157 : vector<4x32xf32>
    %161 = arith.addf %159, %160 : vector<4x32xf32>
    %162 = math.tanh %161 : vector<4x32xf32>
    %163 = arith.mulf %158, %162 : vector<4x32xf32>
    %c1_58 = arith.constant 1 : index
    %c0_59 = arith.constant 0 : index
    %c0_60 = arith.constant 0 : index
    %164 = vector.load %arg13[%c1_58, %c0_59, %c0_60] : memref<10x4x32xf32, #tpu.memory_space<vmem>>, vector<1x4x32xf32>
    %165 = vector.shape_cast %164 : vector<1x4x32xf32> to vector<4x32xf32>
    %166 = vector.shape_cast %163 : vector<4x32xf32> to vector<1x4x32xf32>
    tpu.vector_store %arg13[%c1_58, %c0_59, %c0_60], %166 {strides = array<i32>} : memref<10x4x32xf32, #tpu.memory_space<vmem>>, vector<1x4x32xf32>,
    %167 = arith.truncf %163 : vector<4x32xf32> to vector<4x32xbf16>
    %cst_61 = arith.constant dense<0.000000e+00> : vector<4x4xf32>
    %168 = tpu.matmul %167, %43, %cst_61 {dimension_numbers = #tpu.dot_dimension_numbers<[1], [0], [0], [1], [0, 0, 1, 1], [], []>} : vector<4x32xbf16>, vector<32x4xbf16>, vector<4x4xf32> -> vector<4x4xf32>
    %169 = vector.broadcast %44 : vector<1x4xf32> to vector<4x4xf32>
    %170 = arith.addf %168, %169 : vector<4x4xf32>
    %c1_62 = arith.constant 1 : index
    %c0_63 = arith.constant 0 : index
    %c0_64 = arith.constant 0 : index
    %171 = vector.load %arg14[%c1_62, %c0_63, %c0_64] : memref<10x4x4xf32, #tpu.memory_space<vmem>>, vector<1x4x4xf32>
    %172 = vector.shape_cast %171 : vector<1x4x4xf32> to vector<4x4xf32>
    %173 = vector.shape_cast %170 : vector<4x4xf32> to vector<1x4x4xf32>
    tpu.vector_store %arg14[%c1_62, %c0_63, %c0_64], %173 {strides = array<i32>} : memref<10x4x4xf32, #tpu.memory_space<vmem>>, vector<1x4x4xf32>,
    %174 = vector.extract_strided_slice %34 {offsets = [12, 0], sizes = [4, 128], strides = [1, 1]} : vector<40x128xf32> to vector<4x128xf32>
    %175 = arith.truncf %141 : vector<4x32xf32> to vector<4x32xbf16>
    %cst_65 = arith.constant dense<0.000000e+00> : vector<4x128xf32>
    %176 = tpu.matmul %175, %36, %cst_65 {dimension_numbers = #tpu.dot_dimension_numbers<[1], [0], [0], [1], [0, 0, 1, 1], [], []>} : vector<4x32xbf16>, vector<32x128xbf16>, vector<4x128xf32> -> vector<4x128xf32>
    %177 = arith.addf %174, %176 : vector<4x128xf32>
    %178 = arith.negf %177 : vector<4x128xf32>
    %179 = math.exp %178 : vector<4x128xf32>
    %cst_66 = arith.constant 1.000000e+00 : f32
    %180 = vector.broadcast %cst_66 : f32 to vector<4x128xf32>
    %181 = arith.addf %180, %179 : vector<4x128xf32>
    %182 = arith.divf %180, %181 : vector<4x128xf32>
    %183 = math.tanh %177 : vector<4x128xf32>
    %184 = vector.extract_strided_slice %182 {offsets = [0, 0], sizes = [4, 32], strides = [1, 1]} : vector<4x128xf32> to vector<4x32xf32>
    %185 = vector.extract_strided_slice %182 {offsets = [0, 32], sizes = [4, 32], strides = [1, 1]} : vector<4x128xf32> to vector<4x32xf32>
    %186 = vector.extract_strided_slice %183 {offsets = [0, 64], sizes = [4, 32], strides = [1, 1]} : vector<4x128xf32> to vector<4x32xf32>
    %187 = vector.extract_strided_slice %182 {offsets = [0, 96], sizes = [4, 32], strides = [1, 1]} : vector<4x128xf32> to vector<4x32xf32>
    %188 = arith.mulf %185, %139 : vector<4x32xf32>
    %189 = arith.mulf %184, %186 : vector<4x32xf32>
    %190 = arith.addf %188, %189 : vector<4x32xf32>
    %191 = math.tanh %190 : vector<4x32xf32>
    %192 = arith.mulf %187, %191 : vector<4x32xf32>
    %193 = arith.truncf %141 : vector<4x32xf32> to vector<4x32xbf16>
    %cst_67 = arith.constant dense<0.000000e+00> : vector<4x128xf32>
    %194 = tpu.matmul %193, %38, %cst_67 {dimension_numbers = #tpu.dot_dimension_numbers<[1], [0], [0], [1], [0, 0, 1, 1], [], []>} : vector<4x32xbf16>, vector<32x128xbf16>, vector<4x128xf32> -> vector<4x128xf32>
    %195 = vector.broadcast %41 : vector<1x128xf32> to vector<4x128xf32>
    %196 = arith.addf %194, %195 : vector<4x128xf32>
    %197 = arith.truncf %163 : vector<4x32xf32> to vector<4x32xbf16>
    %cst_68 = arith.constant dense<0.000000e+00> : vector<4x128xf32>
    %198 = tpu.matmul %197, %40, %cst_68 {dimension_numbers = #tpu.dot_dimension_numbers<[1], [0], [0], [1], [0, 0, 1, 1], [], []>} : vector<4x32xbf16>, vector<32x128xbf16>, vector<4x128xf32> -> vector<4x128xf32>
    %199 = arith.addf %196, %198 : vector<4x128xf32>
    %200 = arith.negf %199 : vector<4x128xf32>
    %201 = math.exp %200 : vector<4x128xf32>
    %cst_69 = arith.constant 1.000000e+00 : f32
    %202 = vector.broadcast %cst_69 : f32 to vector<4x128xf32>
    %203 = arith.addf %202, %201 : vector<4x128xf32>
    %204 = arith.divf %202, %203 : vector<4x128xf32>
    %205 = math.tanh %199 : vector<4x128xf32>
    %206 = vector.extract_strided_slice %204 {offsets = [0, 0], sizes = [4, 32], strides = [1, 1]} : vector<4x128xf32> to vector<4x32xf32>
    %207 = vector.extract_strided_slice %204 {offsets = [0, 32], sizes = [4, 32], strides = [1, 1]} : vector<4x128xf32> to vector<4x32xf32>
    %208 = vector.extract_strided_slice %205 {offsets = [0, 64], sizes = [4, 32], strides = [1, 1]} : vector<4x128xf32> to vector<4x32xf32>
    %209 = vector.extract_strided_slice %204 {offsets = [0, 96], sizes = [4, 32], strides = [1, 1]} : vector<4x128xf32> to vector<4x32xf32>
    %210 = arith.mulf %207, %161 : vector<4x32xf32>
    %211 = arith.mulf %206, %208 : vector<4x32xf32>
    %212 = arith.addf %210, %211 : vector<4x32xf32>
    %213 = math.tanh %212 : vector<4x32xf32>
    %214 = arith.mulf %209, %213 : vector<4x32xf32>
    %c2 = arith.constant 2 : index
    %c0_70 = arith.constant 0 : index
    %c0_71 = arith.constant 0 : index
    %215 = vector.load %arg13[%c2, %c0_70, %c0_71] : memref<10x4x32xf32, #tpu.memory_space<vmem>>, vector<1x4x32xf32>
    %216 = vector.shape_cast %215 : vector<1x4x32xf32> to vector<4x32xf32>
    %217 = vector.shape_cast %214 : vector<4x32xf32> to vector<1x4x32xf32>
    tpu.vector_store %arg13[%c2, %c0_70, %c0_71], %217 {strides = array<i32>} : memref<10x4x32xf32, #tpu.memory_space<vmem>>, vector<1x4x32xf32>,
    %218 = arith.truncf %214 : vector<4x32xf32> to vector<4x32xbf16>
    %cst_72 = arith.constant dense<0.000000e+00> : vector<4x4xf32>
    %219 = tpu.matmul %218, %43, %cst_72 {dimension_numbers = #tpu.dot_dimension_numbers<[1], [0], [0], [1], [0, 0, 1, 1], [], []>} : vector<4x32xbf16>, vector<32x4xbf16>, vector<4x4xf32> -> vector<4x4xf32>
    %220 = vector.broadcast %44 : vector<1x4xf32> to vector<4x4xf32>
    %221 = arith.addf %219, %220 : vector<4x4xf32>
    %c2_73 = arith.constant 2 : index
    %c0_74 = arith.constant 0 : index
    %c0_75 = arith.constant 0 : index
    %222 = vector.load %arg14[%c2_73, %c0_74, %c0_75] : memref<10x4x4xf32, #tpu.memory_space<vmem>>, vector<1x4x4xf32>
    %223 = vector.shape_cast %222 : vector<1x4x4xf32> to vector<4x4xf32>
    %224 = vector.shape_cast %221 : vector<4x4xf32> to vector<1x4x4xf32>
    tpu.vector_store %arg14[%c2_73, %c0_74, %c0_75], %224 {strides = array<i32>} : memref<10x4x4xf32, #tpu.memory_space<vmem>>, vector<1x4x4xf32>,
    %225 = vector.extract_strided_slice %34 {offsets = [16, 0], sizes = [4, 128], strides = [1, 1]} : vector<40x128xf32> to vector<4x128xf32>
    %226 = arith.truncf %192 : vector<4x32xf32> to vector<4x32xbf16>
    %cst_76 = arith.constant dense<0.000000e+00> : vector<4x128xf32>
    %227 = tpu.matmul %226, %36, %cst_76 {dimension_numbers = #tpu.dot_dimension_numbers<[1], [0], [0], [1], [0, 0, 1, 1], [], []>} : vector<4x32xbf16>, vector<32x128xbf16>, vector<4x128xf32> -> vector<4x128xf32>
    %228 = arith.addf %225, %227 : vector<4x128xf32>
    %229 = arith.negf %228 : vector<4x128xf32>
    %230 = math.exp %229 : vector<4x128xf32>
    %cst_77 = arith.constant 1.000000e+00 : f32
    %231 = vector.broadcast %cst_77 : f32 to vector<4x128xf32>
    %232 = arith.addf %231, %230 : vector<4x128xf32>
    %233 = arith.divf %231, %232 : vector<4x128xf32>
    %234 = math.tanh %228 : vector<4x128xf32>
    %235 = vector.extract_strided_slice %233 {offsets = [0, 0], sizes = [4, 32], strides = [1, 1]} : vector<4x128xf32> to vector<4x32xf32>
    %236 = vector.extract_strided_slice %233 {offsets = [0, 32], sizes = [4, 32], strides = [1, 1]} : vector<4x128xf32> to vector<4x32xf32>
    %237 = vector.extract_strided_slice %234 {offsets = [0, 64], sizes = [4, 32], strides = [1, 1]} : vector<4x128xf32> to vector<4x32xf32>
    %238 = vector.extract_strided_slice %233 {offsets = [0, 96], sizes = [4, 32], strides = [1, 1]} : vector<4x128xf32> to vector<4x32xf32>
    %239 = arith.mulf %236, %190 : vector<4x32xf32>
    %240 = arith.mulf %235, %237 : vector<4x32xf32>
    %241 = arith.addf %239, %240 : vector<4x32xf32>
    %242 = math.tanh %241 : vector<4x32xf32>
    %243 = arith.mulf %238, %242 : vector<4x32xf32>
    %244 = arith.truncf %192 : vector<4x32xf32> to vector<4x32xbf16>
    %cst_78 = arith.constant dense<0.000000e+00> : vector<4x128xf32>
    %245 = tpu.matmul %244, %38, %cst_78 {dimension_numbers = #tpu.dot_dimension_numbers<[1], [0], [0], [1], [0, 0, 1, 1], [], []>} : vector<4x32xbf16>, vector<32x128xbf16>, vector<4x128xf32> -> vector<4x128xf32>
    %246 = vector.broadcast %41 : vector<1x128xf32> to vector<4x128xf32>
    %247 = arith.addf %245, %246 : vector<4x128xf32>
    %248 = arith.truncf %214 : vector<4x32xf32> to vector<4x32xbf16>
    %cst_79 = arith.constant dense<0.000000e+00> : vector<4x128xf32>
    %249 = tpu.matmul %248, %40, %cst_79 {dimension_numbers = #tpu.dot_dimension_numbers<[1], [0], [0], [1], [0, 0, 1, 1], [], []>} : vector<4x32xbf16>, vector<32x128xbf16>, vector<4x128xf32> -> vector<4x128xf32>
    %250 = arith.addf %247, %249 : vector<4x128xf32>
    %251 = arith.negf %250 : vector<4x128xf32>
    %252 = math.exp %251 : vector<4x128xf32>
    %cst_80 = arith.constant 1.000000e+00 : f32
    %253 = vector.broadcast %cst_80 : f32 to vector<4x128xf32>
    %254 = arith.addf %253, %252 : vector<4x128xf32>
    %255 = arith.divf %253, %254 : vector<4x128xf32>
    %256 = math.tanh %250 : vector<4x128xf32>
    %257 = vector.extract_strided_slice %255 {offsets = [0, 0], sizes = [4, 32], strides = [1, 1]} : vector<4x128xf32> to vector<4x32xf32>
    %258 = vector.extract_strided_slice %255 {offsets = [0, 32], sizes = [4, 32], strides = [1, 1]} : vector<4x128xf32> to vector<4x32xf32>
    %259 = vector.extract_strided_slice %256 {offsets = [0, 64], sizes = [4, 32], strides = [1, 1]} : vector<4x128xf32> to vector<4x32xf32>
    %260 = vector.extract_strided_slice %255 {offsets = [0, 96], sizes = [4, 32], strides = [1, 1]} : vector<4x128xf32> to vector<4x32xf32>
    %261 = arith.mulf %258, %212 : vector<4x32xf32>
    %262 = arith.mulf %257, %259 : vector<4x32xf32>
    %263 = arith.addf %261, %262 : vector<4x32xf32>
    %264 = math.tanh %263 : vector<4x32xf32>
    %265 = arith.mulf %260, %264 : vector<4x32xf32>
    %c3 = arith.constant 3 : index
    %c0_81 = arith.constant 0 : index
    %c0_82 = arith.constant 0 : index
    %266 = vector.load %arg13[%c3, %c0_81, %c0_82] : memref<10x4x32xf32, #tpu.memory_space<vmem>>, vector<1x4x32xf32>
    %267 = vector.shape_cast %266 : vector<1x4x32xf32> to vector<4x32xf32>
    %268 = vector.shape_cast %265 : vector<4x32xf32> to vector<1x4x32xf32>
    tpu.vector_store %arg13[%c3, %c0_81, %c0_82], %268 {strides = array<i32>} : memref<10x4x32xf32, #tpu.memory_space<vmem>>, vector<1x4x32xf32>,
    %269 = arith.truncf %265 : vector<4x32xf32> to vector<4x32xbf16>
    %cst_83 = arith.constant dense<0.000000e+00> : vector<4x4xf32>
    %270 = tpu.matmul %269, %43, %cst_83 {dimension_numbers = #tpu.dot_dimension_numbers<[1], [0], [0], [1], [0, 0, 1, 1], [], []>} : vector<4x32xbf16>, vector<32x4xbf16>, vector<4x4xf32> -> vector<4x4xf32>
    %271 = vector.broadcast %44 : vector<1x4xf32> to vector<4x4xf32>
    %272 = arith.addf %270, %271 : vector<4x4xf32>
    %c3_84 = arith.constant 3 : index
    %c0_85 = arith.constant 0 : index
    %c0_86 = arith.constant 0 : index
    %273 = vector.load %arg14[%c3_84, %c0_85, %c0_86] : memref<10x4x4xf32, #tpu.memory_space<vmem>>, vector<1x4x4xf32>
    %274 = vector.shape_cast %273 : vector<1x4x4xf32> to vector<4x4xf32>
    %275 = vector.shape_cast %272 : vector<4x4xf32> to vector<1x4x4xf32>
    tpu.vector_store %arg14[%c3_84, %c0_85, %c0_86], %275 {strides = array<i32>} : memref<10x4x4xf32, #tpu.memory_space<vmem>>, vector<1x4x4xf32>,
    %276 = vector.extract_strided_slice %34 {offsets = [20, 0], sizes = [4, 128], strides = [1, 1]} : vector<40x128xf32> to vector<4x128xf32>
    %277 = arith.truncf %243 : vector<4x32xf32> to vector<4x32xbf16>
    %cst_87 = arith.constant dense<0.000000e+00> : vector<4x128xf32>
    %278 = tpu.matmul %277, %36, %cst_87 {dimension_numbers = #tpu.dot_dimension_numbers<[1], [0], [0], [1], [0, 0, 1, 1], [], []>} : vector<4x32xbf16>, vector<32x128xbf16>, vector<4x128xf32> -> vector<4x128xf32>
    %279 = arith.addf %276, %278 : vector<4x128xf32>
    %280 = arith.negf %279 : vector<4x128xf32>
    %281 = math.exp %280 : vector<4x128xf32>
    %cst_88 = arith.constant 1.000000e+00 : f32
    %282 = vector.broadcast %cst_88 : f32 to vector<4x128xf32>
    %283 = arith.addf %282, %281 : vector<4x128xf32>
    %284 = arith.divf %282, %283 : vector<4x128xf32>
    %285 = math.tanh %279 : vector<4x128xf32>
    %286 = vector.extract_strided_slice %284 {offsets = [0, 0], sizes = [4, 32], strides = [1, 1]} : vector<4x128xf32> to vector<4x32xf32>
    %287 = vector.extract_strided_slice %284 {offsets = [0, 32], sizes = [4, 32], strides = [1, 1]} : vector<4x128xf32> to vector<4x32xf32>
    %288 = vector.extract_strided_slice %285 {offsets = [0, 64], sizes = [4, 32], strides = [1, 1]} : vector<4x128xf32> to vector<4x32xf32>
    %289 = vector.extract_strided_slice %284 {offsets = [0, 96], sizes = [4, 32], strides = [1, 1]} : vector<4x128xf32> to vector<4x32xf32>
    %290 = arith.mulf %287, %241 : vector<4x32xf32>
    %291 = arith.mulf %286, %288 : vector<4x32xf32>
    %292 = arith.addf %290, %291 : vector<4x32xf32>
    %293 = math.tanh %292 : vector<4x32xf32>
    %294 = arith.mulf %289, %293 : vector<4x32xf32>
    %295 = arith.truncf %243 : vector<4x32xf32> to vector<4x32xbf16>
    %cst_89 = arith.constant dense<0.000000e+00> : vector<4x128xf32>
    %296 = tpu.matmul %295, %38, %cst_89 {dimension_numbers = #tpu.dot_dimension_numbers<[1], [0], [0], [1], [0, 0, 1, 1], [], []>} : vector<4x32xbf16>, vector<32x128xbf16>, vector<4x128xf32> -> vector<4x128xf32>
    %297 = vector.broadcast %41 : vector<1x128xf32> to vector<4x128xf32>
    %298 = arith.addf %296, %297 : vector<4x128xf32>
    %299 = arith.truncf %265 : vector<4x32xf32> to vector<4x32xbf16>
    %cst_90 = arith.constant dense<0.000000e+00> : vector<4x128xf32>
    %300 = tpu.matmul %299, %40, %cst_90 {dimension_numbers = #tpu.dot_dimension_numbers<[1], [0], [0], [1], [0, 0, 1, 1], [], []>} : vector<4x32xbf16>, vector<32x128xbf16>, vector<4x128xf32> -> vector<4x128xf32>
    %301 = arith.addf %298, %300 : vector<4x128xf32>
    %302 = arith.negf %301 : vector<4x128xf32>
    %303 = math.exp %302 : vector<4x128xf32>
    %cst_91 = arith.constant 1.000000e+00 : f32
    %304 = vector.broadcast %cst_91 : f32 to vector<4x128xf32>
    %305 = arith.addf %304, %303 : vector<4x128xf32>
    %306 = arith.divf %304, %305 : vector<4x128xf32>
    %307 = math.tanh %301 : vector<4x128xf32>
    %308 = vector.extract_strided_slice %306 {offsets = [0, 0], sizes = [4, 32], strides = [1, 1]} : vector<4x128xf32> to vector<4x32xf32>
    %309 = vector.extract_strided_slice %306 {offsets = [0, 32], sizes = [4, 32], strides = [1, 1]} : vector<4x128xf32> to vector<4x32xf32>
    %310 = vector.extract_strided_slice %307 {offsets = [0, 64], sizes = [4, 32], strides = [1, 1]} : vector<4x128xf32> to vector<4x32xf32>
    %311 = vector.extract_strided_slice %306 {offsets = [0, 96], sizes = [4, 32], strides = [1, 1]} : vector<4x128xf32> to vector<4x32xf32>
    %312 = arith.mulf %309, %263 : vector<4x32xf32>
    %313 = arith.mulf %308, %310 : vector<4x32xf32>
    %314 = arith.addf %312, %313 : vector<4x32xf32>
    %315 = math.tanh %314 : vector<4x32xf32>
    %316 = arith.mulf %311, %315 : vector<4x32xf32>
    %c4 = arith.constant 4 : index
    %c0_92 = arith.constant 0 : index
    %c0_93 = arith.constant 0 : index
    %317 = vector.load %arg13[%c4, %c0_92, %c0_93] : memref<10x4x32xf32, #tpu.memory_space<vmem>>, vector<1x4x32xf32>
    %318 = vector.shape_cast %317 : vector<1x4x32xf32> to vector<4x32xf32>
    %319 = vector.shape_cast %316 : vector<4x32xf32> to vector<1x4x32xf32>
    tpu.vector_store %arg13[%c4, %c0_92, %c0_93], %319 {strides = array<i32>} : memref<10x4x32xf32, #tpu.memory_space<vmem>>, vector<1x4x32xf32>,
    %320 = arith.truncf %316 : vector<4x32xf32> to vector<4x32xbf16>
    %cst_94 = arith.constant dense<0.000000e+00> : vector<4x4xf32>
    %321 = tpu.matmul %320, %43, %cst_94 {dimension_numbers = #tpu.dot_dimension_numbers<[1], [0], [0], [1], [0, 0, 1, 1], [], []>} : vector<4x32xbf16>, vector<32x4xbf16>, vector<4x4xf32> -> vector<4x4xf32>
    %322 = vector.broadcast %44 : vector<1x4xf32> to vector<4x4xf32>
    %323 = arith.addf %321, %322 : vector<4x4xf32>
    %c4_95 = arith.constant 4 : index
    %c0_96 = arith.constant 0 : index
    %c0_97 = arith.constant 0 : index
    %324 = vector.load %arg14[%c4_95, %c0_96, %c0_97] : memref<10x4x4xf32, #tpu.memory_space<vmem>>, vector<1x4x4xf32>
    %325 = vector.shape_cast %324 : vector<1x4x4xf32> to vector<4x4xf32>
    %326 = vector.shape_cast %323 : vector<4x4xf32> to vector<1x4x4xf32>
    tpu.vector_store %arg14[%c4_95, %c0_96, %c0_97], %326 {strides = array<i32>} : memref<10x4x4xf32, #tpu.memory_space<vmem>>, vector<1x4x4xf32>,
    %327 = vector.extract_strided_slice %34 {offsets = [24, 0], sizes = [4, 128], strides = [1, 1]} : vector<40x128xf32> to vector<4x128xf32>
    %328 = arith.truncf %294 : vector<4x32xf32> to vector<4x32xbf16>
    %cst_98 = arith.constant dense<0.000000e+00> : vector<4x128xf32>
    %329 = tpu.matmul %328, %36, %cst_98 {dimension_numbers = #tpu.dot_dimension_numbers<[1], [0], [0], [1], [0, 0, 1, 1], [], []>} : vector<4x32xbf16>, vector<32x128xbf16>, vector<4x128xf32> -> vector<4x128xf32>
    %330 = arith.addf %327, %329 : vector<4x128xf32>
    %331 = arith.negf %330 : vector<4x128xf32>
    %332 = math.exp %331 : vector<4x128xf32>
    %cst_99 = arith.constant 1.000000e+00 : f32
    %333 = vector.broadcast %cst_99 : f32 to vector<4x128xf32>
    %334 = arith.addf %333, %332 : vector<4x128xf32>
    %335 = arith.divf %333, %334 : vector<4x128xf32>
    %336 = math.tanh %330 : vector<4x128xf32>
    %337 = vector.extract_strided_slice %335 {offsets = [0, 0], sizes = [4, 32], strides = [1, 1]} : vector<4x128xf32> to vector<4x32xf32>
    %338 = vector.extract_strided_slice %335 {offsets = [0, 32], sizes = [4, 32], strides = [1, 1]} : vector<4x128xf32> to vector<4x32xf32>
    %339 = vector.extract_strided_slice %336 {offsets = [0, 64], sizes = [4, 32], strides = [1, 1]} : vector<4x128xf32> to vector<4x32xf32>
    %340 = vector.extract_strided_slice %335 {offsets = [0, 96], sizes = [4, 32], strides = [1, 1]} : vector<4x128xf32> to vector<4x32xf32>
    %341 = arith.mulf %338, %292 : vector<4x32xf32>
    %342 = arith.mulf %337, %339 : vector<4x32xf32>
    %343 = arith.addf %341, %342 : vector<4x32xf32>
    %344 = math.tanh %343 : vector<4x32xf32>
    %345 = arith.mulf %340, %344 : vector<4x32xf32>
    %346 = arith.truncf %294 : vector<4x32xf32> to vector<4x32xbf16>
    %cst_100 = arith.constant dense<0.000000e+00> : vector<4x128xf32>
    %347 = tpu.matmul %346, %38, %cst_100 {dimension_numbers = #tpu.dot_dimension_numbers<[1], [0], [0], [1], [0, 0, 1, 1], [], []>} : vector<4x32xbf16>, vector<32x128xbf16>, vector<4x128xf32> -> vector<4x128xf32>
    %348 = vector.broadcast %41 : vector<1x128xf32> to vector<4x128xf32>
    %349 = arith.addf %347, %348 : vector<4x128xf32>
    %350 = arith.truncf %316 : vector<4x32xf32> to vector<4x32xbf16>
    %cst_101 = arith.constant dense<0.000000e+00> : vector<4x128xf32>
    %351 = tpu.matmul %350, %40, %cst_101 {dimension_numbers = #tpu.dot_dimension_numbers<[1], [0], [0], [1], [0, 0, 1, 1], [], []>} : vector<4x32xbf16>, vector<32x128xbf16>, vector<4x128xf32> -> vector<4x128xf32>
    %352 = arith.addf %349, %351 : vector<4x128xf32>
    %353 = arith.negf %352 : vector<4x128xf32>
    %354 = math.exp %353 : vector<4x128xf32>
    %cst_102 = arith.constant 1.000000e+00 : f32
    %355 = vector.broadcast %cst_102 : f32 to vector<4x128xf32>
    %356 = arith.addf %355, %354 : vector<4x128xf32>
    %357 = arith.divf %355, %356 : vector<4x128xf32>
    %358 = math.tanh %352 : vector<4x128xf32>
    %359 = vector.extract_strided_slice %357 {offsets = [0, 0], sizes = [4, 32], strides = [1, 1]} : vector<4x128xf32> to vector<4x32xf32>
    %360 = vector.extract_strided_slice %357 {offsets = [0, 32], sizes = [4, 32], strides = [1, 1]} : vector<4x128xf32> to vector<4x32xf32>
    %361 = vector.extract_strided_slice %358 {offsets = [0, 64], sizes = [4, 32], strides = [1, 1]} : vector<4x128xf32> to vector<4x32xf32>
    %362 = vector.extract_strided_slice %357 {offsets = [0, 96], sizes = [4, 32], strides = [1, 1]} : vector<4x128xf32> to vector<4x32xf32>
    %363 = arith.mulf %360, %314 : vector<4x32xf32>
    %364 = arith.mulf %359, %361 : vector<4x32xf32>
    %365 = arith.addf %363, %364 : vector<4x32xf32>
    %366 = math.tanh %365 : vector<4x32xf32>
    %367 = arith.mulf %362, %366 : vector<4x32xf32>
    %c5 = arith.constant 5 : index
    %c0_103 = arith.constant 0 : index
    %c0_104 = arith.constant 0 : index
    %368 = vector.load %arg13[%c5, %c0_103, %c0_104] : memref<10x4x32xf32, #tpu.memory_space<vmem>>, vector<1x4x32xf32>
    %369 = vector.shape_cast %368 : vector<1x4x32xf32> to vector<4x32xf32>
    %370 = vector.shape_cast %367 : vector<4x32xf32> to vector<1x4x32xf32>
    tpu.vector_store %arg13[%c5, %c0_103, %c0_104], %370 {strides = array<i32>} : memref<10x4x32xf32, #tpu.memory_space<vmem>>, vector<1x4x32xf32>,
    %371 = arith.truncf %367 : vector<4x32xf32> to vector<4x32xbf16>
    %cst_105 = arith.constant dense<0.000000e+00> : vector<4x4xf32>
    %372 = tpu.matmul %371, %43, %cst_105 {dimension_numbers = #tpu.dot_dimension_numbers<[1], [0], [0], [1], [0, 0, 1, 1], [], []>} : vector<4x32xbf16>, vector<32x4xbf16>, vector<4x4xf32> -> vector<4x4xf32>
    %373 = vector.broadcast %44 : vector<1x4xf32> to vector<4x4xf32>
    %374 = arith.addf %372, %373 : vector<4x4xf32>
    %c5_106 = arith.constant 5 : index
    %c0_107 = arith.constant 0 : index
    %c0_108 = arith.constant 0 : index
    %375 = vector.load %arg14[%c5_106, %c0_107, %c0_108] : memref<10x4x4xf32, #tpu.memory_space<vmem>>, vector<1x4x4xf32>
    %376 = vector.shape_cast %375 : vector<1x4x4xf32> to vector<4x4xf32>
    %377 = vector.shape_cast %374 : vector<4x4xf32> to vector<1x4x4xf32>
    tpu.vector_store %arg14[%c5_106, %c0_107, %c0_108], %377 {strides = array<i32>} : memref<10x4x4xf32, #tpu.memory_space<vmem>>, vector<1x4x4xf32>,
    %378 = vector.extract_strided_slice %34 {offsets = [28, 0], sizes = [4, 128], strides = [1, 1]} : vector<40x128xf32> to vector<4x128xf32>
    %379 = arith.truncf %345 : vector<4x32xf32> to vector<4x32xbf16>
    %cst_109 = arith.constant dense<0.000000e+00> : vector<4x128xf32>
    %380 = tpu.matmul %379, %36, %cst_109 {dimension_numbers = #tpu.dot_dimension_numbers<[1], [0], [0], [1], [0, 0, 1, 1], [], []>} : vector<4x32xbf16>, vector<32x128xbf16>, vector<4x128xf32> -> vector<4x128xf32>
    %381 = arith.addf %378, %380 : vector<4x128xf32>
    %382 = arith.negf %381 : vector<4x128xf32>
    %383 = math.exp %382 : vector<4x128xf32>
    %cst_110 = arith.constant 1.000000e+00 : f32
    %384 = vector.broadcast %cst_110 : f32 to vector<4x128xf32>
    %385 = arith.addf %384, %383 : vector<4x128xf32>
    %386 = arith.divf %384, %385 : vector<4x128xf32>
    %387 = math.tanh %381 : vector<4x128xf32>
    %388 = vector.extract_strided_slice %386 {offsets = [0, 0], sizes = [4, 32], strides = [1, 1]} : vector<4x128xf32> to vector<4x32xf32>
    %389 = vector.extract_strided_slice %386 {offsets = [0, 32], sizes = [4, 32], strides = [1, 1]} : vector<4x128xf32> to vector<4x32xf32>
    %390 = vector.extract_strided_slice %387 {offsets = [0, 64], sizes = [4, 32], strides = [1, 1]} : vector<4x128xf32> to vector<4x32xf32>
    %391 = vector.extract_strided_slice %386 {offsets = [0, 96], sizes = [4, 32], strides = [1, 1]} : vector<4x128xf32> to vector<4x32xf32>
    %392 = arith.mulf %389, %343 : vector<4x32xf32>
    %393 = arith.mulf %388, %390 : vector<4x32xf32>
    %394 = arith.addf %392, %393 : vector<4x32xf32>
    %395 = math.tanh %394 : vector<4x32xf32>
    %396 = arith.mulf %391, %395 : vector<4x32xf32>
    %397 = arith.truncf %345 : vector<4x32xf32> to vector<4x32xbf16>
    %cst_111 = arith.constant dense<0.000000e+00> : vector<4x128xf32>
    %398 = tpu.matmul %397, %38, %cst_111 {dimension_numbers = #tpu.dot_dimension_numbers<[1], [0], [0], [1], [0, 0, 1, 1], [], []>} : vector<4x32xbf16>, vector<32x128xbf16>, vector<4x128xf32> -> vector<4x128xf32>
    %399 = vector.broadcast %41 : vector<1x128xf32> to vector<4x128xf32>
    %400 = arith.addf %398, %399 : vector<4x128xf32>
    %401 = arith.truncf %367 : vector<4x32xf32> to vector<4x32xbf16>
    %cst_112 = arith.constant dense<0.000000e+00> : vector<4x128xf32>
    %402 = tpu.matmul %401, %40, %cst_112 {dimension_numbers = #tpu.dot_dimension_numbers<[1], [0], [0], [1], [0, 0, 1, 1], [], []>} : vector<4x32xbf16>, vector<32x128xbf16>, vector<4x128xf32> -> vector<4x128xf32>
    %403 = arith.addf %400, %402 : vector<4x128xf32>
    %404 = arith.negf %403 : vector<4x128xf32>
    %405 = math.exp %404 : vector<4x128xf32>
    %cst_113 = arith.constant 1.000000e+00 : f32
    %406 = vector.broadcast %cst_113 : f32 to vector<4x128xf32>
    %407 = arith.addf %406, %405 : vector<4x128xf32>
    %408 = arith.divf %406, %407 : vector<4x128xf32>
    %409 = math.tanh %403 : vector<4x128xf32>
    %410 = vector.extract_strided_slice %408 {offsets = [0, 0], sizes = [4, 32], strides = [1, 1]} : vector<4x128xf32> to vector<4x32xf32>
    %411 = vector.extract_strided_slice %408 {offsets = [0, 32], sizes = [4, 32], strides = [1, 1]} : vector<4x128xf32> to vector<4x32xf32>
    %412 = vector.extract_strided_slice %409 {offsets = [0, 64], sizes = [4, 32], strides = [1, 1]} : vector<4x128xf32> to vector<4x32xf32>
    %413 = vector.extract_strided_slice %408 {offsets = [0, 96], sizes = [4, 32], strides = [1, 1]} : vector<4x128xf32> to vector<4x32xf32>
    %414 = arith.mulf %411, %365 : vector<4x32xf32>
    %415 = arith.mulf %410, %412 : vector<4x32xf32>
    %416 = arith.addf %414, %415 : vector<4x32xf32>
    %417 = math.tanh %416 : vector<4x32xf32>
    %418 = arith.mulf %413, %417 : vector<4x32xf32>
    %c6 = arith.constant 6 : index
    %c0_114 = arith.constant 0 : index
    %c0_115 = arith.constant 0 : index
    %419 = vector.load %arg13[%c6, %c0_114, %c0_115] : memref<10x4x32xf32, #tpu.memory_space<vmem>>, vector<1x4x32xf32>
    %420 = vector.shape_cast %419 : vector<1x4x32xf32> to vector<4x32xf32>
    %421 = vector.shape_cast %418 : vector<4x32xf32> to vector<1x4x32xf32>
    tpu.vector_store %arg13[%c6, %c0_114, %c0_115], %421 {strides = array<i32>} : memref<10x4x32xf32, #tpu.memory_space<vmem>>, vector<1x4x32xf32>,
    %422 = arith.truncf %418 : vector<4x32xf32> to vector<4x32xbf16>
    %cst_116 = arith.constant dense<0.000000e+00> : vector<4x4xf32>
    %423 = tpu.matmul %422, %43, %cst_116 {dimension_numbers = #tpu.dot_dimension_numbers<[1], [0], [0], [1], [0, 0, 1, 1], [], []>} : vector<4x32xbf16>, vector<32x4xbf16>, vector<4x4xf32> -> vector<4x4xf32>
    %424 = vector.broadcast %44 : vector<1x4xf32> to vector<4x4xf32>
    %425 = arith.addf %423, %424 : vector<4x4xf32>
    %c6_117 = arith.constant 6 : index
    %c0_118 = arith.constant 0 : index
    %c0_119 = arith.constant 0 : index
    %426 = vector.load %arg14[%c6_117, %c0_118, %c0_119] : memref<10x4x4xf32, #tpu.memory_space<vmem>>, vector<1x4x4xf32>
    %427 = vector.shape_cast %426 : vector<1x4x4xf32> to vector<4x4xf32>
    %428 = vector.shape_cast %425 : vector<4x4xf32> to vector<1x4x4xf32>
    tpu.vector_store %arg14[%c6_117, %c0_118, %c0_119], %428 {strides = array<i32>} : memref<10x4x4xf32, #tpu.memory_space<vmem>>, vector<1x4x4xf32>,
    %429 = vector.extract_strided_slice %34 {offsets = [32, 0], sizes = [4, 128], strides = [1, 1]} : vector<40x128xf32> to vector<4x128xf32>
    %430 = arith.truncf %396 : vector<4x32xf32> to vector<4x32xbf16>
    %cst_120 = arith.constant dense<0.000000e+00> : vector<4x128xf32>
    %431 = tpu.matmul %430, %36, %cst_120 {dimension_numbers = #tpu.dot_dimension_numbers<[1], [0], [0], [1], [0, 0, 1, 1], [], []>} : vector<4x32xbf16>, vector<32x128xbf16>, vector<4x128xf32> -> vector<4x128xf32>
    %432 = arith.addf %429, %431 : vector<4x128xf32>
    %433 = arith.negf %432 : vector<4x128xf32>
    %434 = math.exp %433 : vector<4x128xf32>
    %cst_121 = arith.constant 1.000000e+00 : f32
    %435 = vector.broadcast %cst_121 : f32 to vector<4x128xf32>
    %436 = arith.addf %435, %434 : vector<4x128xf32>
    %437 = arith.divf %435, %436 : vector<4x128xf32>
    %438 = math.tanh %432 : vector<4x128xf32>
    %439 = vector.extract_strided_slice %437 {offsets = [0, 0], sizes = [4, 32], strides = [1, 1]} : vector<4x128xf32> to vector<4x32xf32>
    %440 = vector.extract_strided_slice %437 {offsets = [0, 32], sizes = [4, 32], strides = [1, 1]} : vector<4x128xf32> to vector<4x32xf32>
    %441 = vector.extract_strided_slice %438 {offsets = [0, 64], sizes = [4, 32], strides = [1, 1]} : vector<4x128xf32> to vector<4x32xf32>
    %442 = vector.extract_strided_slice %437 {offsets = [0, 96], sizes = [4, 32], strides = [1, 1]} : vector<4x128xf32> to vector<4x32xf32>
    %443 = arith.mulf %440, %394 : vector<4x32xf32>
    %444 = arith.mulf %439, %441 : vector<4x32xf32>
    %445 = arith.addf %443, %444 : vector<4x32xf32>
    %446 = math.tanh %445 : vector<4x32xf32>
    %447 = arith.mulf %442, %446 : vector<4x32xf32>
    %448 = arith.truncf %396 : vector<4x32xf32> to vector<4x32xbf16>
    %cst_122 = arith.constant dense<0.000000e+00> : vector<4x128xf32>
    %449 = tpu.matmul %448, %38, %cst_122 {dimension_numbers = #tpu.dot_dimension_numbers<[1], [0], [0], [1], [0, 0, 1, 1], [], []>} : vector<4x32xbf16>, vector<32x128xbf16>, vector<4x128xf32> -> vector<4x128xf32>
    %450 = vector.broadcast %41 : vector<1x128xf32> to vector<4x128xf32>
    %451 = arith.addf %449, %450 : vector<4x128xf32>
    %452 = arith.truncf %418 : vector<4x32xf32> to vector<4x32xbf16>
    %cst_123 = arith.constant dense<0.000000e+00> : vector<4x128xf32>
    %453 = tpu.matmul %452, %40, %cst_123 {dimension_numbers = #tpu.dot_dimension_numbers<[1], [0], [0], [1], [0, 0, 1, 1], [], []>} : vector<4x32xbf16>, vector<32x128xbf16>, vector<4x128xf32> -> vector<4x128xf32>
    %454 = arith.addf %451, %453 : vector<4x128xf32>
    %455 = arith.negf %454 : vector<4x128xf32>
    %456 = math.exp %455 : vector<4x128xf32>
    %cst_124 = arith.constant 1.000000e+00 : f32
    %457 = vector.broadcast %cst_124 : f32 to vector<4x128xf32>
    %458 = arith.addf %457, %456 : vector<4x128xf32>
    %459 = arith.divf %457, %458 : vector<4x128xf32>
    %460 = math.tanh %454 : vector<4x128xf32>
    %461 = vector.extract_strided_slice %459 {offsets = [0, 0], sizes = [4, 32], strides = [1, 1]} : vector<4x128xf32> to vector<4x32xf32>
    %462 = vector.extract_strided_slice %459 {offsets = [0, 32], sizes = [4, 32], strides = [1, 1]} : vector<4x128xf32> to vector<4x32xf32>
    %463 = vector.extract_strided_slice %460 {offsets = [0, 64], sizes = [4, 32], strides = [1, 1]} : vector<4x128xf32> to vector<4x32xf32>
    %464 = vector.extract_strided_slice %459 {offsets = [0, 96], sizes = [4, 32], strides = [1, 1]} : vector<4x128xf32> to vector<4x32xf32>
    %465 = arith.mulf %462, %416 : vector<4x32xf32>
    %466 = arith.mulf %461, %463 : vector<4x32xf32>
    %467 = arith.addf %465, %466 : vector<4x32xf32>
    %468 = math.tanh %467 : vector<4x32xf32>
    %469 = arith.mulf %464, %468 : vector<4x32xf32>
    %c7 = arith.constant 7 : index
    %c0_125 = arith.constant 0 : index
    %c0_126 = arith.constant 0 : index
    %470 = vector.load %arg13[%c7, %c0_125, %c0_126] : memref<10x4x32xf32, #tpu.memory_space<vmem>>, vector<1x4x32xf32>
    %471 = vector.shape_cast %470 : vector<1x4x32xf32> to vector<4x32xf32>
    %472 = vector.shape_cast %469 : vector<4x32xf32> to vector<1x4x32xf32>
    tpu.vector_store %arg13[%c7, %c0_125, %c0_126], %472 {strides = array<i32>} : memref<10x4x32xf32, #tpu.memory_space<vmem>>, vector<1x4x32xf32>,
    %473 = arith.truncf %469 : vector<4x32xf32> to vector<4x32xbf16>
    %cst_127 = arith.constant dense<0.000000e+00> : vector<4x4xf32>
    %474 = tpu.matmul %473, %43, %cst_127 {dimension_numbers = #tpu.dot_dimension_numbers<[1], [0], [0], [1], [0, 0, 1, 1], [], []>} : vector<4x32xbf16>, vector<32x4xbf16>, vector<4x4xf32> -> vector<4x4xf32>
    %475 = vector.broadcast %44 : vector<1x4xf32> to vector<4x4xf32>
    %476 = arith.addf %474, %475 : vector<4x4xf32>
    %c7_128 = arith.constant 7 : index
    %c0_129 = arith.constant 0 : index
    %c0_130 = arith.constant 0 : index
    %477 = vector.load %arg14[%c7_128, %c0_129, %c0_130] : memref<10x4x4xf32, #tpu.memory_space<vmem>>, vector<1x4x4xf32>
    %478 = vector.shape_cast %477 : vector<1x4x4xf32> to vector<4x4xf32>
    %479 = vector.shape_cast %476 : vector<4x4xf32> to vector<1x4x4xf32>
    tpu.vector_store %arg14[%c7_128, %c0_129, %c0_130], %479 {strides = array<i32>} : memref<10x4x4xf32, #tpu.memory_space<vmem>>, vector<1x4x4xf32>,
    %480 = vector.extract_strided_slice %34 {offsets = [36, 0], sizes = [4, 128], strides = [1, 1]} : vector<40x128xf32> to vector<4x128xf32>
    %481 = arith.truncf %447 : vector<4x32xf32> to vector<4x32xbf16>
    %cst_131 = arith.constant dense<0.000000e+00> : vector<4x128xf32>
    %482 = tpu.matmul %481, %36, %cst_131 {dimension_numbers = #tpu.dot_dimension_numbers<[1], [0], [0], [1], [0, 0, 1, 1], [], []>} : vector<4x32xbf16>, vector<32x128xbf16>, vector<4x128xf32> -> vector<4x128xf32>
    %483 = arith.addf %480, %482 : vector<4x128xf32>
    %484 = arith.negf %483 : vector<4x128xf32>
    %485 = math.exp %484 : vector<4x128xf32>
    %cst_132 = arith.constant 1.000000e+00 : f32
    %486 = vector.broadcast %cst_132 : f32 to vector<4x128xf32>
    %487 = arith.addf %486, %485 : vector<4x128xf32>
    %488 = arith.divf %486, %487 : vector<4x128xf32>
    %489 = math.tanh %483 : vector<4x128xf32>
    %490 = vector.extract_strided_slice %488 {offsets = [0, 0], sizes = [4, 32], strides = [1, 1]} : vector<4x128xf32> to vector<4x32xf32>
    %491 = vector.extract_strided_slice %488 {offsets = [0, 32], sizes = [4, 32], strides = [1, 1]} : vector<4x128xf32> to vector<4x32xf32>
    %492 = vector.extract_strided_slice %489 {offsets = [0, 64], sizes = [4, 32], strides = [1, 1]} : vector<4x128xf32> to vector<4x32xf32>
    %493 = vector.extract_strided_slice %488 {offsets = [0, 96], sizes = [4, 32], strides = [1, 1]} : vector<4x128xf32> to vector<4x32xf32>
    %494 = arith.mulf %491, %445 : vector<4x32xf32>
    %495 = arith.mulf %490, %492 : vector<4x32xf32>
    %496 = arith.addf %494, %495 : vector<4x32xf32>
    %497 = math.tanh %496 : vector<4x32xf32>
    %498 = arith.mulf %493, %497 : vector<4x32xf32>
    %499 = arith.truncf %447 : vector<4x32xf32> to vector<4x32xbf16>
    %cst_133 = arith.constant dense<0.000000e+00> : vector<4x128xf32>
    %500 = tpu.matmul %499, %38, %cst_133 {dimension_numbers = #tpu.dot_dimension_numbers<[1], [0], [0], [1], [0, 0, 1, 1], [], []>} : vector<4x32xbf16>, vector<32x128xbf16>, vector<4x128xf32> -> vector<4x128xf32>
    %501 = vector.broadcast %41 : vector<1x128xf32> to vector<4x128xf32>
    %502 = arith.addf %500, %501 : vector<4x128xf32>
    %503 = arith.truncf %469 : vector<4x32xf32> to vector<4x32xbf16>
    %cst_134 = arith.constant dense<0.000000e+00> : vector<4x128xf32>
    %504 = tpu.matmul %503, %40, %cst_134 {dimension_numbers = #tpu.dot_dimension_numbers<[1], [0], [0], [1], [0, 0, 1, 1], [], []>} : vector<4x32xbf16>, vector<32x128xbf16>, vector<4x128xf32> -> vector<4x128xf32>
    %505 = arith.addf %502, %504 : vector<4x128xf32>
    %506 = arith.negf %505 : vector<4x128xf32>
    %507 = math.exp %506 : vector<4x128xf32>
    %cst_135 = arith.constant 1.000000e+00 : f32
    %508 = vector.broadcast %cst_135 : f32 to vector<4x128xf32>
    %509 = arith.addf %508, %507 : vector<4x128xf32>
    %510 = arith.divf %508, %509 : vector<4x128xf32>
    %511 = math.tanh %505 : vector<4x128xf32>
    %512 = vector.extract_strided_slice %510 {offsets = [0, 0], sizes = [4, 32], strides = [1, 1]} : vector<4x128xf32> to vector<4x32xf32>
    %513 = vector.extract_strided_slice %510 {offsets = [0, 32], sizes = [4, 32], strides = [1, 1]} : vector<4x128xf32> to vector<4x32xf32>
    %514 = vector.extract_strided_slice %511 {offsets = [0, 64], sizes = [4, 32], strides = [1, 1]} : vector<4x128xf32> to vector<4x32xf32>
    %515 = vector.extract_strided_slice %510 {offsets = [0, 96], sizes = [4, 32], strides = [1, 1]} : vector<4x128xf32> to vector<4x32xf32>
    %516 = arith.mulf %513, %467 : vector<4x32xf32>
    %517 = arith.mulf %512, %514 : vector<4x32xf32>
    %518 = arith.addf %516, %517 : vector<4x32xf32>
    %519 = math.tanh %518 : vector<4x32xf32>
    %520 = arith.mulf %515, %519 : vector<4x32xf32>
    %c8 = arith.constant 8 : index
    %c0_136 = arith.constant 0 : index
    %c0_137 = arith.constant 0 : index
    %521 = vector.load %arg13[%c8, %c0_136, %c0_137] : memref<10x4x32xf32, #tpu.memory_space<vmem>>, vector<1x4x32xf32>
    %522 = vector.shape_cast %521 : vector<1x4x32xf32> to vector<4x32xf32>
    %523 = vector.shape_cast %520 : vector<4x32xf32> to vector<1x4x32xf32>
    tpu.vector_store %arg13[%c8, %c0_136, %c0_137], %523 {strides = array<i32>} : memref<10x4x32xf32, #tpu.memory_space<vmem>>, vector<1x4x32xf32>,
    %524 = arith.truncf %520 : vector<4x32xf32> to vector<4x32xbf16>
    %cst_138 = arith.constant dense<0.000000e+00> : vector<4x4xf32>
    %525 = tpu.matmul %524, %43, %cst_138 {dimension_numbers = #tpu.dot_dimension_numbers<[1], [0], [0], [1], [0, 0, 1, 1], [], []>} : vector<4x32xbf16>, vector<32x4xbf16>, vector<4x4xf32> -> vector<4x4xf32>
    %526 = vector.broadcast %44 : vector<1x4xf32> to vector<4x4xf32>
    %527 = arith.addf %525, %526 : vector<4x4xf32>
    %c8_139 = arith.constant 8 : index
    %c0_140 = arith.constant 0 : index
    %c0_141 = arith.constant 0 : index
    %528 = vector.load %arg14[%c8_139, %c0_140, %c0_141] : memref<10x4x4xf32, #tpu.memory_space<vmem>>, vector<1x4x4xf32>
    %529 = vector.shape_cast %528 : vector<1x4x4xf32> to vector<4x4xf32>
    %530 = vector.shape_cast %527 : vector<4x4xf32> to vector<1x4x4xf32>
    tpu.vector_store %arg14[%c8_139, %c0_140, %c0_141], %530 {strides = array<i32>} : memref<10x4x4xf32, #tpu.memory_space<vmem>>, vector<1x4x4xf32>,
    %531 = arith.truncf %498 : vector<4x32xf32> to vector<4x32xbf16>
    %cst_142 = arith.constant dense<0.000000e+00> : vector<4x128xf32>
    %532 = tpu.matmul %531, %38, %cst_142 {dimension_numbers = #tpu.dot_dimension_numbers<[1], [0], [0], [1], [0, 0, 1, 1], [], []>} : vector<4x32xbf16>, vector<32x128xbf16>, vector<4x128xf32> -> vector<4x128xf32>
    %533 = vector.broadcast %41 : vector<1x128xf32> to vector<4x128xf32>
    %534 = arith.addf %532, %533 : vector<4x128xf32>
    %535 = arith.truncf %520 : vector<4x32xf32> to vector<4x32xbf16>
    %cst_143 = arith.constant dense<0.000000e+00> : vector<4x128xf32>
    %536 = tpu.matmul %535, %40, %cst_143 {dimension_numbers = #tpu.dot_dimension_numbers<[1], [0], [0], [1], [0, 0, 1, 1], [], []>} : vector<4x32xbf16>, vector<32x128xbf16>, vector<4x128xf32> -> vector<4x128xf32>
    %537 = arith.addf %534, %536 : vector<4x128xf32>
    %538 = arith.negf %537 : vector<4x128xf32>
    %539 = math.exp %538 : vector<4x128xf32>
    %cst_144 = arith.constant 1.000000e+00 : f32
    %540 = vector.broadcast %cst_144 : f32 to vector<4x128xf32>
    %541 = arith.addf %540, %539 : vector<4x128xf32>
    %542 = arith.divf %540, %541 : vector<4x128xf32>
    %543 = math.tanh %537 : vector<4x128xf32>
    %544 = vector.extract_strided_slice %542 {offsets = [0, 0], sizes = [4, 32], strides = [1, 1]} : vector<4x128xf32> to vector<4x32xf32>
    %545 = vector.extract_strided_slice %542 {offsets = [0, 32], sizes = [4, 32], strides = [1, 1]} : vector<4x128xf32> to vector<4x32xf32>
    %546 = vector.extract_strided_slice %543 {offsets = [0, 64], sizes = [4, 32], strides = [1, 1]} : vector<4x128xf32> to vector<4x32xf32>
    %547 = vector.extract_strided_slice %542 {offsets = [0, 96], sizes = [4, 32], strides = [1, 1]} : vector<4x128xf32> to vector<4x32xf32>
    %548 = arith.mulf %545, %518 : vector<4x32xf32>
    %549 = arith.mulf %544, %546 : vector<4x32xf32>
    %550 = arith.addf %548, %549 : vector<4x32xf32>
    %551 = math.tanh %550 : vector<4x32xf32>
    %552 = arith.mulf %547, %551 : vector<4x32xf32>
    %c9 = arith.constant 9 : index
    %c0_145 = arith.constant 0 : index
    %c0_146 = arith.constant 0 : index
    %553 = vector.load %arg13[%c9, %c0_145, %c0_146] : memref<10x4x32xf32, #tpu.memory_space<vmem>>, vector<1x4x32xf32>
    %554 = vector.shape_cast %553 : vector<1x4x32xf32> to vector<4x32xf32>
    %555 = vector.shape_cast %552 : vector<4x32xf32> to vector<1x4x32xf32>
    tpu.vector_store %arg13[%c9, %c0_145, %c0_146], %555 {strides = array<i32>} : memref<10x4x32xf32, #tpu.memory_space<vmem>>, vector<1x4x32xf32>,
    %556 = arith.truncf %552 : vector<4x32xf32> to vector<4x32xbf16>
    %cst_147 = arith.constant dense<0.000000e+00> : vector<4x4xf32>
    %557 = tpu.matmul %556, %43, %cst_147 {dimension_numbers = #tpu.dot_dimension_numbers<[1], [0], [0], [1], [0, 0, 1, 1], [], []>} : vector<4x32xbf16>, vector<32x4xbf16>, vector<4x4xf32> -> vector<4x4xf32>
    %558 = vector.broadcast %44 : vector<1x4xf32> to vector<4x4xf32>
    %559 = arith.addf %557, %558 : vector<4x4xf32>
    %c9_148 = arith.constant 9 : index
    %c0_149 = arith.constant 0 : index
    %c0_150 = arith.constant 0 : index
    %560 = vector.load %arg14[%c9_148, %c0_149, %c0_150] : memref<10x4x4xf32, #tpu.memory_space<vmem>>, vector<1x4x4xf32>
    %561 = vector.shape_cast %560 : vector<1x4x4xf32> to vector<4x4xf32>
    %562 = vector.shape_cast %559 : vector<4x4xf32> to vector<1x4x4xf32>
    tpu.vector_store %arg14[%c9_148, %c0_149, %c0_150], %562 {strides = array<i32>} : memref<10x4x4xf32, #tpu.memory_space<vmem>>, vector<1x4x4xf32>,
    return
  }
}

</mosaic_0001>

<llo_original>
// kernel: dorsal_pathway0_forward.1
$region0: #{dorsal_pathway0_forward.1}
  #allocation0 [shape = 'u32[]', space=smem, size = 0x4, offset = 0x4, fixed_abs, tag = 'smem constant byte address 0x4 - core index']
  #allocation1 [shape = 'u32[144,128]{1,0:T(1,128)}', space=vmem, size = 0x12000, scoped, tag = 'internal scratch']
  %s0 = inlined_call_operand.vmem [shape: f32[40,8], index: 0, kind: input, shape index: {}]
  %s1 = inlined_call_operand.hbm [shape: f32[8,30], index: 1, kind: input, shape index: {}]
  %s2 = inlined_call_operand.vmem [shape: f32[1,30], index: 2, kind: input, shape index: {}]
  %s3 = inlined_call_operand.vmem [shape: f32[30,128], index: 3, kind: input, shape index: {}]
  %s4 = inlined_call_operand.vmem [shape: f32[32,128], index: 4, kind: input, shape index: {}]
  %s5 = inlined_call_operand.hbm [shape: f32[1,128], index: 5, kind: input, shape index: {}]
  %s6 = inlined_call_operand.vmem [shape: f32[32,128], index: 6, kind: input, shape index: {}]
  %s7 = inlined_call_operand.vmem [shape: f32[32,128], index: 7, kind: input, shape index: {}]
  %s8 = inlined_call_operand.hbm [shape: f32[1,128], index: 8, kind: input, shape index: {}]
  %s9 = inlined_call_operand.vmem [shape: f32[2,4,32], index: 9, kind: input, shape index: {}]
  %s10 = inlined_call_operand.vmem [shape: f32[2,4,32], index: 10, kind: input, shape index: {}]
  %s11 = inlined_call_operand.vmem [shape: f32[32,4], index: 11, kind: input, shape index: {}]
  %s12 = inlined_call_operand.hbm [shape: f32[1,4], index: 12, kind: input, shape index: {}]
  %s13 = inlined_call_operand.hbm [shape: f32[10,4,32], index: 13, kind: output, shape index: {0}]
  %s14 = inlined_call_operand.vmem [shape: f32[10,4,4], index: 14, kind: output, shape index: {1}]
  %15 = xla_tuple %s13, %s14
  %s16 = sld [smem:[#allocation0]]
  $region86: #{dorsal_pathway0_forward.1} parent=0
    _
  %s18 = ssub.s32 1, %s16
  %s19 = scalar_select 0, %s18, %s16
  $region1: #{dorsal_pathway0_forward.1} parent=0
    #allocation2 [shape = 'u8[4096]{0}', space=vmem, size = 0x1000, scoped, tag = 'input window, operand 1, single buffered']
    #allocation3 [shape = 's32[1]{0}', space=sflag, size = 0x4, scoped, tag = 'scoped memory for dorsal_pathway0_forward.1']
    #allocation4 [shape = 's32[1]{0}', space=sflag, size = 0x4, scoped, tag = 'scoped memory for dorsal_pathway0_forward.1']
    #allocation5 [shape = 'u8[512]{0}', space=vmem, size = 0x400, scoped, tag = 'input window, operand 5, single buffered']
    #allocation6 [shape = 's32[1]{0}', space=sflag, size = 0x4, scoped, tag = 'scoped memory for dorsal_pathway0_forward.1']
    #allocation7 [shape = 'u8[512]{0}', space=vmem, size = 0x400, scoped, tag = 'input window, operand 8, single buffered']
    #allocation8 [shape = 'u8[512]{0}', space=vmem, size = 0x400, scoped, tag = 'input window, operand 12, single buffered']
    #allocation9 [shape = 's32[1]{0}', space=sflag, size = 0x4, scoped, tag = 'scoped memory for dorsal_pathway0_forward.1']
    #allocation10 [shape = 'u8[20480]{0}', space=vmem, size = 0x5000, scoped, tag = 'output window, operand 0, single buffered']
    %20 = vsyncpa [#allocation3], 0
    %21 = vsyncpa [#allocation6], 0
    %22 = vsyncpa [#allocation9], 0
    %23 = vsyncpa [#allocation4], 0
    // Predicated region
    $region2: #{dorsal_pathway0_forward.1} parent=1 // pred_check
      _
    $region3: #{dorsal_pathway0_forward.1} parent=1 // pred_check_branch
      %25 = sbr.rel (0) target = $region5
    $region4: #{dorsal_pathway0_forward.1} parent=1 // pred_region
      _
    $region5: #{dorsal_pathway0_forward.1} parent=1 // pred_fallthru
      _
    // Predicated region
    $region6: #{dorsal_pathway0_forward.1} parent=1 // pred_check
      _
    $region7: #{dorsal_pathway0_forward.1} parent=1 // pred_check_branch
      %27 = sbr.rel (0) target = $region9
    $region8: #{dorsal_pathway0_forward.1} parent=1 // pred_region
      %s29 = ssub.s32 128, 128
      %30 = vsyncadd [#allocation3], %s29
      %s32 = sshll.u32 [#allocation2], 4
      %s33 = int_to_ptr.vmem [resolvable:$true] %s32
      %35 = dma.hbm_to_vmem [thread:$0]  %s1, 128, %s33, [#allocation3]
    $region9: #{dorsal_pathway0_forward.1} parent=1 // pred_fallthru
      _
    // Predicated region
    $region10: #{dorsal_pathway0_forward.1} parent=1 // pred_check
      _
    $region11: #{dorsal_pathway0_forward.1} parent=1 // pred_check_branch
      %37 = sbr.rel (0) target = $region13
    $region12: #{dorsal_pathway0_forward.1} parent=1 // pred_region
      _
    $region13: #{dorsal_pathway0_forward.1} parent=1 // pred_fallthru
      _
    // Predicated region
    $region14: #{dorsal_pathway0_forward.1} parent=1 // pred_check
      _
    $region15: #{dorsal_pathway0_forward.1} parent=1 // pred_check_branch
      %39 = sbr.rel (0) target = $region17
    $region16: #{dorsal_pathway0_forward.1} parent=1 // pred_region
      _
    $region17: #{dorsal_pathway0_forward.1} parent=1 // pred_fallthru
      _
    // Predicated region
    $region18: #{dorsal_pathway0_forward.1} parent=1 // pred_check
      _
    $region19: #{dorsal_pathway0_forward.1} parent=1 // pred_check_branch
      %41 = sbr.rel (0) target = $region21
    $region20: #{dorsal_pathway0_forward.1} parent=1 // pred_region
      _
    $region21: #{dorsal_pathway0_forward.1} parent=1 // pred_fallthru
      _
    // Predicated region
    $region22: #{dorsal_pathway0_forward.1} parent=1 // pred_check
      _
    $region23: #{dorsal_pathway0_forward.1} parent=1 // pred_check_branch
      %43 = sbr.rel (0) target = $region25
    $region24: #{dorsal_pathway0_forward.1} parent=1 // pred_region
      %s45 = ssub.s32 16, 16
      %46 = vsyncadd [#allocation6], %s45
      %s48 = sshll.u32 [#allocation5], 4
      %s49 = int_to_ptr.vmem [resolvable:$true] %s48
      %51 = dma.hbm_to_vmem [thread:$0]  %s5, 16, %s49, [#allocation6]
    $region25: #{dorsal_pathway0_forward.1} parent=1 // pred_fallthru
      _
    // Predicated region
    $region26: #{dorsal_pathway0_forward.1} parent=1 // pred_check
      _
    $region27: #{dorsal_pathway0_forward.1} parent=1 // pred_check_branch
      %53 = sbr.rel (0) target = $region29
    $region28: #{dorsal_pathway0_forward.1} parent=1 // pred_region
      _
    $region29: #{dorsal_pathway0_forward.1} parent=1 // pred_fallthru
      _
    // Predicated region
    $region30: #{dorsal_pathway0_forward.1} parent=1 // pred_check
      _
    $region31: #{dorsal_pathway0_forward.1} parent=1 // pred_check_branch
      %55 = sbr.rel (0) target = $region33
    $region32: #{dorsal_pathway0_forward.1} parent=1 // pred_region
      _
    $region33: #{dorsal_pathway0_forward.1} parent=1 // pred_fallthru
      _
    // Predicated region
    $region34: #{dorsal_pathway0_forward.1} parent=1 // pred_check
      _
    $region35: #{dorsal_pathway0_forward.1} parent=1 // pred_check_branch
      %57 = sbr.rel (0) target = $region37
    $region36: #{dorsal_pathway0_forward.1} parent=1 // pred_region
      %s59 = ssub.s32 16, 16
      %60 = vsyncadd [#allocation6], %s59
      %s62 = sshll.u32 [#allocation7], 4
      %s63 = int_to_ptr.vmem [resolvable:$true] %s62
      %65 = dma.hbm_to_vmem [thread:$0]  %s8, 16, %s63, [#allocation6]
    $region37: #{dorsal_pathway0_forward.1} parent=1 // pred_fallthru
      _
    // Predicated region
    $region38: #{dorsal_pathway0_forward.1} parent=1 // pred_check
      _
    $region39: #{dorsal_pathway0_forward.1} parent=1 // pred_check_branch
      %67 = sbr.rel (0) target = $region41
    $region40: #{dorsal_pathway0_forward.1} parent=1 // pred_region
      _
    $region41: #{dorsal_pathway0_forward.1} parent=1 // pred_fallthru
      _
    // Predicated region
    $region42: #{dorsal_pathway0_forward.1} parent=1 // pred_check
      _
    $region43: #{dorsal_pathway0_forward.1} parent=1 // pred_check_branch
      %69 = sbr.rel (0) target = $region45
    $region44: #{dorsal_pathway0_forward.1} parent=1 // pred_region
      _
    $region45: #{dorsal_pathway0_forward.1} parent=1 // pred_fallthru
      _
    // Predicated region
    $region46: #{dorsal_pathway0_forward.1} parent=1 // pred_check
      _
    $region47: #{dorsal_pathway0_forward.1} parent=1 // pred_check_branch
      %71 = sbr.rel (0) target = $region49
    $region48: #{dorsal_pathway0_forward.1} parent=1 // pred_region
      _
    $region49: #{dorsal_pathway0_forward.1} parent=1 // pred_fallthru
      _
    // Predicated region
    $region50: #{dorsal_pathway0_forward.1} parent=1 // pred_check
      _
    $region51: #{dorsal_pathway0_forward.1} parent=1 // pred_check_branch
      %73 = sbr.rel (0) target = $region53
    $region52: #{dorsal_pathway0_forward.1} parent=1 // pred_region
      %s75 = ssub.s32 16, 16
      %76 = vsyncadd [#allocation9], %s75
      %s78 = sshll.u32 [#allocation8], 4
      %s79 = int_to_ptr.vmem [resolvable:$true] %s78
      %81 = dma.hbm_to_vmem [thread:$0]  %s12, 16, %s79, [#allocation9]
    $region53: #{dorsal_pathway0_forward.1} parent=1 // pred_fallthru
      _
    // Predicated region
    $region54: #{dorsal_pathway0_forward.1} parent=1 // pred_check
      _
    $region55: #{dorsal_pathway0_forward.1} parent=1 // pred_check_branch
      %83 = sbr.rel (0) target = $region57
    $region56: #{dorsal_pathway0_forward.1} parent=1 // pred_region
      %84 = dma.done [#allocation3], 128
    $region57: #{dorsal_pathway0_forward.1} parent=1 // pred_fallthru
      _
    // Predicated region
    $region58: #{dorsal_pathway0_forward.1} parent=1 // pred_check
      _
    $region59: #{dorsal_pathway0_forward.1} parent=1 // pred_check_branch
      %86 = sbr.rel (0) target = $region61
    $region60: #{dorsal_pathway0_forward.1} parent=1 // pred_region
      %87 = dma.done [#allocation6], 16
    $region61: #{dorsal_pathway0_forward.1} parent=1 // pred_fallthru
      _
    // Predicated region
    $region62: #{dorsal_pathway0_forward.1} parent=1 // pred_check
      _
    $region63: #{dorsal_pathway0_forward.1} parent=1 // pred_check_branch
      %89 = sbr.rel (0) target = $region65
    $region64: #{dorsal_pathway0_forward.1} parent=1 // pred_region
      %90 = dma.done [#allocation6], 16
    $region65: #{dorsal_pathway0_forward.1} parent=1 // pred_fallthru
      _
    // Predicated region
    $region66: #{dorsal_pathway0_forward.1} parent=1 // pred_check
      _
    $region67: #{dorsal_pathway0_forward.1} parent=1 // pred_check_branch
      %92 = sbr.rel (0) target = $region69
    $region68: #{dorsal_pathway0_forward.1} parent=1 // pred_region
      %93 = dma.done [#allocation9], 16
    $region69: #{dorsal_pathway0_forward.1} parent=1 // pred_fallthru
      _
    %v95 = vld [vmem:[%s0] sm:$0xff]
    %v96 = vld [vmem:[%s0 + $0x8] sm:$0xff]
    %v97 = vld [vmem:[%s0 + $0x10] sm:$0xff]
    %v98 = vld [vmem:[%s0 + $0x18] sm:$0xff]
    %v99 = vld [vmem:[%s0 + $0x20] sm:$0xff]
    %v100 = vpack.c.bf16 %v96, %v95
    %v101 = vpack.c.bf16 %v98, %v97
    %v102 = vpack.c.bf16 %v99, %v99
    %v103 = vld [vmem:[#allocation2] sm:$0xff]
    %v104 = vpack.c.bf16 %v103, %v103
    %v105 = vld [vmem:[%s2] sm:$0x1]
    %v107 = vlaneseq
    %v108 = vshrl.u32 %v107, 7
    %v109 = vsub.s32 0, %v108
    %v110 = vrot.slane %v105, %v109
    %vm112 = vcmask 64512
    %v114 = vsel %vm112, %v100, 0
    %v117 = vsel %vm112, %v101, 0
    %v120 = vsel %vm112, %v102, 0
    %vm122 = vcmask 1043456
    %v124 = vsel %vm122, %v104, 0
    %126 = vmatprep.subr.bf16.mxu0 0
    %127 = vmatpush1.bf16.msra.mxu0 %v124
    %128 = vmatprep.subr.bf16.mxu0 0
    %129 = vmatpush1.bf16.msra.mxu0 0
    %130 = vmatprep.subr.bf16.mxu0 0
    %131 = vmatpush1.bf16.msra.mxu0 0
    %132 = vmatprep.subr.bf16.mxu0 0
    %133 = vmatpush1.bf16.msra.mxu0 0
    %134 = vmatprep.subr.bf16.mxu0 0
    %135 = vmatpush1.bf16.msra.mxu0 0
    %136 = vmatprep.subr.bf16.mxu0 0
    %137 = vmatpush1.bf16.msra.mxu0 0
    %138 = vmatprep.subr.bf16.mxu0 0
    %139 = vmatpush1.bf16.msra.mxu0 0
    %140 = vmatprep.subr.bf16.mxu0 0
    %141 = vmatpush1.bf16.msra.mxu0 0
    %142 = vmatprep.subr.bf16.mxu0 0
    %143 = vmatpush1.bf16.msra.mxu0 0
    %144 = vmatprep.subr.bf16.mxu0 0
    %145 = vmatpush1.bf16.msra.mxu0 0
    %146 = vmatprep.subr.bf16.mxu0 0
    %147 = vmatpush1.bf16.msra.mxu0 0
    %148 = vmatprep.subr.bf16.mxu0 0
    %149 = vmatpush1.bf16.msra.mxu0 0
    %150 = vmatprep.subr.bf16.mxu0 0
    %151 = vmatpush1.bf16.msra.mxu0 0
    %152 = vmatprep.subr.bf16.mxu0 0
    %153 = vmatpush1.bf16.msra.mxu0 0
    %154 = vmatprep.subr.bf16.mxu0 0
    %155 = vmatpush1.bf16.msra.mxu0 0
    %156 = vmatprep.subr.bf16.mxu0 0
    %157 = vmatpush1.bf16.msra.mxu0 0
    %158 = vmatprep.mubr.bf16.mxu0 0
    %159 = vmatmul.mubr.bf16.gmra.mrb[0].mxu0 %v114
    %v160 = vpop.f32.mrb[0].mxu0
    %v161 = vadd.f32 %v110, %v160
    %v162 = vpop.f32.mrb[0].mxu0
    %v163 = vpop.f32.mrb[0].mxu0
    %v164 = vadd.f32 %v110, %v163
    %v165 = vpop.f32.mrb[0].mxu0
    %166 = vmatprep.mubr.bf16.mxu0 0
    %167 = vmatmul.mubr.bf16.gmra.mrb[0].mxu0 %v117
    %v168 = vpop.f32.mrb[0].mxu0
    %v169 = vadd.f32 %v110, %v168
    %v170 = vpop.f32.mrb[0].mxu0
    %v171 = vpop.f32.mrb[0].mxu0
    %v172 = vadd.f32 %v110, %v171
    %v173 = vpop.f32.mrb[0].mxu0
    %174 = vmatprep.mubr.bf16.mxu0 0
    %175 = vmatmul.mubr.bf16.gmra.mrb[0].mxu0 %v120
    %v176 = vpop.f32.mrb[0].mxu0
    %v177 = vadd.f32 %v110, %v176
    %v178 = vpop.f32.mrb[0].mxu0
    %v179 = vpop.f32.mrb[0].mxu0
    %v180 = vpop.f32.mrb[0].mxu0
    %181 = vdwg.mxu0
    %v182 = vmax.f32 %v161, 0.0
    %v183 = vmax.f32 %v164, 0.0
    %v184 = vmax.f32 %v169, 0.0
    %v185 = vmax.f32 %v172, 0.0
    %v186 = vmax.f32 %v177, 0.0
    %vm187 = vcmask 244736
    %v188 = vsel %vm187, %v182, 0.0
    %v189 = vsel %vm187, %v183, 0.0
    %v190 = vadd.f32 %v188, %v189
    %v191 = vsel %vm187, %v184, 0.0
    %v192 = vadd.f32 %v190, %v191
    %v193 = vsel %vm187, %v185, 0.0
    %v194 = vadd.f32 %v192, %v193
    %v195 = vsel %vm187, %v186, 0.0
    %v196 = vadd.f32 %v194, %v195
    %v197 = vrot.slane %v196, 4
    %v198 = vadd.f32 %v196, %v197
    %v199 = vrot.slane %v198, 2
    %v200 = vadd.f32 %v198, %v199
    %v201 = vrot.slane %v200, 1
    %v202 = vadd.f32 %v200, %v201
    %v203 = vmul.f32 %v182, %v182
    %v204 = vmul.f32 %v183, %v183
    %v205 = vmul.f32 %v184, %v184
    %v206 = vmul.f32 %v185, %v185
    %v207 = vmul.f32 %v186, %v186
    %v208 = vsel %vm187, %v203, 0.0
    %v209 = vsel %vm187, %v204, 0.0
    %v210 = vadd.f32 %v208, %v209
    %v211 = vsel %vm187, %v205, 0.0
    %v212 = vadd.f32 %v210, %v211
    %v213 = vsel %vm187, %v206, 0.0
    %v214 = vadd.f32 %v212, %v213
    %v215 = vsel %vm187, %v207, 0.0
    %v216 = vadd.f32 %v214, %v215
    %v217 = vrot.slane %v216, 4
    %v218 = vadd.f32 %v216, %v217
    %v219 = vrot.slane %v218, 2
    %v220 = vadd.f32 %v218, %v219
    %v221 = vrot.slane %v220, 1
    %v222 = vadd.f32 %v220, %v221
    %v223 = vmul.f32 %v202, 0.025
    %v224 = vmul.f32 %v222, 0.025
    %v225 = vmul.f32 %v223, %v223
    %v226 = vsub.f32 %v224, %v225
    %v227 = vsub.f32 %v182, %v223
    %v228 = vsub.f32 %v183, %v223
    %v229 = vsub.f32 %v184, %v223
    %v230 = vsub.f32 %v185, %v223
    %v231 = vsub.f32 %v186, %v223
    %v232 = vadd.f32 %v226, 1e-05
    %v233 = vrsqrt.pop %v232
    %v234 = vmul.f32 %v227, %v233
    %v235 = vmul.f32 %v228, %v233
    %v236 = vmul.f32 %v229, %v233
    %v237 = vmul.f32 %v230, %v233
    %v238 = vmul.f32 %v231, %v233
    %v239 = vpack.c.bf16 %v235, %v234
    %v240 = vpack.c.bf16 %v237, %v236
    %v241 = vpack.c.bf16 %v238, %v238
    %v242 = vld [vmem:[%s3] sm:$0xff]
    %v243 = vld [vmem:[%s3 + $0x8] sm:$0xff]
    %v244 = vld [vmem:[%s3 + $0x10] sm:$0xff]
    %v245 = vld [vmem:[%s3 + $0x18] sm:$0x3f]
    %v246 = vpack.c.bf16 %v243, %v242
    %v247 = vpack.c.bf16 %v245, %v244
    %v248 = vld [vmem:[#allocation5] sm:$0x1]
    %v250 = vlaneseq
    %v251 = vshrl.u32 %v250, 7
    %v252 = vsub.s32 0, %v251
    %v253 = vrot.slane %v248, %v252
    %v256 = vsel %vm187, %v239, 0
    %v259 = vsel %vm187, %v240, 0
    %v262 = vsel %vm187, %v241, 0
    %vm264 = vcmask 1046528
    %v266 = vsel %vm264, %v247, 0
    %268 = vmatprep.subr.bf16.mxu0 0
    %269 = vmatpush1.bf16.msra.mxu0 %v246
    %270 = vmatprep.subr.bf16.mxu0 0
    %271 = vmatpush1.bf16.msra.mxu0 %v266
    %272 = vmatprep.subr.bf16.mxu0 0
    %273 = vmatpush1.bf16.msra.mxu0 0
    %274 = vmatprep.subr.bf16.mxu0 0
    %275 = vmatpush1.bf16.msra.mxu0 0
    %276 = vmatprep.subr.bf16.mxu0 0
    %277 = vmatpush1.bf16.msra.mxu0 0
    %278 = vmatprep.subr.bf16.mxu0 0
    %279 = vmatpush1.bf16.msra.mxu0 0
    %280 = vmatprep.subr.bf16.mxu0 0
    %281 = vmatpush1.bf16.msra.mxu0 0
    %282 = vmatprep.subr.bf16.mxu0 0
    %283 = vmatpush1.bf16.msra.mxu0 0
    %284 = vmatprep.subr.bf16.mxu0 0
    %285 = vmatpush1.bf16.msra.mxu0 0
    %286 = vmatprep.subr.bf16.mxu0 0
    %287 = vmatpush1.bf16.msra.mxu0 0
    %288 = vmatprep.subr.bf16.mxu0 0
    %289 = vmatpush1.bf16.msra.mxu0 0
    %290 = vmatprep.subr.bf16.mxu0 0
    %291 = vmatpush1.bf16.msra.mxu0 0
    %292 = vmatprep.subr.bf16.mxu0 0
    %293 = vmatpush1.bf16.msra.mxu0 0
    %294 = vmatprep.subr.bf16.mxu0 0
    %295 = vmatpush1.bf16.msra.mxu0 0
    %296 = vmatprep.subr.bf16.mxu0 0
    %297 = vmatpush1.bf16.msra.mxu0 0
    %298 = vmatprep.subr.bf16.mxu0 0
    %299 = vmatpush1.bf16.msra.mxu0 0
    %300 = vmatprep.mubr.bf16.mxu0 0
    %301 = vmatmul.mubr.bf16.gmra.mrb[0].mxu0 %v256
    %v302 = vpop.f32.mrb[0].mxu0
    %v303 = vadd.f32 %v253, %v302
    %v304 = vpop.f32.mrb[0].mxu0
    %v305 = vpop.f32.mrb[0].mxu0
    %v306 = vadd.f32 %v253, %v305
    %v307 = vpop.f32.mrb[0].mxu0
    %308 = vmatprep.mubr.bf16.mxu0 0
    %309 = vmatmul.mubr.bf16.gmra.mrb[0].mxu0 %v259
    %v310 = vpop.f32.mrb[0].mxu0
    %v311 = vadd.f32 %v253, %v310
    %v312 = vpop.f32.mrb[0].mxu0
    %v313 = vpop.f32.mrb[0].mxu0
    %v314 = vadd.f32 %v253, %v313
    %v315 = vpop.f32.mrb[0].mxu0
    %316 = vmatprep.mubr.bf16.mxu0 0
    %317 = vmatmul.mubr.bf16.gmra.mrb[0].mxu0 %v262
    %v318 = vpop.f32.mrb[0].mxu0
    %v319 = vadd.f32 %v253, %v318
    %v320 = vpop.f32.mrb[0].mxu0
    %v321 = vpop.f32.mrb[0].mxu0
    %v322 = vpop.f32.mrb[0].mxu0
    %323 = vdwg.mxu0
    %v324 = vld [vmem:[%s4] sm:$0xff]
    %v325 = vld [vmem:[%s4 + $0x8] sm:$0xff]
    %v326 = vld [vmem:[%s4 + $0x10] sm:$0xff]
    %v327 = vld [vmem:[%s4 + $0x18] sm:$0xff]
    %v328 = vpack.c.bf16 %v325, %v324
    %v329 = vpack.c.bf16 %v327, %v326
    %v330 = vld [vmem:[%s6] sm:$0xff]
    %v331 = vld [vmem:[%s6 + $0x8] sm:$0xff]
    %v332 = vld [vmem:[%s6 + $0x10] sm:$0xff]
    %v333 = vld [vmem:[%s6 + $0x18] sm:$0xff]
    %v334 = vpack.c.bf16 %v331, %v330
    %v335 = vpack.c.bf16 %v333, %v332
    %v336 = vld [vmem:[%s7] sm:$0xff]
    %v337 = vld [vmem:[%s7 + $0x8] sm:$0xff]
    %v338 = vld [vmem:[%s7 + $0x10] sm:$0xff]
    %v339 = vld [vmem:[%s7 + $0x18] sm:$0xff]
    %v340 = vpack.c.bf16 %v337, %v336
    %v341 = vpack.c.bf16 %v339, %v338
    %v342 = vld [vmem:[#allocation7] sm:$0x1]
    %v343 = vld [vmem:[%s11] sm:$0xff]
    %v344 = vld [vmem:[%s11 + $0x8] sm:$0xff]
    %v345 = vld [vmem:[%s11 + $0x10] sm:$0xff]
    %v346 = vld [vmem:[%s11 + $0x18] sm:$0xff]
    %v347 = vpack.c.bf16 %v344, %v343
    %v348 = vpack.c.bf16 %v346, %v345
    %v349 = vld [vmem:[#allocation8] sm:$0x1]
    %v350 = vld [vmem:[%s9] sm:$0xf]
    %v351 = vld [vmem:[%s10] sm:$0xf]
    %s352 = scalar_lea.vmem %s9, 4
    %v353 = vld [vmem:[%s352] sm:$0xf]
    %s354 = scalar_lea.vmem %s10, 4
    %v355 = vld [vmem:[%s354] sm:$0xf]
    %v356 = vpack.c.bf16 %v350, %v350
    %vm357 = vcmask 261120
    %v359 = vsel %vm357, %v356, 0
    %361 = vmatprep.subr.bf16.mxu0 0
    %362 = vmatpush1.bf16.msra.mxu0 %v328
    %363 = vmatprep.subr.bf16.mxu0 0
    %364 = vmatpush1.bf16.msra.mxu0 %v329
    %365 = vmatprep.subr.bf16.mxu0 0
    %366 = vmatpush1.bf16.msra.mxu0 0
    %367 = vmatprep.subr.bf16.mxu0 0
    %368 = vmatpush1.bf16.msra.mxu0 0
    %369 = vmatprep.subr.bf16.mxu0 0
    %370 = vmatpush1.bf16.msra.mxu0 0
    %371 = vmatprep.subr.bf16.mxu0 0
    %372 = vmatpush1.bf16.msra.mxu0 0
    %373 = vmatprep.subr.bf16.mxu0 0
    %374 = vmatpush1.bf16.msra.mxu0 0
    %375 = vmatprep.subr.bf16.mxu0 0
    %376 = vmatpush1.bf16.msra.mxu0 0
    %377 = vmatprep.subr.bf16.mxu0 0
    %378 = vmatpush1.bf16.msra.mxu0 0
    %379 = vmatprep.subr.bf16.mxu0 0
    %380 = vmatpush1.bf16.msra.mxu0 0
    %381 = vmatprep.subr.bf16.mxu0 0
    %382 = vmatpush1.bf16.msra.mxu0 0
    %383 = vmatprep.subr.bf16.mxu0 0
    %384 = vmatpush1.bf16.msra.mxu0 0
    %385 = vmatprep.subr.bf16.mxu0 0
    %386 = vmatpush1.bf16.msra.mxu0 0
    %387 = vmatprep.subr.bf16.mxu0 0
    %388 = vmatpush1.bf16.msra.mxu0 0
    %389 = vmatprep.subr.bf16.mxu0 0
    %390 = vmatpush1.bf16.msra.mxu0 0
    %391 = vmatprep.subr.bf16.mxu0 0
    %392 = vmatpush1.bf16.msra.mxu0 0
    %393 = vmatprep.mubr.bf16.mxu0 0
    %394 = vmatmul.mubr.bf16.gmra.mrb[0].mxu0 %v359
    %v395 = vpop.f32.mrb[0].mxu0
    %v396 = vadd.f32 0.0, %v395
    %v397 = vpop.f32.mrb[0].mxu0
    %v398 = vpop.f32.mrb[0].mxu0
    %v399 = vpop.f32.mrb[0].mxu0
    %400 = vdwg.mxu0
    %v401 = vadd.f32 %v303, %v396
    %v402 = vxor.u32 %v401, 2147483648
    %v403 = vmul.f32 %v402, 1.442695
    %v404 = vpow.pop %v403
    %v405 = vadd.f32 %v404, 1.0
    %v406 = vrcp.pop %v405
    %v407 = vmul.f32 1.0, %v406
    %v408 = vtanh.pop %v401
    %410 = vrot.lane.b32.xlu0 %v351, 32
    %v411 = vpop.permute.xlu0 %410
    %v413 = vmul.f32 %v407, %v411
    %415 = vrot.lane.b32.xlu0 %v408, 64
    %v416 = vpop.permute.xlu0 %415
    %v418 = vmul.f32 %v407, %v416
    %420 = vrot.lane.b32.xlu0 %v418, 32
    %v421 = vpop.permute.xlu0 %420
    %v423 = vadd.f32 %v413, %v421
    %v424 = vtanh.pop %v423
    %426 = vrot.lane.b32.xlu0 %v424, 64
    %v427 = vpop.permute.xlu0 %426
    %v429 = vmul.f32 %v407, %v427
    %v430 = vpack.c.bf16 %v429, %v429
    %432 = vrot.lane.b32.xlu0 %v430, 32
    %v433 = vpop.permute.xlu0 %432
    %v435 = vsel %vm357, %v433, 0
    %437 = vmatprep.subr.bf16.mxu0 0
    %438 = vmatpush1.bf16.msra.mxu0 %v328
    %439 = vmatprep.subr.bf16.mxu0 0
    %440 = vmatpush1.bf16.msra.mxu0 %v329
    %441 = vmatprep.subr.bf16.mxu0 0
    %442 = vmatpush1.bf16.msra.mxu0 0
    %443 = vmatprep.subr.bf16.mxu0 0
    %444 = vmatpush1.bf16.msra.mxu0 0
    %445 = vmatprep.subr.bf16.mxu0 0
    %446 = vmatpush1.bf16.msra.mxu0 0
    %447 = vmatprep.subr.bf16.mxu0 0
    %448 = vmatpush1.bf16.msra.mxu0 0
    %449 = vmatprep.subr.bf16.mxu0 0
    %450 = vmatpush1.bf16.msra.mxu0 0
    %451 = vmatprep.subr.bf16.mxu0 0
    %452 = vmatpush1.bf16.msra.mxu0 0
    %453 = vmatprep.subr.bf16.mxu0 0
    %454 = vmatpush1.bf16.msra.mxu0 0
    %455 = vmatprep.subr.bf16.mxu0 0
    %456 = vmatpush1.bf16.msra.mxu0 0
    %457 = vmatprep.subr.bf16.mxu0 0
    %458 = vmatpush1.bf16.msra.mxu0 0
    %459 = vmatprep.subr.bf16.mxu0 0
    %460 = vmatpush1.bf16.msra.mxu0 0
    %461 = vmatprep.subr.bf16.mxu0 0
    %462 = vmatpush1.bf16.msra.mxu0 0
    %463 = vmatprep.subr.bf16.mxu0 0
    %464 = vmatpush1.bf16.msra.mxu0 0
    %465 = vmatprep.subr.bf16.mxu0 0
    %466 = vmatpush1.bf16.msra.mxu0 0
    %467 = vmatprep.subr.bf16.mxu0 0
    %468 = vmatpush1.bf16.msra.mxu0 0
    %469 = vmatprep.mubr.bf16.mxu0 0
    %470 = vmatmul.mubr.bf16.gmra.mrb[0].mxu0 %v435
    %v471 = vpop.f32.mrb[0].mxu0
    %v472 = vadd.f32 0.0, %v471
    %v473 = vpop.f32.mrb[0].mxu0
    %v474 = vpop.f32.mrb[0].mxu0
    %v475 = vpop.f32.mrb[0].mxu0
    %476 = vdwg.mxu0
    %v478 = vrot.slane %v472, 4
    %v480 = vadd.f32 %v303, %v478
    %v481 = vxor.u32 %v480, 2147483648
    %v482 = vmul.f32 %v481, 1.442695
    %v483 = vpow.pop %v482
    %v484 = vadd.f32 %v483, 1.0
    %v485 = vrcp.pop %v484
    %v486 = vmul.f32 1.0, %v485
    %v487 = vtanh.pop %v480
    %v489 = vrot.slane %v423, 4
    %v491 = vmul.f32 %v486, %v489
    %493 = vrot.lane.b32.xlu0 %v487, 64
    %v494 = vpop.permute.xlu0 %493
    %v496 = vmul.f32 %v486, %v494
    %498 = vrot.lane.b32.xlu0 %v496, 32
    %v499 = vpop.permute.xlu0 %498
    %v501 = vadd.f32 %v491, %v499
    %v502 = vtanh.pop %v501
    %504 = vrot.lane.b32.xlu0 %v502, 64
    %v505 = vpop.permute.xlu0 %504
    %v507 = vmul.f32 %v486, %v505
    %v509 = vlaneseq
    %v510 = vshrl.u32 %v509, 7
    %v511 = vsub.s32 0, %v510
    %v512 = vrot.slane %v342, %v511
    %514 = vmatprep.subr.bf16.mxu0 0
    %515 = vmatpush1.bf16.msra.mxu0 %v334
    %516 = vmatprep.subr.bf16.mxu0 0
    %517 = vmatpush1.bf16.msra.mxu0 %v335
    %518 = vmatprep.subr.bf16.mxu0 0
    %519 = vmatpush1.bf16.msra.mxu0 0
    %520 = vmatprep.subr.bf16.mxu0 0
    %521 = vmatpush1.bf16.msra.mxu0 0
    %522 = vmatprep.subr.bf16.mxu0 0
    %523 = vmatpush1.bf16.msra.mxu0 0
    %524 = vmatprep.subr.bf16.mxu0 0
    %525 = vmatpush1.bf16.msra.mxu0 0
    %526 = vmatprep.subr.bf16.mxu0 0
    %527 = vmatpush1.bf16.msra.mxu0 0
    %528 = vmatprep.subr.bf16.mxu0 0
    %529 = vmatpush1.bf16.msra.mxu0 0
    %530 = vmatprep.subr.bf16.mxu0 0
    %531 = vmatpush1.bf16.msra.mxu0 0
    %532 = vmatprep.subr.bf16.mxu0 0
    %533 = vmatpush1.bf16.msra.mxu0 0
    %534 = vmatprep.subr.bf16.mxu0 0
    %535 = vmatpush1.bf16.msra.mxu0 0
    %536 = vmatprep.subr.bf16.mxu0 0
    %537 = vmatpush1.bf16.msra.mxu0 0
    %538 = vmatprep.subr.bf16.mxu0 0
    %539 = vmatpush1.bf16.msra.mxu0 0
    %540 = vmatprep.subr.bf16.mxu0 0
    %541 = vmatpush1.bf16.msra.mxu0 0
    %542 = vmatprep.subr.bf16.mxu0 0
    %543 = vmatpush1.bf16.msra.mxu0 0
    %544 = vmatprep.subr.bf16.mxu0 0
    %545 = vmatpush1.bf16.msra.mxu0 0
    %546 = vmatprep.mubr.bf16.mxu0 0
    %547 = vmatmul.mubr.bf16.gmra.mrb[0].mxu0 %v435
    %v548 = vpop.f32.mrb[0].mxu0
    %v549 = vadd.f32 %v512, %v548
    %v550 = vpop.f32.mrb[0].mxu0
    %v551 = vpop.f32.mrb[0].mxu0
    %v552 = vpop.f32.mrb[0].mxu0
    %553 = vdwg.mxu0
    %v554 = vpack.c.bf16 %v353, %v353
    %v556 = vsel %vm357, %v554, 0
    %558 = vmatprep.subr.bf16.mxu0 0
    %559 = vmatpush1.bf16.msra.mxu0 %v340
    %560 = vmatprep.subr.bf16.mxu0 0
    %561 = vmatpush1.bf16.msra.mxu0 %v341
    %562 = vmatprep.subr.bf16.mxu0 0
    %563 = vmatpush1.bf16.msra.mxu0 0
    %564 = vmatprep.subr.bf16.mxu0 0
    %565 = vmatpush1.bf16.msra.mxu0 0
    %566 = vmatprep.subr.bf16.mxu0 0
    %567 = vmatpush1.bf16.msra.mxu0 0
    %568 = vmatprep.subr.bf16.mxu0 0
    %569 = vmatpush1.bf16.msra.mxu0 0
    %570 = vmatprep.subr.bf16.mxu0 0
    %571 = vmatpush1.bf16.msra.mxu0 0
    %572 = vmatprep.subr.bf16.mxu0 0
    %573 = vmatpush1.bf16.msra.mxu0 0
    %574 = vmatprep.subr.bf16.mxu0 0
    %575 = vmatpush1.bf16.msra.mxu0 0
    %576 = vmatprep.subr.bf16.mxu0 0
    %577 = vmatpush1.bf16.msra.mxu0 0
    %578 = vmatprep.subr.bf16.mxu0 0
    %579 = vmatpush1.bf16.msra.mxu0 0
    %580 = vmatprep.subr.bf16.mxu0 0
    %581 = vmatpush1.bf16.msra.mxu0 0
    %582 = vmatprep.subr.bf16.mxu0 0
    %583 = vmatpush1.bf16.msra.mxu0 0
    %584 = vmatprep.subr.bf16.mxu0 0
    %585 = vmatpush1.bf16.msra.mxu0 0
    %586 = vmatprep.subr.bf16.mxu0 0
    %587 = vmatpush1.bf16.msra.mxu0 0
    %588 = vmatprep.subr.bf16.mxu0 0
    %589 = vmatpush1.bf16.msra.mxu0 0
    %590 = vmatprep.mubr.bf16.mxu0 0
    %591 = vmatmul.mubr.bf16.gmra.mrb[0].mxu0 %v556
    %v592 = vpop.f32.mrb[0].mxu0
    %v593 = vadd.f32 0.0, %v592
    %v594 = vpop.f32.mrb[0].mxu0
    %v595 = vpop.f32.mrb[0].mxu0
    %v596 = vpop.f32.mrb[0].mxu0
    %597 = vdwg.mxu0
    %v598 = vadd.f32 %v549, %v593
    %v599 = vxor.u32 %v598, 2147483648
    %v600 = vmul.f32 %v599, 1.442695
    %v601 = vpow.pop %v600
    %v602 = vadd.f32 %v601, 1.0
    %v603 = vrcp.pop %v602
    %v604 = vmul.f32 1.0, %v603
    %v605 = vtanh.pop %v598
    %607 = vrot.lane.b32.xlu0 %v355, 32
    %v608 = vpop.permute.xlu0 %607
    %v610 = vmul.f32 %v604, %v608
    %612 = vrot.lane.b32.xlu0 %v605, 64
    %v613 = vpop.permute.xlu0 %612
    %v615 = vmul.f32 %v604, %v613
    %617 = vrot.lane.b32.xlu0 %v615, 32
    %v618 = vpop.permute.xlu0 %617
    %v620 = vadd.f32 %v610, %v618
    %v621 = vtanh.pop %v620
    %623 = vrot.lane.b32.xlu0 %v621, 64
    %v624 = vpop.permute.xlu0 %623
    %v626 = vmul.f32 %v604, %v624
    %628 = vrot.lane.b32.xlu0 %v626, 32
    %v629 = vpop.permute.xlu0 %628
    %vm631 = vcmask 257024
    %632 = vst.msk [vmem:[#allocation10] sm:$0xf] %vm631, %v629
    %v633 = vpack.c.bf16 %v626, %v626
    %v635 = vlaneseq
    %v636 = vshrl.u32 %v635, 7
    %v637 = vsub.s32 0, %v636
    %v638 = vrot.slane %v349, %v637
    %641 = vrot.lane.b32.xlu0 %v633, 32
    %v642 = vpop.permute.xlu0 %641
    %v644 = vsel %vm357, %v642, 0
    %646 = vmatprep.subr.bf16.mxu0 0
    %647 = vmatpush1.bf16.msra.mxu0 %v347
    %648 = vmatprep.subr.bf16.mxu0 0
    %649 = vmatpush1.bf16.msra.mxu0 %v348
    %650 = vmatprep.subr.bf16.mxu0 0
    %651 = vmatpush1.bf16.msra.mxu0 0
    %652 = vmatprep.subr.bf16.mxu0 0
    %653 = vmatpush1.bf16.msra.mxu0 0
    %654 = vmatprep.subr.bf16.mxu0 0
    %655 = vmatpush1.bf16.msra.mxu0 0
    %656 = vmatprep.subr.bf16.mxu0 0
    %657 = vmatpush1.bf16.msra.mxu0 0
    %658 = vmatprep.subr.bf16.mxu0 0
    %659 = vmatpush1.bf16.msra.mxu0 0
    %660 = vmatprep.subr.bf16.mxu0 0
    %661 = vmatpush1.bf16.msra.mxu0 0
    %662 = vmatprep.subr.bf16.mxu0 0
    %663 = vmatpush1.bf16.msra.mxu0 0
    %664 = vmatprep.subr.bf16.mxu0 0
    %665 = vmatpush1.bf16.msra.mxu0 0
    %666 = vmatprep.subr.bf16.mxu0 0
    %667 = vmatpush1.bf16.msra.mxu0 0
    %668 = vmatprep.subr.bf16.mxu0 0
    %669 = vmatpush1.bf16.msra.mxu0 0
    %670 = vmatprep.subr.bf16.mxu0 0
    %671 = vmatpush1.bf16.msra.mxu0 0
    %672 = vmatprep.subr.bf16.mxu0 0
    %673 = vmatpush1.bf16.msra.mxu0 0
    %674 = vmatprep.subr.bf16.mxu0 0
    %675 = vmatpush1.bf16.msra.mxu0 0
    %676 = vmatprep.subr.bf16.mxu0 0
    %677 = vmatpush1.bf16.msra.mxu0 0
    %678 = vmatprep.mubr.bf16.mxu0 0
    %679 = vmatmul.mubr.bf16.gmra.mrb[0].mxu0 %v644
    %v680 = vpop.f32.mrb[0].mxu0
    %v681 = vadd.f32 %v638, %v680
    %v682 = vpop.f32.mrb[0].mxu0
    %v683 = vpop.f32.mrb[0].mxu0
    %v684 = vpop.f32.mrb[0].mxu0
    %685 = vdwg.mxu0
    %vm686 = vcmask 27648
    %687 = vst.msk [vmem:[%s14] sm:$0xf] %vm686, %v681
    %v688 = vpack.c.bf16 %v507, %v507
    %v690 = vrot.slane %v688, 2
    %691 = vrot.lane.b32.xlu0 %v690, 32
    %v692 = vpop.permute.xlu0 %691
    %v694 = vsel %vm357, %v692, 0
    %696 = vmatprep.subr.bf16.mxu0 0
    %697 = vmatpush1.bf16.msra.mxu0 %v328
    %698 = vmatprep.subr.bf16.mxu0 0
    %699 = vmatpush1.bf16.msra.mxu0 %v329
    %700 = vmatprep.subr.bf16.mxu0 0
    %701 = vmatpush1.bf16.msra.mxu0 0
    %702 = vmatprep.subr.bf16.mxu0 0
    %703 = vmatpush1.bf16.msra.mxu0 0
    %704 = vmatprep.subr.bf16.mxu0 0
    %705 = vmatpush1.bf16.msra.mxu0 0
    %706 = vmatprep.subr.bf16.mxu0 0
    %707 = vmatpush1.bf16.msra.mxu0 0
    %708 = vmatprep.subr.bf16.mxu0 0
    %709 = vmatpush1.bf16.msra.mxu0 0
    %710 = vmatprep.subr.bf16.mxu0 0
    %711 = vmatpush1.bf16.msra.mxu0 0
    %712 = vmatprep.subr.bf16.mxu0 0
    %713 = vmatpush1.bf16.msra.mxu0 0
    %714 = vmatprep.subr.bf16.mxu0 0
    %715 = vmatpush1.bf16.msra.mxu0 0
    %716 = vmatprep.subr.bf16.mxu0 0
    %717 = vmatpush1.bf16.msra.mxu0 0
    %718 = vmatprep.subr.bf16.mxu0 0
    %719 = vmatpush1.bf16.msra.mxu0 0
    %720 = vmatprep.subr.bf16.mxu0 0
    %721 = vmatpush1.bf16.msra.mxu0 0
    %722 = vmatprep.subr.bf16.mxu0 0
    %723 = vmatpush1.bf16.msra.mxu0 0
    %724 = vmatprep.subr.bf16.mxu0 0
    %725 = vmatpush1.bf16.msra.mxu0 0
    %726 = vmatprep.subr.bf16.mxu0 0
    %727 = vmatpush1.bf16.msra.mxu0 0
    %728 = vmatprep.mubr.bf16.mxu0 0
    %729 = vmatmul.mubr.bf16.gmra.mrb[0].mxu0 %v694
    %v730 = vpop.f32.mrb[0].mxu0
    %v731 = vadd.f32 0.0, %v730
    %v732 = vpop.f32.mrb[0].mxu0
    %v733 = vpop.f32.mrb[0].mxu0
    %v734 = vpop.f32.mrb[0].mxu0
    %735 = vdwg.mxu0
    %v736 = vadd.f32 %v306, %v731
    %v737 = vxor.u32 %v736, 2147483648
    %v738 = vmul.f32 %v737, 1.442695
    %v739 = vpow.pop %v738
    %v740 = vadd.f32 %v739, 1.0
    %v741 = vrcp.pop %v740
    %v742 = vmul.f32 1.0, %v741
    %v743 = vtanh.pop %v736
    %v745 = vrot.slane %v501, 4
    %v747 = vmul.f32 %v742, %v745
    %749 = vrot.lane.b32.xlu0 %v743, 64
    %v750 = vpop.permute.xlu0 %749
    %v752 = vmul.f32 %v742, %v750
    %754 = vrot.lane.b32.xlu0 %v752, 32
    %v755 = vpop.permute.xlu0 %754
    %v757 = vadd.f32 %v747, %v755
    %v758 = vtanh.pop %v757
    %760 = vrot.lane.b32.xlu0 %v758, 64
    %v761 = vpop.permute.xlu0 %760
    %v763 = vmul.f32 %v742, %v761
    %764 = vmatprep.subr.bf16.mxu0 0
    %765 = vmatpush1.bf16.msra.mxu0 %v334
    %766 = vmatprep.subr.bf16.mxu0 0
    %767 = vmatpush1.bf16.msra.mxu0 %v335
    %768 = vmatprep.subr.bf16.mxu0 0
    %769 = vmatpush1.bf16.msra.mxu0 0
    %770 = vmatprep.subr.bf16.mxu0 0
    %771 = vmatpush1.bf16.msra.mxu0 0
    %772 = vmatprep.subr.bf16.mxu0 0
    %773 = vmatpush1.bf16.msra.mxu0 0
    %774 = vmatprep.subr.bf16.mxu0 0
    %775 = vmatpush1.bf16.msra.mxu0 0
    %776 = vmatprep.subr.bf16.mxu0 0
    %777 = vmatpush1.bf16.msra.mxu0 0
    %778 = vmatprep.subr.bf16.mxu0 0
    %779 = vmatpush1.bf16.msra.mxu0 0
    %780 = vmatprep.subr.bf16.mxu0 0
    %781 = vmatpush1.bf16.msra.mxu0 0
    %782 = vmatprep.subr.bf16.mxu0 0
    %783 = vmatpush1.bf16.msra.mxu0 0
    %784 = vmatprep.subr.bf16.mxu0 0
    %785 = vmatpush1.bf16.msra.mxu0 0
    %786 = vmatprep.subr.bf16.mxu0 0
    %787 = vmatpush1.bf16.msra.mxu0 0
    %788 = vmatprep.subr.bf16.mxu0 0
    %789 = vmatpush1.bf16.msra.mxu0 0
    %790 = vmatprep.subr.bf16.mxu0 0
    %791 = vmatpush1.bf16.msra.mxu0 0
    %792 = vmatprep.subr.bf16.mxu0 0
    %793 = vmatpush1.bf16.msra.mxu0 0
    %794 = vmatprep.subr.bf16.mxu0 0
    %795 = vmatpush1.bf16.msra.mxu0 0
    %796 = vmatprep.mubr.bf16.mxu0 0
    %797 = vmatmul.mubr.bf16.gmra.mrb[0].mxu0 %v694
    %v798 = vpop.f32.mrb[0].mxu0
    %v799 = vadd.f32 %v512, %v798
    %v800 = vpop.f32.mrb[0].mxu0
    %v801 = vpop.f32.mrb[0].mxu0
    %v802 = vpop.f32.mrb[0].mxu0
    %803 = vdwg.mxu0
    %804 = vmatprep.subr.bf16.mxu0 0
    %805 = vmatpush1.bf16.msra.mxu0 %v340
    %806 = vmatprep.subr.bf16.mxu0 0
    %807 = vmatpush1.bf16.msra.mxu0 %v341
    %808 = vmatprep.subr.bf16.mxu0 0
    %809 = vmatpush1.bf16.msra.mxu0 0
    %810 = vmatprep.subr.bf16.mxu0 0
    %811 = vmatpush1.bf16.msra.mxu0 0
    %812 = vmatprep.subr.bf16.mxu0 0
    %813 = vmatpush1.bf16.msra.mxu0 0
    %814 = vmatprep.subr.bf16.mxu0 0
    %815 = vmatpush1.bf16.msra.mxu0 0
    %816 = vmatprep.subr.bf16.mxu0 0
    %817 = vmatpush1.bf16.msra.mxu0 0
    %818 = vmatprep.subr.bf16.mxu0 0
    %819 = vmatpush1.bf16.msra.mxu0 0
    %820 = vmatprep.subr.bf16.mxu0 0
    %821 = vmatpush1.bf16.msra.mxu0 0
    %822 = vmatprep.subr.bf16.mxu0 0
    %823 = vmatpush1.bf16.msra.mxu0 0
    %824 = vmatprep.subr.bf16.mxu0 0
    %825 = vmatpush1.bf16.msra.mxu0 0
    %826 = vmatprep.subr.bf16.mxu0 0
    %827 = vmatpush1.bf16.msra.mxu0 0
    %828 = vmatprep.subr.bf16.mxu0 0
    %829 = vmatpush1.bf16.msra.mxu0 0
    %830 = vmatprep.subr.bf16.mxu0 0
    %831 = vmatpush1.bf16.msra.mxu0 0
    %832 = vmatprep.subr.bf16.mxu0 0
    %833 = vmatpush1.bf16.msra.mxu0 0
    %834 = vmatprep.subr.bf16.mxu0 0
    %835 = vmatpush1.bf16.msra.mxu0 0
    %836 = vmatprep.mubr.bf16.mxu0 0
    %837 = vmatmul.mubr.bf16.gmra.mrb[0].mxu0 %v644
    %v838 = vpop.f32.mrb[0].mxu0
    %v839 = vadd.f32 0.0, %v838
    %v840 = vpop.f32.mrb[0].mxu0
    %v841 = vpop.f32.mrb[0].mxu0
    %v842 = vpop.f32.mrb[0].mxu0
    %843 = vdwg.mxu0
    %v844 = vadd.f32 %v799, %v839
    %v845 = vxor.u32 %v844, 2147483648
    %v846 = vmul.f32 %v845, 1.442695
    %v847 = vpow.pop %v846
    %v848 = vadd.f32 %v847, 1.0
    %v849 = vrcp.pop %v848
    %v850 = vmul.f32 1.0, %v849
    %v851 = vtanh.pop %v844
    %v852 = vmul.f32 %v850, %v620
    %854 = vrot.lane.b32.xlu0 %v851, 64
    %v855 = vpop.permute.xlu0 %854
    %v857 = vmul.f32 %v850, %v855
    %859 = vrot.lane.b32.xlu0 %v857, 32
    %v860 = vpop.permute.xlu0 %859
    %v862 = vadd.f32 %v852, %v860
    %v863 = vtanh.pop %v862
    %865 = vrot.lane.b32.xlu0 %v863, 64
    %v866 = vpop.permute.xlu0 %865
    %v868 = vmul.f32 %v850, %v866
    %870 = vrot.lane.b32.xlu0 %v868, 32
    %v871 = vpop.permute.xlu0 %870
    %s873 = scalar_lea.vmem [#allocation10], 4
    %874 = vst.msk [vmem:[%s873] sm:$0xf] %vm631, %v871
    %v875 = vpack.c.bf16 %v868, %v868
    %877 = vrot.lane.b32.xlu0 %v875, 32
    %v878 = vpop.permute.xlu0 %877
    %v880 = vsel %vm357, %v878, 0
    %882 = vmatprep.subr.bf16.mxu0 0
    %883 = vmatpush1.bf16.msra.mxu0 %v347
    %884 = vmatprep.subr.bf16.mxu0 0
    %885 = vmatpush1.bf16.msra.mxu0 %v348
    %886 = vmatprep.subr.bf16.mxu0 0
    %887 = vmatpush1.bf16.msra.mxu0 0
    %888 = vmatprep.subr.bf16.mxu0 0
    %889 = vmatpush1.bf16.msra.mxu0 0
    %890 = vmatprep.subr.bf16.mxu0 0
    %891 = vmatpush1.bf16.msra.mxu0 0
    %892 = vmatprep.subr.bf16.mxu0 0
    %893 = vmatpush1.bf16.msra.mxu0 0
    %894 = vmatprep.subr.bf16.mxu0 0
    %895 = vmatpush1.bf16.msra.mxu0 0
    %896 = vmatprep.subr.bf16.mxu0 0
    %897 = vmatpush1.bf16.msra.mxu0 0
    %898 = vmatprep.subr.bf16.mxu0 0
    %899 = vmatpush1.bf16.msra.mxu0 0
    %900 = vmatprep.subr.bf16.mxu0 0
    %901 = vmatpush1.bf16.msra.mxu0 0
    %902 = vmatprep.subr.bf16.mxu0 0
    %903 = vmatpush1.bf16.msra.mxu0 0
    %904 = vmatprep.subr.bf16.mxu0 0
    %905 = vmatpush1.bf16.msra.mxu0 0
    %906 = vmatprep.subr.bf16.mxu0 0
    %907 = vmatpush1.bf16.msra.mxu0 0
    %908 = vmatprep.subr.bf16.mxu0 0
    %909 = vmatpush1.bf16.msra.mxu0 0
    %910 = vmatprep.subr.bf16.mxu0 0
    %911 = vmatpush1.bf16.msra.mxu0 0
    %912 = vmatprep.subr.bf16.mxu0 0
    %913 = vmatpush1.bf16.msra.mxu0 0
    %914 = vmatprep.mubr.bf16.mxu0 0
    %915 = vmatmul.mubr.bf16.gmra.mrb[0].mxu0 %v880
    %v916 = vpop.f32.mrb[0].mxu0
    %v917 = vadd.f32 %v638, %v916
    %v918 = vpop.f32.mrb[0].mxu0
    %v919 = vpop.f32.mrb[0].mxu0
    %v920 = vpop.f32.mrb[0].mxu0
    %921 = vdwg.mxu0
    %s922 = scalar_lea.vmem %s14, 4
    %923 = vst.msk [vmem:[%s922] sm:$0xf] %vm686, %v917
    %v924 = vpack.c.bf16 %v763, %v763
    %926 = vrot.lane.b32.xlu0 %v924, 32
    %v927 = vpop.permute.xlu0 %926
    %v929 = vsel %vm357, %v927, 0
    %931 = vmatprep.subr.bf16.mxu0 0
    %932 = vmatpush1.bf16.msra.mxu0 %v328
    %933 = vmatprep.subr.bf16.mxu0 0
    %934 = vmatpush1.bf16.msra.mxu0 %v329
    %935 = vmatprep.subr.bf16.mxu0 0
    %936 = vmatpush1.bf16.msra.mxu0 0
    %937 = vmatprep.subr.bf16.mxu0 0
    %938 = vmatpush1.bf16.msra.mxu0 0
    %939 = vmatprep.subr.bf16.mxu0 0
    %940 = vmatpush1.bf16.msra.mxu0 0
    %941 = vmatprep.subr.bf16.mxu0 0
    %942 = vmatpush1.bf16.msra.mxu0 0
    %943 = vmatprep.subr.bf16.mxu0 0
    %944 = vmatpush1.bf16.msra.mxu0 0
    %945 = vmatprep.subr.bf16.mxu0 0
    %946 = vmatpush1.bf16.msra.mxu0 0
    %947 = vmatprep.subr.bf16.mxu0 0
    %948 = vmatpush1.bf16.msra.mxu0 0
    %949 = vmatprep.subr.bf16.mxu0 0
    %950 = vmatpush1.bf16.msra.mxu0 0
    %951 = vmatprep.subr.bf16.mxu0 0
    %952 = vmatpush1.bf16.msra.mxu0 0
    %953 = vmatprep.subr.bf16.mxu0 0
    %954 = vmatpush1.bf16.msra.mxu0 0
    %955 = vmatprep.subr.bf16.mxu0 0
    %956 = vmatpush1.bf16.msra.mxu0 0
    %957 = vmatprep.subr.bf16.mxu0 0
    %958 = vmatpush1.bf16.msra.mxu0 0
    %959 = vmatprep.subr.bf16.mxu0 0
    %960 = vmatpush1.bf16.msra.mxu0 0
    %961 = vmatprep.subr.bf16.mxu0 0
    %962 = vmatpush1.bf16.msra.mxu0 0
    %963 = vmatprep.mubr.bf16.mxu0 0
    %964 = vmatmul.mubr.bf16.gmra.mrb[0].mxu0 %v929
    %v965 = vpop.f32.mrb[0].mxu0
    %v966 = vadd.f32 0.0, %v965
    %v967 = vpop.f32.mrb[0].mxu0
    %v968 = vpop.f32.mrb[0].mxu0
    %v969 = vpop.f32.mrb[0].mxu0
    %970 = vdwg.mxu0
    %v972 = vrot.slane %v966, 4
    %v974 = vadd.f32 %v306, %v972
    %v975 = vxor.u32 %v974, 2147483648
    %v976 = vmul.f32 %v975, 1.442695
    %v977 = vpow.pop %v976
    %v978 = vadd.f32 %v977, 1.0
    %v979 = vrcp.pop %v978
    %v980 = vmul.f32 1.0, %v979
    %v981 = vtanh.pop %v974
    %v983 = vrot.slane %v757, 4
    %v985 = vmul.f32 %v980, %v983
    %987 = vrot.lane.b32.xlu0 %v981, 64
    %v988 = vpop.permute.xlu0 %987
    %v990 = vmul.f32 %v980, %v988
    %992 = vrot.lane.b32.xlu0 %v990, 32
    %v993 = vpop.permute.xlu0 %992
    %v995 = vadd.f32 %v985, %v993
    %v996 = vtanh.pop %v995
    %998 = vrot.lane.b32.xlu0 %v996, 64
    %v999 = vpop.permute.xlu0 %998
    %v1001 = vmul.f32 %v980, %v999
    %1002 = vmatprep.subr.bf16.mxu0 0
    %1003 = vmatpush1.bf16.msra.mxu0 %v334
    %1004 = vmatprep.subr.bf16.mxu0 0
    %1005 = vmatpush1.bf16.msra.mxu0 %v335
    %1006 = vmatprep.subr.bf16.mxu0 0
    %1007 = vmatpush1.bf16.msra.mxu0 0
    %1008 = vmatprep.subr.bf16.mxu0 0
    %1009 = vmatpush1.bf16.msra.mxu0 0
    %1010 = vmatprep.subr.bf16.mxu0 0
    %1011 = vmatpush1.bf16.msra.mxu0 0
    %1012 = vmatprep.subr.bf16.mxu0 0
    %1013 = vmatpush1.bf16.msra.mxu0 0
    %1014 = vmatprep.subr.bf16.mxu0 0
    %1015 = vmatpush1.bf16.msra.mxu0 0
    %1016 = vmatprep.subr.bf16.mxu0 0
    %1017 = vmatpush1.bf16.msra.mxu0 0
    %1018 = vmatprep.subr.bf16.mxu0 0
    %1019 = vmatpush1.bf16.msra.mxu0 0
    %1020 = vmatprep.subr.bf16.mxu0 0
    %1021 = vmatpush1.bf16.msra.mxu0 0
    %1022 = vmatprep.subr.bf16.mxu0 0
    %1023 = vmatpush1.bf16.msra.mxu0 0
    %1024 = vmatprep.subr.bf16.mxu0 0
    %1025 = vmatpush1.bf16.msra.mxu0 0
    %1026 = vmatprep.subr.bf16.mxu0 0
    %1027 = vmatpush1.bf16.msra.mxu0 0
    %1028 = vmatprep.subr.bf16.mxu0 0
    %1029 = vmatpush1.bf16.msra.mxu0 0
    %1030 = vmatprep.subr.bf16.mxu0 0
    %1031 = vmatpush1.bf16.msra.mxu0 0
    %1032 = vmatprep.subr.bf16.mxu0 0
    %1033 = vmatpush1.bf16.msra.mxu0 0
    %1034 = vmatprep.mubr.bf16.mxu0 0
    %1035 = vmatmul.mubr.bf16.gmra.mrb[0].mxu0 %v929
    %v1036 = vpop.f32.mrb[0].mxu0
    %v1037 = vadd.f32 %v512, %v1036
    %v1038 = vpop.f32.mrb[0].mxu0
    %v1039 = vpop.f32.mrb[0].mxu0
    %v1040 = vpop.f32.mrb[0].mxu0
    %1041 = vdwg.mxu0
    %1042 = vmatprep.subr.bf16.mxu0 0
    %1043 = vmatpush1.bf16.msra.mxu0 %v340
    %1044 = vmatprep.subr.bf16.mxu0 0
    %1045 = vmatpush1.bf16.msra.mxu0 %v341
    %1046 = vmatprep.subr.bf16.mxu0 0
    %1047 = vmatpush1.bf16.msra.mxu0 0
    %1048 = vmatprep.subr.bf16.mxu0 0
    %1049 = vmatpush1.bf16.msra.mxu0 0
    %1050 = vmatprep.subr.bf16.mxu0 0
    %1051 = vmatpush1.bf16.msra.mxu0 0
    %1052 = vmatprep.subr.bf16.mxu0 0
    %1053 = vmatpush1.bf16.msra.mxu0 0
    %1054 = vmatprep.subr.bf16.mxu0 0
    %1055 = vmatpush1.bf16.msra.mxu0 0
    %1056 = vmatprep.subr.bf16.mxu0 0
    %1057 = vmatpush1.bf16.msra.mxu0 0
    %1058 = vmatprep.subr.bf16.mxu0 0
    %1059 = vmatpush1.bf16.msra.mxu0 0
    %1060 = vmatprep.subr.bf16.mxu0 0
    %1061 = vmatpush1.bf16.msra.mxu0 0
    %1062 = vmatprep.subr.bf16.mxu0 0
    %1063 = vmatpush1.bf16.msra.mxu0 0
    %1064 = vmatprep.subr.bf16.mxu0 0
    %1065 = vmatpush1.bf16.msra.mxu0 0
    %1066 = vmatprep.subr.bf16.mxu0 0
    %1067 = vmatpush1.bf16.msra.mxu0 0
    %1068 = vmatprep.subr.bf16.mxu0 0
    %1069 = vmatpush1.bf16.msra.mxu0 0
    %1070 = vmatprep.subr.bf16.mxu0 0
    %1071 = vmatpush1.bf16.msra.mxu0 0
    %1072 = vmatprep.subr.bf16.mxu0 0
    %1073 = vmatpush1.bf16.msra.mxu0 0
    %1074 = vmatprep.mubr.bf16.mxu0 0
    %1075 = vmatmul.mubr.bf16.gmra.mrb[0].mxu0 %v880
    %v1076 = vpop.f32.mrb[0].mxu0
    %v1077 = vadd.f32 0.0, %v1076
    %v1078 = vpop.f32.mrb[0].mxu0
    %v1079 = vpop.f32.mrb[0].mxu0
    %v1080 = vpop.f32.mrb[0].mxu0
    %1081 = vdwg.mxu0
    %v1082 = vadd.f32 %v1037, %v1077
    %v1083 = vxor.u32 %v1082, 2147483648
    %v1084 = vmul.f32 %v1083, 1.442695
    %v1085 = vpow.pop %v1084
    %v1086 = vadd.f32 %v1085, 1.0
    %v1087 = vrcp.pop %v1086
    %v1088 = vmul.f32 1.0, %v1087
    %v1089 = vtanh.pop %v1082
    %v1090 = vmul.f32 %v1088, %v862
    %1092 = vrot.lane.b32.xlu0 %v1089, 64
    %v1093 = vpop.permute.xlu0 %1092
    %v1095 = vmul.f32 %v1088, %v1093
    %1097 = vrot.lane.b32.xlu0 %v1095, 32
    %v1098 = vpop.permute.xlu0 %1097
    %v1100 = vadd.f32 %v1090, %v1098
    %v1101 = vtanh.pop %v1100
    %1103 = vrot.lane.b32.xlu0 %v1101, 64
    %v1104 = vpop.permute.xlu0 %1103
    %v1106 = vmul.f32 %v1088, %v1104
    %1108 = vrot.lane.b32.xlu0 %v1106, 32
    %v1109 = vpop.permute.xlu0 %1108
    %s1111 = scalar_lea.vmem [#allocation10], 8
    %1112 = vst.msk [vmem:[%s1111] sm:$0xf] %vm631, %v1109
    %v1113 = vpack.c.bf16 %v1106, %v1106
    %1115 = vrot.lane.b32.xlu0 %v1113, 32
    %v1116 = vpop.permute.xlu0 %1115
    %v1118 = vsel %vm357, %v1116, 0
    %1120 = vmatprep.subr.bf16.mxu0 0
    %1121 = vmatpush1.bf16.msra.mxu0 %v347
    %1122 = vmatprep.subr.bf16.mxu0 0
    %1123 = vmatpush1.bf16.msra.mxu0 %v348
    %1124 = vmatprep.subr.bf16.mxu0 0
    %1125 = vmatpush1.bf16.msra.mxu0 0
    %1126 = vmatprep.subr.bf16.mxu0 0
    %1127 = vmatpush1.bf16.msra.mxu0 0
    %1128 = vmatprep.subr.bf16.mxu0 0
    %1129 = vmatpush1.bf16.msra.mxu0 0
    %1130 = vmatprep.subr.bf16.mxu0 0
    %1131 = vmatpush1.bf16.msra.mxu0 0
    %1132 = vmatprep.subr.bf16.mxu0 0
    %1133 = vmatpush1.bf16.msra.mxu0 0
    %1134 = vmatprep.subr.bf16.mxu0 0
    %1135 = vmatpush1.bf16.msra.mxu0 0
    %1136 = vmatprep.subr.bf16.mxu0 0
    %1137 = vmatpush1.bf16.msra.mxu0 0
    %1138 = vmatprep.subr.bf16.mxu0 0
    %1139 = vmatpush1.bf16.msra.mxu0 0
    %1140 = vmatprep.subr.bf16.mxu0 0
    %1141 = vmatpush1.bf16.msra.mxu0 0
    %1142 = vmatprep.subr.bf16.mxu0 0
    %1143 = vmatpush1.bf16.msra.mxu0 0
    %1144 = vmatprep.subr.bf16.mxu0 0
    %1145 = vmatpush1.bf16.msra.mxu0 0
    %1146 = vmatprep.subr.bf16.mxu0 0
    %1147 = vmatpush1.bf16.msra.mxu0 0
    %1148 = vmatprep.subr.bf16.mxu0 0
    %1149 = vmatpush1.bf16.msra.mxu0 0
    %1150 = vmatprep.subr.bf16.mxu0 0
    %1151 = vmatpush1.bf16.msra.mxu0 0
    %1152 = vmatprep.mubr.bf16.mxu0 0
    %1153 = vmatmul.mubr.bf16.gmra.mrb[0].mxu0 %v1118
    %v1154 = vpop.f32.mrb[0].mxu0
    %v1155 = vadd.f32 %v638, %v1154
    %v1156 = vpop.f32.mrb[0].mxu0
    %v1157 = vpop.f32.mrb[0].mxu0
    %v1158 = vpop.f32.mrb[0].mxu0
    %1159 = vdwg.mxu0
    %s1160 = scalar_lea.vmem %s14, 8
    %1161 = vst.msk [vmem:[%s1160] sm:$0xf] %vm686, %v1155
    %v1162 = vpack.c.bf16 %v1001, %v1001
    %v1164 = vrot.slane %v1162, 2
    %1165 = vrot.lane.b32.xlu0 %v1164, 32
    %v1166 = vpop.permute.xlu0 %1165
    %v1168 = vsel %vm357, %v1166, 0
    %1170 = vmatprep.subr.bf16.mxu0 0
    %1171 = vmatpush1.bf16.msra.mxu0 %v328
    %1172 = vmatprep.subr.bf16.mxu0 0
    %1173 = vmatpush1.bf16.msra.mxu0 %v329
    %1174 = vmatprep.subr.bf16.mxu0 0
    %1175 = vmatpush1.bf16.msra.mxu0 0
    %1176 = vmatprep.subr.bf16.mxu0 0
    %1177 = vmatpush1.bf16.msra.mxu0 0
    %1178 = vmatprep.subr.bf16.mxu0 0
    %1179 = vmatpush1.bf16.msra.mxu0 0
    %1180 = vmatprep.subr.bf16.mxu0 0
    %1181 = vmatpush1.bf16.msra.mxu0 0
    %1182 = vmatprep.subr.bf16.mxu0 0
    %1183 = vmatpush1.bf16.msra.mxu0 0
    %1184 = vmatprep.subr.bf16.mxu0 0
    %1185 = vmatpush1.bf16.msra.mxu0 0
    %1186 = vmatprep.subr.bf16.mxu0 0
    %1187 = vmatpush1.bf16.msra.mxu0 0
    %1188 = vmatprep.subr.bf16.mxu0 0
    %1189 = vmatpush1.bf16.msra.mxu0 0
    %1190 = vmatprep.subr.bf16.mxu0 0
    %1191 = vmatpush1.bf16.msra.mxu0 0
    %1192 = vmatprep.subr.bf16.mxu0 0
    %1193 = vmatpush1.bf16.msra.mxu0 0
    %1194 = vmatprep.subr.bf16.mxu0 0
    %1195 = vmatpush1.bf16.msra.mxu0 0
    %1196 = vmatprep.subr.bf16.mxu0 0
    %1197 = vmatpush1.bf16.msra.mxu0 0
    %1198 = vmatprep.subr.bf16.mxu0 0
    %1199 = vmatpush1.bf16.msra.mxu0 0
    %1200 = vmatprep.subr.bf16.mxu0 0
    %1201 = vmatpush1.bf16.msra.mxu0 0
    %1202 = vmatprep.mubr.bf16.mxu0 0
    %1203 = vmatmul.mubr.bf16.gmra.mrb[0].mxu0 %v1168
    %v1204 = vpop.f32.mrb[0].mxu0
    %v1205 = vadd.f32 0.0, %v1204
    %v1206 = vpop.f32.mrb[0].mxu0
    %v1207 = vpop.f32.mrb[0].mxu0
    %v1208 = vpop.f32.mrb[0].mxu0
    %1209 = vdwg.mxu0
    %v1210 = vadd.f32 %v311, %v1205
    %v1211 = vxor.u32 %v1210, 2147483648
    %v1212 = vmul.f32 %v1211, 1.442695
    %v1213 = vpow.pop %v1212
    %v1214 = vadd.f32 %v1213, 1.0
    %v1215 = vrcp.pop %v1214
    %v1216 = vmul.f32 1.0, %v1215
    %v1217 = vtanh.pop %v1210
    %v1219 = vrot.slane %v995, 4
    %v1221 = vmul.f32 %v1216, %v1219
    %1223 = vrot.lane.b32.xlu0 %v1217, 64
    %v1224 = vpop.permute.xlu0 %1223
    %v1226 = vmul.f32 %v1216, %v1224
    %1228 = vrot.lane.b32.xlu0 %v1226, 32
    %v1229 = vpop.permute.xlu0 %1228
    %v1231 = vadd.f32 %v1221, %v1229
    %v1232 = vtanh.pop %v1231
    %1234 = vrot.lane.b32.xlu0 %v1232, 64
    %v1235 = vpop.permute.xlu0 %1234
    %v1237 = vmul.f32 %v1216, %v1235
    %1238 = vmatprep.subr.bf16.mxu0 0
    %1239 = vmatpush1.bf16.msra.mxu0 %v334
    %1240 = vmatprep.subr.bf16.mxu0 0
    %1241 = vmatpush1.bf16.msra.mxu0 %v335
    %1242 = vmatprep.subr.bf16.mxu0 0
    %1243 = vmatpush1.bf16.msra.mxu0 0
    %1244 = vmatprep.subr.bf16.mxu0 0
    %1245 = vmatpush1.bf16.msra.mxu0 0
    %1246 = vmatprep.subr.bf16.mxu0 0
    %1247 = vmatpush1.bf16.msra.mxu0 0
    %1248 = vmatprep.subr.bf16.mxu0 0
    %1249 = vmatpush1.bf16.msra.mxu0 0
    %1250 = vmatprep.subr.bf16.mxu0 0
    %1251 = vmatpush1.bf16.msra.mxu0 0
    %1252 = vmatprep.subr.bf16.mxu0 0
    %1253 = vmatpush1.bf16.msra.mxu0 0
    %1254 = vmatprep.subr.bf16.mxu0 0
    %1255 = vmatpush1.bf16.msra.mxu0 0
    %1256 = vmatprep.subr.bf16.mxu0 0
    %1257 = vmatpush1.bf16.msra.mxu0 0
    %1258 = vmatprep.subr.bf16.mxu0 0
    %1259 = vmatpush1.bf16.msra.mxu0 0
    %1260 = vmatprep.subr.bf16.mxu0 0
    %1261 = vmatpush1.bf16.msra.mxu0 0
    %1262 = vmatprep.subr.bf16.mxu0 0
    %1263 = vmatpush1.bf16.msra.mxu0 0
    %1264 = vmatprep.subr.bf16.mxu0 0
    %1265 = vmatpush1.bf16.msra.mxu0 0
    %1266 = vmatprep.subr.bf16.mxu0 0
    %1267 = vmatpush1.bf16.msra.mxu0 0
    %1268 = vmatprep.subr.bf16.mxu0 0
    %1269 = vmatpush1.bf16.msra.mxu0 0
    %1270 = vmatprep.mubr.bf16.mxu0 0
    %1271 = vmatmul.mubr.bf16.gmra.mrb[0].mxu0 %v1168
    %v1272 = vpop.f32.mrb[0].mxu0
    %v1273 = vadd.f32 %v512, %v1272
    %v1274 = vpop.f32.mrb[0].mxu0
    %v1275 = vpop.f32.mrb[0].mxu0
    %v1276 = vpop.f32.mrb[0].mxu0
    %1277 = vdwg.mxu0
    %1278 = vmatprep.subr.bf16.mxu0 0
    %1279 = vmatpush1.bf16.msra.mxu0 %v340
    %1280 = vmatprep.subr.bf16.mxu0 0
    %1281 = vmatpush1.bf16.msra.mxu0 %v341
    %1282 = vmatprep.subr.bf16.mxu0 0
    %1283 = vmatpush1.bf16.msra.mxu0 0
    %1284 = vmatprep.subr.bf16.mxu0 0
    %1285 = vmatpush1.bf16.msra.mxu0 0
    %1286 = vmatprep.subr.bf16.mxu0 0
    %1287 = vmatpush1.bf16.msra.mxu0 0
    %1288 = vmatprep.subr.bf16.mxu0 0
    %1289 = vmatpush1.bf16.msra.mxu0 0
    %1290 = vmatprep.subr.bf16.mxu0 0
    %1291 = vmatpush1.bf16.msra.mxu0 0
    %1292 = vmatprep.subr.bf16.mxu0 0
    %1293 = vmatpush1.bf16.msra.mxu0 0
    %1294 = vmatprep.subr.bf16.mxu0 0
    %1295 = vmatpush1.bf16.msra.mxu0 0
    %1296 = vmatprep.subr.bf16.mxu0 0
    %1297 = vmatpush1.bf16.msra.mxu0 0
    %1298 = vmatprep.subr.bf16.mxu0 0
    %1299 = vmatpush1.bf16.msra.mxu0 0
    %1300 = vmatprep.subr.bf16.mxu0 0
    %1301 = vmatpush1.bf16.msra.mxu0 0
    %1302 = vmatprep.subr.bf16.mxu0 0
    %1303 = vmatpush1.bf16.msra.mxu0 0
    %1304 = vmatprep.subr.bf16.mxu0 0
    %1305 = vmatpush1.bf16.msra.mxu0 0
    %1306 = vmatprep.subr.bf16.mxu0 0
    %1307 = vmatpush1.bf16.msra.mxu0 0
    %1308 = vmatprep.subr.bf16.mxu0 0
    %1309 = vmatpush1.bf16.msra.mxu0 0
    %1310 = vmatprep.mubr.bf16.mxu0 0
    %1311 = vmatmul.mubr.bf16.gmra.mrb[0].mxu0 %v1118
    %v1312 = vpop.f32.mrb[0].mxu0
    %v1313 = vadd.f32 0.0, %v1312
    %v1314 = vpop.f32.mrb[0].mxu0
    %v1315 = vpop.f32.mrb[0].mxu0
    %v1316 = vpop.f32.mrb[0].mxu0
    %1317 = vdwg.mxu0
    %v1318 = vadd.f32 %v1273, %v1313
    %v1319 = vxor.u32 %v1318, 2147483648
    %v1320 = vmul.f32 %v1319, 1.442695
    %v1321 = vpow.pop %v1320
    %v1322 = vadd.f32 %v1321, 1.0
    %v1323 = vrcp.pop %v1322
    %v1324 = vmul.f32 1.0, %v1323
    %v1325 = vtanh.pop %v1318
    %v1326 = vmul.f32 %v1324, %v1100
    %1328 = vrot.lane.b32.xlu0 %v1325, 64
    %v1329 = vpop.permute.xlu0 %1328
    %v1331 = vmul.f32 %v1324, %v1329
    %1333 = vrot.lane.b32.xlu0 %v1331, 32
    %v1334 = vpop.permute.xlu0 %1333
    %v1336 = vadd.f32 %v1326, %v1334
    %v1337 = vtanh.pop %v1336
    %1339 = vrot.lane.b32.xlu0 %v1337, 64
    %v1340 = vpop.permute.xlu0 %1339
    %v1342 = vmul.f32 %v1324, %v1340
    %1344 = vrot.lane.b32.xlu0 %v1342, 32
    %v1345 = vpop.permute.xlu0 %1344
    %s1347 = scalar_lea.vmem [#allocation10], 12
    %1348 = vst.msk [vmem:[%s1347] sm:$0xf] %vm631, %v1345
    %v1349 = vpack.c.bf16 %v1342, %v1342
    %1351 = vrot.lane.b32.xlu0 %v1349, 32
    %v1352 = vpop.permute.xlu0 %1351
    %v1354 = vsel %vm357, %v1352, 0
    %1356 = vmatprep.subr.bf16.mxu0 0
    %1357 = vmatpush1.bf16.msra.mxu0 %v347
    %1358 = vmatprep.subr.bf16.mxu0 0
    %1359 = vmatpush1.bf16.msra.mxu0 %v348
    %1360 = vmatprep.subr.bf16.mxu0 0
    %1361 = vmatpush1.bf16.msra.mxu0 0
    %1362 = vmatprep.subr.bf16.mxu0 0
    %1363 = vmatpush1.bf16.msra.mxu0 0
    %1364 = vmatprep.subr.bf16.mxu0 0
    %1365 = vmatpush1.bf16.msra.mxu0 0
    %1366 = vmatprep.subr.bf16.mxu0 0
    %1367 = vmatpush1.bf16.msra.mxu0 0
    %1368 = vmatprep.subr.bf16.mxu0 0
    %1369 = vmatpush1.bf16.msra.mxu0 0
    %1370 = vmatprep.subr.bf16.mxu0 0
    %1371 = vmatpush1.bf16.msra.mxu0 0
    %1372 = vmatprep.subr.bf16.mxu0 0
    %1373 = vmatpush1.bf16.msra.mxu0 0
    %1374 = vmatprep.subr.bf16.mxu0 0
    %1375 = vmatpush1.bf16.msra.mxu0 0
    %1376 = vmatprep.subr.bf16.mxu0 0
    %1377 = vmatpush1.bf16.msra.mxu0 0
    %1378 = vmatprep.subr.bf16.mxu0 0
    %1379 = vmatpush1.bf16.msra.mxu0 0
    %1380 = vmatprep.subr.bf16.mxu0 0
    %1381 = vmatpush1.bf16.msra.mxu0 0
    %1382 = vmatprep.subr.bf16.mxu0 0
    %1383 = vmatpush1.bf16.msra.mxu0 0
    %1384 = vmatprep.subr.bf16.mxu0 0
    %1385 = vmatpush1.bf16.msra.mxu0 0
    %1386 = vmatprep.subr.bf16.mxu0 0
    %1387 = vmatpush1.bf16.msra.mxu0 0
    %1388 = vmatprep.mubr.bf16.mxu0 0
    %1389 = vmatmul.mubr.bf16.gmra.mrb[0].mxu0 %v1354
    %v1390 = vpop.f32.mrb[0].mxu0
    %v1391 = vadd.f32 %v638, %v1390
    %v1392 = vpop.f32.mrb[0].mxu0
    %v1393 = vpop.f32.mrb[0].mxu0
    %v1394 = vpop.f32.mrb[0].mxu0
    %1395 = vdwg.mxu0
    %s1396 = scalar_lea.vmem %s14, 12
    %1397 = vst.msk [vmem:[%s1396] sm:$0xf] %vm686, %v1391
    %v1398 = vpack.c.bf16 %v1237, %v1237
    %1400 = vrot.lane.b32.xlu0 %v1398, 32
    %v1401 = vpop.permute.xlu0 %1400
    %v1403 = vsel %vm357, %v1401, 0
    %1405 = vmatprep.subr.bf16.mxu0 0
    %1406 = vmatpush1.bf16.msra.mxu0 %v328
    %1407 = vmatprep.subr.bf16.mxu0 0
    %1408 = vmatpush1.bf16.msra.mxu0 %v329
    %1409 = vmatprep.subr.bf16.mxu0 0
    %1410 = vmatpush1.bf16.msra.mxu0 0
    %1411 = vmatprep.subr.bf16.mxu0 0
    %1412 = vmatpush1.bf16.msra.mxu0 0
    %1413 = vmatprep.subr.bf16.mxu0 0
    %1414 = vmatpush1.bf16.msra.mxu0 0
    %1415 = vmatprep.subr.bf16.mxu0 0
    %1416 = vmatpush1.bf16.msra.mxu0 0
    %1417 = vmatprep.subr.bf16.mxu0 0
    %1418 = vmatpush1.bf16.msra.mxu0 0
    %1419 = vmatprep.subr.bf16.mxu0 0
    %1420 = vmatpush1.bf16.msra.mxu0 0
    %1421 = vmatprep.subr.bf16.mxu0 0
    %1422 = vmatpush1.bf16.msra.mxu0 0
    %1423 = vmatprep.subr.bf16.mxu0 0
    %1424 = vmatpush1.bf16.msra.mxu0 0
    %1425 = vmatprep.subr.bf16.mxu0 0
    %1426 = vmatpush1.bf16.msra.mxu0 0
    %1427 = vmatprep.subr.bf16.mxu0 0
    %1428 = vmatpush1.bf16.msra.mxu0 0
    %1429 = vmatprep.subr.bf16.mxu0 0
    %1430 = vmatpush1.bf16.msra.mxu0 0
    %1431 = vmatprep.subr.bf16.mxu0 0
    %1432 = vmatpush1.bf16.msra.mxu0 0
    %1433 = vmatprep.subr.bf16.mxu0 0
    %1434 = vmatpush1.bf16.msra.mxu0 0
    %1435 = vmatprep.subr.bf16.mxu0 0
    %1436 = vmatpush1.bf16.msra.mxu0 0
    %1437 = vmatprep.mubr.bf16.mxu0 0
    %1438 = vmatmul.mubr.bf16.gmra.mrb[0].mxu0 %v1403
    %v1439 = vpop.f32.mrb[0].mxu0
    %v1440 = vadd.f32 0.0, %v1439
    %v1441 = vpop.f32.mrb[0].mxu0
    %v1442 = vpop.f32.mrb[0].mxu0
    %v1443 = vpop.f32.mrb[0].mxu0
    %1444 = vdwg.mxu0
    %v1446 = vrot.slane %v1440, 4
    %v1448 = vadd.f32 %v311, %v1446
    %v1449 = vxor.u32 %v1448, 2147483648
    %v1450 = vmul.f32 %v1449, 1.442695
    %v1451 = vpow.pop %v1450
    %v1452 = vadd.f32 %v1451, 1.0
    %v1453 = vrcp.pop %v1452
    %v1454 = vmul.f32 1.0, %v1453
    %v1455 = vtanh.pop %v1448
    %v1457 = vrot.slane %v1231, 4
    %v1459 = vmul.f32 %v1454, %v1457
    %1461 = vrot.lane.b32.xlu0 %v1455, 64
    %v1462 = vpop.permute.xlu0 %1461
    %v1464 = vmul.f32 %v1454, %v1462
    %1466 = vrot.lane.b32.xlu0 %v1464, 32
    %v1467 = vpop.permute.xlu0 %1466
    %v1469 = vadd.f32 %v1459, %v1467
    %v1470 = vtanh.pop %v1469
    %1472 = vrot.lane.b32.xlu0 %v1470, 64
    %v1473 = vpop.permute.xlu0 %1472
    %v1475 = vmul.f32 %v1454, %v1473
    %1476 = vmatprep.subr.bf16.mxu0 0
    %1477 = vmatpush1.bf16.msra.mxu0 %v334
    %1478 = vmatprep.subr.bf16.mxu0 0
    %1479 = vmatpush1.bf16.msra.mxu0 %v335
    %1480 = vmatprep.subr.bf16.mxu0 0
    %1481 = vmatpush1.bf16.msra.mxu0 0
    %1482 = vmatprep.subr.bf16.mxu0 0
    %1483 = vmatpush1.bf16.msra.mxu0 0
    %1484 = vmatprep.subr.bf16.mxu0 0
    %1485 = vmatpush1.bf16.msra.mxu0 0
    %1486 = vmatprep.subr.bf16.mxu0 0
    %1487 = vmatpush1.bf16.msra.mxu0 0
    %1488 = vmatprep.subr.bf16.mxu0 0
    %1489 = vmatpush1.bf16.msra.mxu0 0
    %1490 = vmatprep.subr.bf16.mxu0 0
    %1491 = vmatpush1.bf16.msra.mxu0 0
    %1492 = vmatprep.subr.bf16.mxu0 0
    %1493 = vmatpush1.bf16.msra.mxu0 0
    %1494 = vmatprep.subr.bf16.mxu0 0
    %1495 = vmatpush1.bf16.msra.mxu0 0
    %1496 = vmatprep.subr.bf16.mxu0 0
    %1497 = vmatpush1.bf16.msra.mxu0 0
    %1498 = vmatprep.subr.bf16.mxu0 0
    %1499 = vmatpush1.bf16.msra.mxu0 0
    %1500 = vmatprep.subr.bf16.mxu0 0
    %1501 = vmatpush1.bf16.msra.mxu0 0
    %1502 = vmatprep.subr.bf16.mxu0 0
    %1503 = vmatpush1.bf16.msra.mxu0 0
    %1504 = vmatprep.subr.bf16.mxu0 0
    %1505 = vmatpush1.bf16.msra.mxu0 0
    %1506 = vmatprep.subr.bf16.mxu0 0
    %1507 = vmatpush1.bf16.msra.mxu0 0
    %1508 = vmatprep.mubr.bf16.mxu0 0
    %1509 = vmatmul.mubr.bf16.gmra.mrb[0].mxu0 %v1403
    %v1510 = vpop.f32.mrb[0].mxu0
    %v1511 = vadd.f32 %v512, %v1510
    %v1512 = vpop.f32.mrb[0].mxu0
    %v1513 = vpop.f32.mrb[0].mxu0
    %v1514 = vpop.f32.mrb[0].mxu0
    %1515 = vdwg.mxu0
    %1516 = vmatprep.subr.bf16.mxu0 0
    %1517 = vmatpush1.bf16.msra.mxu0 %v340
    %1518 = vmatprep.subr.bf16.mxu0 0
    %1519 = vmatpush1.bf16.msra.mxu0 %v341
    %1520 = vmatprep.subr.bf16.mxu0 0
    %1521 = vmatpush1.bf16.msra.mxu0 0
    %1522 = vmatprep.subr.bf16.mxu0 0
    %1523 = vmatpush1.bf16.msra.mxu0 0
    %1524 = vmatprep.subr.bf16.mxu0 0
    %1525 = vmatpush1.bf16.msra.mxu0 0
    %1526 = vmatprep.subr.bf16.mxu0 0
    %1527 = vmatpush1.bf16.msra.mxu0 0
    %1528 = vmatprep.subr.bf16.mxu0 0
    %1529 = vmatpush1.bf16.msra.mxu0 0
    %1530 = vmatprep.subr.bf16.mxu0 0
    %1531 = vmatpush1.bf16.msra.mxu0 0
    %1532 = vmatprep.subr.bf16.mxu0 0
    %1533 = vmatpush1.bf16.msra.mxu0 0
    %1534 = vmatprep.subr.bf16.mxu0 0
    %1535 = vmatpush1.bf16.msra.mxu0 0
    %1536 = vmatprep.subr.bf16.mxu0 0
    %1537 = vmatpush1.bf16.msra.mxu0 0
    %1538 = vmatprep.subr.bf16.mxu0 0
    %1539 = vmatpush1.bf16.msra.mxu0 0
    %1540 = vmatprep.subr.bf16.mxu0 0
    %1541 = vmatpush1.bf16.msra.mxu0 0
    %1542 = vmatprep.subr.bf16.mxu0 0
    %1543 = vmatpush1.bf16.msra.mxu0 0
    %1544 = vmatprep.subr.bf16.mxu0 0
    %1545 = vmatpush1.bf16.msra.mxu0 0
    %1546 = vmatprep.subr.bf16.mxu0 0
    %1547 = vmatpush1.bf16.msra.mxu0 0
    %1548 = vmatprep.mubr.bf16.mxu0 0
    %1549 = vmatmul.mubr.bf16.gmra.mrb[0].mxu0 %v1354
    %v1550 = vpop.f32.mrb[0].mxu0
    %v1551 = vadd.f32 0.0, %v1550
    %v1552 = vpop.f32.mrb[0].mxu0
    %v1553 = vpop.f32.mrb[0].mxu0
    %v1554 = vpop.f32.mrb[0].mxu0
    %1555 = vdwg.mxu0
    %v1556 = vadd.f32 %v1511, %v1551
    %v1557 = vxor.u32 %v1556, 2147483648
    %v1558 = vmul.f32 %v1557, 1.442695
    %v1559 = vpow.pop %v1558
    %v1560 = vadd.f32 %v1559, 1.0
    %v1561 = vrcp.pop %v1560
    %v1562 = vmul.f32 1.0, %v1561
    %v1563 = vtanh.pop %v1556
    %v1564 = vmul.f32 %v1562, %v1336
    %1566 = vrot.lane.b32.xlu0 %v1563, 64
    %v1567 = vpop.permute.xlu0 %1566
    %v1569 = vmul.f32 %v1562, %v1567
    %1571 = vrot.lane.b32.xlu0 %v1569, 32
    %v1572 = vpop.permute.xlu0 %1571
    %v1574 = vadd.f32 %v1564, %v1572
    %v1575 = vtanh.pop %v1574
    %1577 = vrot.lane.b32.xlu0 %v1575, 64
    %v1578 = vpop.permute.xlu0 %1577
    %v1580 = vmul.f32 %v1562, %v1578
    %1582 = vrot.lane.b32.xlu0 %v1580, 32
    %v1583 = vpop.permute.xlu0 %1582
    %s1585 = scalar_lea.vmem [#allocation10], 16
    %1586 = vst.msk [vmem:[%s1585] sm:$0xf] %vm631, %v1583
    %v1587 = vpack.c.bf16 %v1580, %v1580
    %1589 = vrot.lane.b32.xlu0 %v1587, 32
    %v1590 = vpop.permute.xlu0 %1589
    %v1592 = vsel %vm357, %v1590, 0
    %1594 = vmatprep.subr.bf16.mxu0 0
    %1595 = vmatpush1.bf16.msra.mxu0 %v347
    %1596 = vmatprep.subr.bf16.mxu0 0
    %1597 = vmatpush1.bf16.msra.mxu0 %v348
    %1598 = vmatprep.subr.bf16.mxu0 0
    %1599 = vmatpush1.bf16.msra.mxu0 0
    %1600 = vmatprep.subr.bf16.mxu0 0
    %1601 = vmatpush1.bf16.msra.mxu0 0
    %1602 = vmatprep.subr.bf16.mxu0 0
    %1603 = vmatpush1.bf16.msra.mxu0 0
    %1604 = vmatprep.subr.bf16.mxu0 0
    %1605 = vmatpush1.bf16.msra.mxu0 0
    %1606 = vmatprep.subr.bf16.mxu0 0
    %1607 = vmatpush1.bf16.msra.mxu0 0
    %1608 = vmatprep.subr.bf16.mxu0 0
    %1609 = vmatpush1.bf16.msra.mxu0 0
    %1610 = vmatprep.subr.bf16.mxu0 0
    %1611 = vmatpush1.bf16.msra.mxu0 0
    %1612 = vmatprep.subr.bf16.mxu0 0
    %1613 = vmatpush1.bf16.msra.mxu0 0
    %1614 = vmatprep.subr.bf16.mxu0 0
    %1615 = vmatpush1.bf16.msra.mxu0 0
    %1616 = vmatprep.subr.bf16.mxu0 0
    %1617 = vmatpush1.bf16.msra.mxu0 0
    %1618 = vmatprep.subr.bf16.mxu0 0
    %1619 = vmatpush1.bf16.msra.mxu0 0
    %1620 = vmatprep.subr.bf16.mxu0 0
    %1621 = vmatpush1.bf16.msra.mxu0 0
    %1622 = vmatprep.subr.bf16.mxu0 0
    %1623 = vmatpush1.bf16.msra.mxu0 0
    %1624 = vmatprep.subr.bf16.mxu0 0
    %1625 = vmatpush1.bf16.msra.mxu0 0
    %1626 = vmatprep.mubr.bf16.mxu0 0
    %1627 = vmatmul.mubr.bf16.gmra.mrb[0].mxu0 %v1592
    %v1628 = vpop.f32.mrb[0].mxu0
    %v1629 = vadd.f32 %v638, %v1628
    %v1630 = vpop.f32.mrb[0].mxu0
    %v1631 = vpop.f32.mrb[0].mxu0
    %v1632 = vpop.f32.mrb[0].mxu0
    %1633 = vdwg.mxu0
    %s1634 = scalar_lea.vmem %s14, 16
    %1635 = vst.msk [vmem:[%s1634] sm:$0xf] %vm686, %v1629
    %v1636 = vpack.c.bf16 %v1475, %v1475
    %v1638 = vrot.slane %v1636, 2
    %1639 = vrot.lane.b32.xlu0 %v1638, 32
    %v1640 = vpop.permute.xlu0 %1639
    %v1642 = vsel %vm357, %v1640, 0
    %1644 = vmatprep.subr.bf16.mxu0 0
    %1645 = vmatpush1.bf16.msra.mxu0 %v328
    %1646 = vmatprep.subr.bf16.mxu0 0
    %1647 = vmatpush1.bf16.msra.mxu0 %v329
    %1648 = vmatprep.subr.bf16.mxu0 0
    %1649 = vmatpush1.bf16.msra.mxu0 0
    %1650 = vmatprep.subr.bf16.mxu0 0
    %1651 = vmatpush1.bf16.msra.mxu0 0
    %1652 = vmatprep.subr.bf16.mxu0 0
    %1653 = vmatpush1.bf16.msra.mxu0 0
    %1654 = vmatprep.subr.bf16.mxu0 0
    %1655 = vmatpush1.bf16.msra.mxu0 0
    %1656 = vmatprep.subr.bf16.mxu0 0
    %1657 = vmatpush1.bf16.msra.mxu0 0
    %1658 = vmatprep.subr.bf16.mxu0 0
    %1659 = vmatpush1.bf16.msra.mxu0 0
    %1660 = vmatprep.subr.bf16.mxu0 0
    %1661 = vmatpush1.bf16.msra.mxu0 0
    %1662 = vmatprep.subr.bf16.mxu0 0
    %1663 = vmatpush1.bf16.msra.mxu0 0
    %1664 = vmatprep.subr.bf16.mxu0 0
    %1665 = vmatpush1.bf16.msra.mxu0 0
    %1666 = vmatprep.subr.bf16.mxu0 0
    %1667 = vmatpush1.bf16.msra.mxu0 0
    %1668 = vmatprep.subr.bf16.mxu0 0
    %1669 = vmatpush1.bf16.msra.mxu0 0
    %1670 = vmatprep.subr.bf16.mxu0 0
    %1671 = vmatpush1.bf16.msra.mxu0 0
    %1672 = vmatprep.subr.bf16.mxu0 0
    %1673 = vmatpush1.bf16.msra.mxu0 0
    %1674 = vmatprep.subr.bf16.mxu0 0
    %1675 = vmatpush1.bf16.msra.mxu0 0
    %1676 = vmatprep.mubr.bf16.mxu0 0
    %1677 = vmatmul.mubr.bf16.gmra.mrb[0].mxu0 %v1642
    %v1678 = vpop.f32.mrb[0].mxu0
    %v1679 = vadd.f32 0.0, %v1678
    %v1680 = vpop.f32.mrb[0].mxu0
    %v1681 = vpop.f32.mrb[0].mxu0
    %v1682 = vpop.f32.mrb[0].mxu0
    %1683 = vdwg.mxu0
    %v1684 = vadd.f32 %v314, %v1679
    %v1685 = vxor.u32 %v1684, 2147483648
    %v1686 = vmul.f32 %v1685, 1.442695
    %v1687 = vpow.pop %v1686
    %v1688 = vadd.f32 %v1687, 1.0
    %v1689 = vrcp.pop %v1688
    %v1690 = vmul.f32 1.0, %v1689
    %v1691 = vtanh.pop %v1684
    %v1693 = vrot.slane %v1469, 4
    %v1695 = vmul.f32 %v1690, %v1693
    %1697 = vrot.lane.b32.xlu0 %v1691, 64
    %v1698 = vpop.permute.xlu0 %1697
    %v1700 = vmul.f32 %v1690, %v1698
    %1702 = vrot.lane.b32.xlu0 %v1700, 32
    %v1703 = vpop.permute.xlu0 %1702
    %v1705 = vadd.f32 %v1695, %v1703
    %v1706 = vtanh.pop %v1705
    %1708 = vrot.lane.b32.xlu0 %v1706, 64
    %v1709 = vpop.permute.xlu0 %1708
    %v1711 = vmul.f32 %v1690, %v1709
    %1712 = vmatprep.subr.bf16.mxu0 0
    %1713 = vmatpush1.bf16.msra.mxu0 %v334
    %1714 = vmatprep.subr.bf16.mxu0 0
    %1715 = vmatpush1.bf16.msra.mxu0 %v335
    %1716 = vmatprep.subr.bf16.mxu0 0
    %1717 = vmatpush1.bf16.msra.mxu0 0
    %1718 = vmatprep.subr.bf16.mxu0 0
    %1719 = vmatpush1.bf16.msra.mxu0 0
    %1720 = vmatprep.subr.bf16.mxu0 0
    %1721 = vmatpush1.bf16.msra.mxu0 0
    %1722 = vmatprep.subr.bf16.mxu0 0
    %1723 = vmatpush1.bf16.msra.mxu0 0
    %1724 = vmatprep.subr.bf16.mxu0 0
    %1725 = vmatpush1.bf16.msra.mxu0 0
    %1726 = vmatprep.subr.bf16.mxu0 0
    %1727 = vmatpush1.bf16.msra.mxu0 0
    %1728 = vmatprep.subr.bf16.mxu0 0
    %1729 = vmatpush1.bf16.msra.mxu0 0
    %1730 = vmatprep.subr.bf16.mxu0 0
    %1731 = vmatpush1.bf16.msra.mxu0 0
    %1732 = vmatprep.subr.bf16.mxu0 0
    %1733 = vmatpush1.bf16.msra.mxu0 0
    %1734 = vmatprep.subr.bf16.mxu0 0
    %1735 = vmatpush1.bf16.msra.mxu0 0
    %1736 = vmatprep.subr.bf16.mxu0 0
    %1737 = vmatpush1.bf16.msra.mxu0 0
    %1738 = vmatprep.subr.bf16.mxu0 0
    %1739 = vmatpush1.bf16.msra.mxu0 0
    %1740 = vmatprep.subr.bf16.mxu0 0
    %1741 = vmatpush1.bf16.msra.mxu0 0
    %1742 = vmatprep.subr.bf16.mxu0 0
    %1743 = vmatpush1.bf16.msra.mxu0 0
    %1744 = vmatprep.mubr.bf16.mxu0 0
    %1745 = vmatmul.mubr.bf16.gmra.mrb[0].mxu0 %v1642
    %v1746 = vpop.f32.mrb[0].mxu0
    %v1747 = vadd.f32 %v512, %v1746
    %v1748 = vpop.f32.mrb[0].mxu0
    %v1749 = vpop.f32.mrb[0].mxu0
    %v1750 = vpop.f32.mrb[0].mxu0
    %1751 = vdwg.mxu0
    %1752 = vmatprep.subr.bf16.mxu0 0
    %1753 = vmatpush1.bf16.msra.mxu0 %v340
    %1754 = vmatprep.subr.bf16.mxu0 0
    %1755 = vmatpush1.bf16.msra.mxu0 %v341
    %1756 = vmatprep.subr.bf16.mxu0 0
    %1757 = vmatpush1.bf16.msra.mxu0 0
    %1758 = vmatprep.subr.bf16.mxu0 0
    %1759 = vmatpush1.bf16.msra.mxu0 0
    %1760 = vmatprep.subr.bf16.mxu0 0
    %1761 = vmatpush1.bf16.msra.mxu0 0
    %1762 = vmatprep.subr.bf16.mxu0 0
    %1763 = vmatpush1.bf16.msra.mxu0 0
    %1764 = vmatprep.subr.bf16.mxu0 0
    %1765 = vmatpush1.bf16.msra.mxu0 0
    %1766 = vmatprep.subr.bf16.mxu0 0
    %1767 = vmatpush1.bf16.msra.mxu0 0
    %1768 = vmatprep.subr.bf16.mxu0 0
    %1769 = vmatpush1.bf16.msra.mxu0 0
    %1770 = vmatprep.subr.bf16.mxu0 0
    %1771 = vmatpush1.bf16.msra.mxu0 0
    %1772 = vmatprep.subr.bf16.mxu0 0
    %1773 = vmatpush1.bf16.msra.mxu0 0
    %1774 = vmatprep.subr.bf16.mxu0 0
    %1775 = vmatpush1.bf16.msra.mxu0 0
    %1776 = vmatprep.subr.bf16.mxu0 0
    %1777 = vmatpush1.bf16.msra.mxu0 0
    %1778 = vmatprep.subr.bf16.mxu0 0
    %1779 = vmatpush1.bf16.msra.mxu0 0
    %1780 = vmatprep.subr.bf16.mxu0 0
    %1781 = vmatpush1.bf16.msra.mxu0 0
    %1782 = vmatprep.subr.bf16.mxu0 0
    %1783 = vmatpush1.bf16.msra.mxu0 0
    %1784 = vmatprep.mubr.bf16.mxu0 0
    %1785 = vmatmul.mubr.bf16.gmra.mrb[0].mxu0 %v1592
    %v1786 = vpop.f32.mrb[0].mxu0
    %v1787 = vadd.f32 0.0, %v1786
    %v1788 = vpop.f32.mrb[0].mxu0
    %v1789 = vpop.f32.mrb[0].mxu0
    %v1790 = vpop.f32.mrb[0].mxu0
    %1791 = vdwg.mxu0
    %v1792 = vadd.f32 %v1747, %v1787
    %v1793 = vxor.u32 %v1792, 2147483648
    %v1794 = vmul.f32 %v1793, 1.442695
    %v1795 = vpow.pop %v1794
    %v1796 = vadd.f32 %v1795, 1.0
    %v1797 = vrcp.pop %v1796
    %v1798 = vmul.f32 1.0, %v1797
    %v1799 = vtanh.pop %v1792
    %v1800 = vmul.f32 %v1798, %v1574
    %1802 = vrot.lane.b32.xlu0 %v1799, 64
    %v1803 = vpop.permute.xlu0 %1802
    %v1805 = vmul.f32 %v1798, %v1803
    %1807 = vrot.lane.b32.xlu0 %v1805, 32
    %v1808 = vpop.permute.xlu0 %1807
    %v1810 = vadd.f32 %v1800, %v1808
    %v1811 = vtanh.pop %v1810
    %1813 = vrot.lane.b32.xlu0 %v1811, 64
    %v1814 = vpop.permute.xlu0 %1813
    %v1816 = vmul.f32 %v1798, %v1814
    %1818 = vrot.lane.b32.xlu0 %v1816, 32
    %v1819 = vpop.permute.xlu0 %1818
    %s1821 = scalar_lea.vmem [#allocation10], 20
    %1822 = vst.msk [vmem:[%s1821] sm:$0xf] %vm631, %v1819
    %v1823 = vpack.c.bf16 %v1816, %v1816
    %1825 = vrot.lane.b32.xlu0 %v1823, 32
    %v1826 = vpop.permute.xlu0 %1825
    %v1828 = vsel %vm357, %v1826, 0
    %1830 = vmatprep.subr.bf16.mxu0 0
    %1831 = vmatpush1.bf16.msra.mxu0 %v347
    %1832 = vmatprep.subr.bf16.mxu0 0
    %1833 = vmatpush1.bf16.msra.mxu0 %v348
    %1834 = vmatprep.subr.bf16.mxu0 0
    %1835 = vmatpush1.bf16.msra.mxu0 0
    %1836 = vmatprep.subr.bf16.mxu0 0
    %1837 = vmatpush1.bf16.msra.mxu0 0
    %1838 = vmatprep.subr.bf16.mxu0 0
    %1839 = vmatpush1.bf16.msra.mxu0 0
    %1840 = vmatprep.subr.bf16.mxu0 0
    %1841 = vmatpush1.bf16.msra.mxu0 0
    %1842 = vmatprep.subr.bf16.mxu0 0
    %1843 = vmatpush1.bf16.msra.mxu0 0
    %1844 = vmatprep.subr.bf16.mxu0 0
    %1845 = vmatpush1.bf16.msra.mxu0 0
    %1846 = vmatprep.subr.bf16.mxu0 0
    %1847 = vmatpush1.bf16.msra.mxu0 0
    %1848 = vmatprep.subr.bf16.mxu0 0
    %1849 = vmatpush1.bf16.msra.mxu0 0
    %1850 = vmatprep.subr.bf16.mxu0 0
    %1851 = vmatpush1.bf16.msra.mxu0 0
    %1852 = vmatprep.subr.bf16.mxu0 0
    %1853 = vmatpush1.bf16.msra.mxu0 0
    %1854 = vmatprep.subr.bf16.mxu0 0
    %1855 = vmatpush1.bf16.msra.mxu0 0
    %1856 = vmatprep.subr.bf16.mxu0 0
    %1857 = vmatpush1.bf16.msra.mxu0 0
    %1858 = vmatprep.subr.bf16.mxu0 0
    %1859 = vmatpush1.bf16.msra.mxu0 0
    %1860 = vmatprep.subr.bf16.mxu0 0
    %1861 = vmatpush1.bf16.msra.mxu0 0
    %1862 = vmatprep.mubr.bf16.mxu0 0
    %1863 = vmatmul.mubr.bf16.gmra.mrb[0].mxu0 %v1828
    %v1864 = vpop.f32.mrb[0].mxu0
    %v1865 = vadd.f32 %v638, %v1864
    %v1866 = vpop.f32.mrb[0].mxu0
    %v1867 = vpop.f32.mrb[0].mxu0
    %v1868 = vpop.f32.mrb[0].mxu0
    %1869 = vdwg.mxu0
    %s1870 = scalar_lea.vmem %s14, 20
    %1871 = vst.msk [vmem:[%s1870] sm:$0xf] %vm686, %v1865
    %v1872 = vpack.c.bf16 %v1711, %v1711
    %1874 = vrot.lane.b32.xlu0 %v1872, 32
    %v1875 = vpop.permute.xlu0 %1874
    %v1877 = vsel %vm357, %v1875, 0
    %1879 = vmatprep.subr.bf16.mxu0 0
    %1880 = vmatpush1.bf16.msra.mxu0 %v328
    %1881 = vmatprep.subr.bf16.mxu0 0
    %1882 = vmatpush1.bf16.msra.mxu0 %v329
    %1883 = vmatprep.subr.bf16.mxu0 0
    %1884 = vmatpush1.bf16.msra.mxu0 0
    %1885 = vmatprep.subr.bf16.mxu0 0
    %1886 = vmatpush1.bf16.msra.mxu0 0
    %1887 = vmatprep.subr.bf16.mxu0 0
    %1888 = vmatpush1.bf16.msra.mxu0 0
    %1889 = vmatprep.subr.bf16.mxu0 0
    %1890 = vmatpush1.bf16.msra.mxu0 0
    %1891 = vmatprep.subr.bf16.mxu0 0
    %1892 = vmatpush1.bf16.msra.mxu0 0
    %1893 = vmatprep.subr.bf16.mxu0 0
    %1894 = vmatpush1.bf16.msra.mxu0 0
    %1895 = vmatprep.subr.bf16.mxu0 0
    %1896 = vmatpush1.bf16.msra.mxu0 0
    %1897 = vmatprep.subr.bf16.mxu0 0
    %1898 = vmatpush1.bf16.msra.mxu0 0
    %1899 = vmatprep.subr.bf16.mxu0 0
    %1900 = vmatpush1.bf16.msra.mxu0 0
    %1901 = vmatprep.subr.bf16.mxu0 0
    %1902 = vmatpush1.bf16.msra.mxu0 0
    %1903 = vmatprep.subr.bf16.mxu0 0
    %1904 = vmatpush1.bf16.msra.mxu0 0
    %1905 = vmatprep.subr.bf16.mxu0 0
    %1906 = vmatpush1.bf16.msra.mxu0 0
    %1907 = vmatprep.subr.bf16.mxu0 0
    %1908 = vmatpush1.bf16.msra.mxu0 0
    %1909 = vmatprep.subr.bf16.mxu0 0
    %1910 = vmatpush1.bf16.msra.mxu0 0
    %1911 = vmatprep.mubr.bf16.mxu0 0
    %1912 = vmatmul.mubr.bf16.gmra.mrb[0].mxu0 %v1877
    %v1913 = vpop.f32.mrb[0].mxu0
    %v1914 = vadd.f32 0.0, %v1913
    %v1915 = vpop.f32.mrb[0].mxu0
    %v1916 = vpop.f32.mrb[0].mxu0
    %v1917 = vpop.f32.mrb[0].mxu0
    %1918 = vdwg.mxu0
    %v1920 = vrot.slane %v1914, 4
    %v1922 = vadd.f32 %v314, %v1920
    %v1923 = vxor.u32 %v1922, 2147483648
    %v1924 = vmul.f32 %v1923, 1.442695
    %v1925 = vpow.pop %v1924
    %v1926 = vadd.f32 %v1925, 1.0
    %v1927 = vrcp.pop %v1926
    %v1928 = vmul.f32 1.0, %v1927
    %v1929 = vtanh.pop %v1922
    %v1931 = vrot.slane %v1705, 4
    %v1933 = vmul.f32 %v1928, %v1931
    %1935 = vrot.lane.b32.xlu0 %v1929, 64
    %v1936 = vpop.permute.xlu0 %1935
    %v1938 = vmul.f32 %v1928, %v1936
    %1940 = vrot.lane.b32.xlu0 %v1938, 32
    %v1941 = vpop.permute.xlu0 %1940
    %v1943 = vadd.f32 %v1933, %v1941
    %v1944 = vtanh.pop %v1943
    %1946 = vrot.lane.b32.xlu0 %v1944, 64
    %v1947 = vpop.permute.xlu0 %1946
    %v1949 = vmul.f32 %v1928, %v1947
    %1950 = vmatprep.subr.bf16.mxu0 0
    %1951 = vmatpush1.bf16.msra.mxu0 %v334
    %1952 = vmatprep.subr.bf16.mxu0 0
    %1953 = vmatpush1.bf16.msra.mxu0 %v335
    %1954 = vmatprep.subr.bf16.mxu0 0
    %1955 = vmatpush1.bf16.msra.mxu0 0
    %1956 = vmatprep.subr.bf16.mxu0 0
    %1957 = vmatpush1.bf16.msra.mxu0 0
    %1958 = vmatprep.subr.bf16.mxu0 0
    %1959 = vmatpush1.bf16.msra.mxu0 0
    %1960 = vmatprep.subr.bf16.mxu0 0
    %1961 = vmatpush1.bf16.msra.mxu0 0
    %1962 = vmatprep.subr.bf16.mxu0 0
    %1963 = vmatpush1.bf16.msra.mxu0 0
    %1964 = vmatprep.subr.bf16.mxu0 0
    %1965 = vmatpush1.bf16.msra.mxu0 0
    %1966 = vmatprep.subr.bf16.mxu0 0
    %1967 = vmatpush1.bf16.msra.mxu0 0
    %1968 = vmatprep.subr.bf16.mxu0 0
    %1969 = vmatpush1.bf16.msra.mxu0 0
    %1970 = vmatprep.subr.bf16.mxu0 0
    %1971 = vmatpush1.bf16.msra.mxu0 0
    %1972 = vmatprep.subr.bf16.mxu0 0
    %1973 = vmatpush1.bf16.msra.mxu0 0
    %1974 = vmatprep.subr.bf16.mxu0 0
    %1975 = vmatpush1.bf16.msra.mxu0 0
    %1976 = vmatprep.subr.bf16.mxu0 0
    %1977 = vmatpush1.bf16.msra.mxu0 0
    %1978 = vmatprep.subr.bf16.mxu0 0
    %1979 = vmatpush1.bf16.msra.mxu0 0
    %1980 = vmatprep.subr.bf16.mxu0 0
    %1981 = vmatpush1.bf16.msra.mxu0 0
    %1982 = vmatprep.mubr.bf16.mxu0 0
    %1983 = vmatmul.mubr.bf16.gmra.mrb[0].mxu0 %v1877
    %v1984 = vpop.f32.mrb[0].mxu0
    %v1985 = vadd.f32 %v512, %v1984
    %v1986 = vpop.f32.mrb[0].mxu0
    %v1987 = vpop.f32.mrb[0].mxu0
    %v1988 = vpop.f32.mrb[0].mxu0
    %1989 = vdwg.mxu0
    %1990 = vmatprep.subr.bf16.mxu0 0
    %1991 = vmatpush1.bf16.msra.mxu0 %v340
    %1992 = vmatprep.subr.bf16.mxu0 0
    %1993 = vmatpush1.bf16.msra.mxu0 %v341
    %1994 = vmatprep.subr.bf16.mxu0 0
    %1995 = vmatpush1.bf16.msra.mxu0 0
    %1996 = vmatprep.subr.bf16.mxu0 0
    %1997 = vmatpush1.bf16.msra.mxu0 0
    %1998 = vmatprep.subr.bf16.mxu0 0
    %1999 = vmatpush1.bf16.msra.mxu0 0
    %2000 = vmatprep.subr.bf16.mxu0 0
    %2001 = vmatpush1.bf16.msra.mxu0 0
    %2002 = vmatprep.subr.bf16.mxu0 0
    %2003 = vmatpush1.bf16.msra.mxu0 0
    %2004 = vmatprep.subr.bf16.mxu0 0
    %2005 = vmatpush1.bf16.msra.mxu0 0
    %2006 = vmatprep.subr.bf16.mxu0 0
    %2007 = vmatpush1.bf16.msra.mxu0 0
    %2008 = vmatprep.subr.bf16.mxu0 0
    %2009 = vmatpush1.bf16.msra.mxu0 0
    %2010 = vmatprep.subr.bf16.mxu0 0
    %2011 = vmatpush1.bf16.msra.mxu0 0
    %2012 = vmatprep.subr.bf16.mxu0 0
    %2013 = vmatpush1.bf16.msra.mxu0 0
    %2014 = vmatprep.subr.bf16.mxu0 0
    %2015 = vmatpush1.bf16.msra.mxu0 0
    %2016 = vmatprep.subr.bf16.mxu0 0
    %2017 = vmatpush1.bf16.msra.mxu0 0
    %2018 = vmatprep.subr.bf16.mxu0 0
    %2019 = vmatpush1.bf16.msra.mxu0 0
    %2020 = vmatprep.subr.bf16.mxu0 0
    %2021 = vmatpush1.bf16.msra.mxu0 0
    %2022 = vmatprep.mubr.bf16.mxu0 0
    %2023 = vmatmul.mubr.bf16.gmra.mrb[0].mxu0 %v1828
    %v2024 = vpop.f32.mrb[0].mxu0
    %v2025 = vadd.f32 0.0, %v2024
    %v2026 = vpop.f32.mrb[0].mxu0
    %v2027 = vpop.f32.mrb[0].mxu0
    %v2028 = vpop.f32.mrb[0].mxu0
    %2029 = vdwg.mxu0
    %v2030 = vadd.f32 %v1985, %v2025
    %v2031 = vxor.u32 %v2030, 2147483648
    %v2032 = vmul.f32 %v2031, 1.442695
    %v2033 = vpow.pop %v2032
    %v2034 = vadd.f32 %v2033, 1.0
    %v2035 = vrcp.pop %v2034
    %v2036 = vmul.f32 1.0, %v2035
    %v2037 = vtanh.pop %v2030
    %v2038 = vmul.f32 %v2036, %v1810
    %2040 = vrot.lane.b32.xlu0 %v2037, 64
    %v2041 = vpop.permute.xlu0 %2040
    %v2043 = vmul.f32 %v2036, %v2041
    %2045 = vrot.lane.b32.xlu0 %v2043, 32
    %v2046 = vpop.permute.xlu0 %2045
    %v2048 = vadd.f32 %v2038, %v2046
    %v2049 = vtanh.pop %v2048
    %2051 = vrot.lane.b32.xlu0 %v2049, 64
    %v2052 = vpop.permute.xlu0 %2051
    %v2054 = vmul.f32 %v2036, %v2052
    %2056 = vrot.lane.b32.xlu0 %v2054, 32
    %v2057 = vpop.permute.xlu0 %2056
    %s2059 = scalar_lea.vmem [#allocation10], 24
    %2060 = vst.msk [vmem:[%s2059] sm:$0xf] %vm631, %v2057
    %v2061 = vpack.c.bf16 %v2054, %v2054
    %2063 = vrot.lane.b32.xlu0 %v2061, 32
    %v2064 = vpop.permute.xlu0 %2063
    %v2066 = vsel %vm357, %v2064, 0
    %2068 = vmatprep.subr.bf16.mxu0 0
    %2069 = vmatpush1.bf16.msra.mxu0 %v347
    %2070 = vmatprep.subr.bf16.mxu0 0
    %2071 = vmatpush1.bf16.msra.mxu0 %v348
    %2072 = vmatprep.subr.bf16.mxu0 0
    %2073 = vmatpush1.bf16.msra.mxu0 0
    %2074 = vmatprep.subr.bf16.mxu0 0
    %2075 = vmatpush1.bf16.msra.mxu0 0
    %2076 = vmatprep.subr.bf16.mxu0 0
    %2077 = vmatpush1.bf16.msra.mxu0 0
    %2078 = vmatprep.subr.bf16.mxu0 0
    %2079 = vmatpush1.bf16.msra.mxu0 0
    %2080 = vmatprep.subr.bf16.mxu0 0
    %2081 = vmatpush1.bf16.msra.mxu0 0
    %2082 = vmatprep.subr.bf16.mxu0 0
    %2083 = vmatpush1.bf16.msra.mxu0 0
    %2084 = vmatprep.subr.bf16.mxu0 0
    %2085 = vmatpush1.bf16.msra.mxu0 0
    %2086 = vmatprep.subr.bf16.mxu0 0
    %2087 = vmatpush1.bf16.msra.mxu0 0
    %2088 = vmatprep.subr.bf16.mxu0 0
    %2089 = vmatpush1.bf16.msra.mxu0 0
    %2090 = vmatprep.subr.bf16.mxu0 0
    %2091 = vmatpush1.bf16.msra.mxu0 0
    %2092 = vmatprep.subr.bf16.mxu0 0
    %2093 = vmatpush1.bf16.msra.mxu0 0
    %2094 = vmatprep.subr.bf16.mxu0 0
    %2095 = vmatpush1.bf16.msra.mxu0 0
    %2096 = vmatprep.subr.bf16.mxu0 0
    %2097 = vmatpush1.bf16.msra.mxu0 0
    %2098 = vmatprep.subr.bf16.mxu0 0
    %2099 = vmatpush1.bf16.msra.mxu0 0
    %2100 = vmatprep.mubr.bf16.mxu0 0
    %2101 = vmatmul.mubr.bf16.gmra.mrb[0].mxu0 %v2066
    %v2102 = vpop.f32.mrb[0].mxu0
    %v2103 = vadd.f32 %v638, %v2102
    %v2104 = vpop.f32.mrb[0].mxu0
    %v2105 = vpop.f32.mrb[0].mxu0
    %v2106 = vpop.f32.mrb[0].mxu0
    %2107 = vdwg.mxu0
    %s2108 = scalar_lea.vmem %s14, 24
    %2109 = vst.msk [vmem:[%s2108] sm:$0xf] %vm686, %v2103
    %v2110 = vpack.c.bf16 %v1949, %v1949
    %v2112 = vrot.slane %v2110, 2
    %2113 = vrot.lane.b32.xlu0 %v2112, 32
    %v2114 = vpop.permute.xlu0 %2113
    %v2116 = vsel %vm357, %v2114, 0
    %2118 = vmatprep.subr.bf16.mxu0 0
    %2119 = vmatpush1.bf16.msra.mxu0 %v328
    %2120 = vmatprep.subr.bf16.mxu0 0
    %2121 = vmatpush1.bf16.msra.mxu0 %v329
    %2122 = vmatprep.subr.bf16.mxu0 0
    %2123 = vmatpush1.bf16.msra.mxu0 0
    %2124 = vmatprep.subr.bf16.mxu0 0
    %2125 = vmatpush1.bf16.msra.mxu0 0
    %2126 = vmatprep.subr.bf16.mxu0 0
    %2127 = vmatpush1.bf16.msra.mxu0 0
    %2128 = vmatprep.subr.bf16.mxu0 0
    %2129 = vmatpush1.bf16.msra.mxu0 0
    %2130 = vmatprep.subr.bf16.mxu0 0
    %2131 = vmatpush1.bf16.msra.mxu0 0
    %2132 = vmatprep.subr.bf16.mxu0 0
    %2133 = vmatpush1.bf16.msra.mxu0 0
    %2134 = vmatprep.subr.bf16.mxu0 0
    %2135 = vmatpush1.bf16.msra.mxu0 0
    %2136 = vmatprep.subr.bf16.mxu0 0
    %2137 = vmatpush1.bf16.msra.mxu0 0
    %2138 = vmatprep.subr.bf16.mxu0 0
    %2139 = vmatpush1.bf16.msra.mxu0 0
    %2140 = vmatprep.subr.bf16.mxu0 0
    %2141 = vmatpush1.bf16.msra.mxu0 0
    %2142 = vmatprep.subr.bf16.mxu0 0
    %2143 = vmatpush1.bf16.msra.mxu0 0
    %2144 = vmatprep.subr.bf16.mxu0 0
    %2145 = vmatpush1.bf16.msra.mxu0 0
    %2146 = vmatprep.subr.bf16.mxu0 0
    %2147 = vmatpush1.bf16.msra.mxu0 0
    %2148 = vmatprep.subr.bf16.mxu0 0
    %2149 = vmatpush1.bf16.msra.mxu0 0
    %2150 = vmatprep.mubr.bf16.mxu0 0
    %2151 = vmatmul.mubr.bf16.gmra.mrb[0].mxu0 %v2116
    %v2152 = vpop.f32.mrb[0].mxu0
    %v2153 = vadd.f32 0.0, %v2152
    %v2154 = vpop.f32.mrb[0].mxu0
    %v2155 = vpop.f32.mrb[0].mxu0
    %v2156 = vpop.f32.mrb[0].mxu0
    %2157 = vdwg.mxu0
    %v2158 = vadd.f32 %v319, %v2153
    %v2159 = vxor.u32 %v2158, 2147483648
    %v2160 = vmul.f32 %v2159, 1.442695
    %v2161 = vpow.pop %v2160
    %v2162 = vadd.f32 %v2161, 1.0
    %v2163 = vrcp.pop %v2162
    %v2164 = vmul.f32 1.0, %v2163
    %v2165 = vtanh.pop %v2158
    %v2167 = vrot.slane %v1943, 4
    %v2169 = vmul.f32 %v2164, %v2167
    %2171 = vrot.lane.b32.xlu0 %v2165, 64
    %v2172 = vpop.permute.xlu0 %2171
    %v2174 = vmul.f32 %v2164, %v2172
    %2176 = vrot.lane.b32.xlu0 %v2174, 32
    %v2177 = vpop.permute.xlu0 %2176
    %v2179 = vadd.f32 %v2169, %v2177
    %v2180 = vtanh.pop %v2179
    %2182 = vrot.lane.b32.xlu0 %v2180, 64
    %v2183 = vpop.permute.xlu0 %2182
    %v2185 = vmul.f32 %v2164, %v2183
    %2186 = vmatprep.subr.bf16.mxu0 0
    %2187 = vmatpush1.bf16.msra.mxu0 %v334
    %2188 = vmatprep.subr.bf16.mxu0 0
    %2189 = vmatpush1.bf16.msra.mxu0 %v335
    %2190 = vmatprep.subr.bf16.mxu0 0
    %2191 = vmatpush1.bf16.msra.mxu0 0
    %2192 = vmatprep.subr.bf16.mxu0 0
    %2193 = vmatpush1.bf16.msra.mxu0 0
    %2194 = vmatprep.subr.bf16.mxu0 0
    %2195 = vmatpush1.bf16.msra.mxu0 0
    %2196 = vmatprep.subr.bf16.mxu0 0
    %2197 = vmatpush1.bf16.msra.mxu0 0
    %2198 = vmatprep.subr.bf16.mxu0 0
    %2199 = vmatpush1.bf16.msra.mxu0 0
    %2200 = vmatprep.subr.bf16.mxu0 0
    %2201 = vmatpush1.bf16.msra.mxu0 0
    %2202 = vmatprep.subr.bf16.mxu0 0
    %2203 = vmatpush1.bf16.msra.mxu0 0
    %2204 = vmatprep.subr.bf16.mxu0 0
    %2205 = vmatpush1.bf16.msra.mxu0 0
    %2206 = vmatprep.subr.bf16.mxu0 0
    %2207 = vmatpush1.bf16.msra.mxu0 0
    %2208 = vmatprep.subr.bf16.mxu0 0
    %2209 = vmatpush1.bf16.msra.mxu0 0
    %2210 = vmatprep.subr.bf16.mxu0 0
    %2211 = vmatpush1.bf16.msra.mxu0 0
    %2212 = vmatprep.subr.bf16.mxu0 0
    %2213 = vmatpush1.bf16.msra.mxu0 0
    %2214 = vmatprep.subr.bf16.mxu0 0
    %2215 = vmatpush1.bf16.msra.mxu0 0
    %2216 = vmatprep.subr.bf16.mxu0 0
    %2217 = vmatpush1.bf16.msra.mxu0 0
    %2218 = vmatprep.mubr.bf16.mxu0 0
    %2219 = vmatmul.mubr.bf16.gmra.mrb[0].mxu0 %v2116
    %v2220 = vpop.f32.mrb[0].mxu0
    %v2221 = vadd.f32 %v512, %v2220
    %v2222 = vpop.f32.mrb[0].mxu0
    %v2223 = vpop.f32.mrb[0].mxu0
    %v2224 = vpop.f32.mrb[0].mxu0
    %2225 = vdwg.mxu0
    %2226 = vmatprep.subr.bf16.mxu0 0
    %2227 = vmatpush1.bf16.msra.mxu0 %v340
    %2228 = vmatprep.subr.bf16.mxu0 0
    %2229 = vmatpush1.bf16.msra.mxu0 %v341
    %2230 = vmatprep.subr.bf16.mxu0 0
    %2231 = vmatpush1.bf16.msra.mxu0 0
    %2232 = vmatprep.subr.bf16.mxu0 0
    %2233 = vmatpush1.bf16.msra.mxu0 0
    %2234 = vmatprep.subr.bf16.mxu0 0
    %2235 = vmatpush1.bf16.msra.mxu0 0
    %2236 = vmatprep.subr.bf16.mxu0 0
    %2237 = vmatpush1.bf16.msra.mxu0 0
    %2238 = vmatprep.subr.bf16.mxu0 0
    %2239 = vmatpush1.bf16.msra.mxu0 0
    %2240 = vmatprep.subr.bf16.mxu0 0
    %2241 = vmatpush1.bf16.msra.mxu0 0
    %2242 = vmatprep.subr.bf16.mxu0 0
    %2243 = vmatpush1.bf16.msra.mxu0 0
    %2244 = vmatprep.subr.bf16.mxu0 0
    %2245 = vmatpush1.bf16.msra.mxu0 0
    %2246 = vmatprep.subr.bf16.mxu0 0
    %2247 = vmatpush1.bf16.msra.mxu0 0
    %2248 = vmatprep.subr.bf16.mxu0 0
    %2249 = vmatpush1.bf16.msra.mxu0 0
    %2250 = vmatprep.subr.bf16.mxu0 0
    %2251 = vmatpush1.bf16.msra.mxu0 0
    %2252 = vmatprep.subr.bf16.mxu0 0
    %2253 = vmatpush1.bf16.msra.mxu0 0
    %2254 = vmatprep.subr.bf16.mxu0 0
    %2255 = vmatpush1.bf16.msra.mxu0 0
    %2256 = vmatprep.subr.bf16.mxu0 0
    %2257 = vmatpush1.bf16.msra.mxu0 0
    %2258 = vmatprep.mubr.bf16.mxu0 0
    %2259 = vmatmul.mubr.bf16.gmra.mrb[0].mxu0 %v2066
    %v2260 = vpop.f32.mrb[0].mxu0
    %v2261 = vadd.f32 0.0, %v2260
    %v2262 = vpop.f32.mrb[0].mxu0
    %v2263 = vpop.f32.mrb[0].mxu0
    %v2264 = vpop.f32.mrb[0].mxu0
    %2265 = vdwg.mxu0
    %v2266 = vadd.f32 %v2221, %v2261
    %v2267 = vxor.u32 %v2266, 2147483648
    %v2268 = vmul.f32 %v2267, 1.442695
    %v2269 = vpow.pop %v2268
    %v2270 = vadd.f32 %v2269, 1.0
    %v2271 = vrcp.pop %v2270
    %v2272 = vmul.f32 1.0, %v2271
    %v2273 = vtanh.pop %v2266
    %v2274 = vmul.f32 %v2272, %v2048
    %2276 = vrot.lane.b32.xlu0 %v2273, 64
    %v2277 = vpop.permute.xlu0 %2276
    %v2279 = vmul.f32 %v2272, %v2277
    %2281 = vrot.lane.b32.xlu0 %v2279, 32
    %v2282 = vpop.permute.xlu0 %2281
    %v2284 = vadd.f32 %v2274, %v2282
    %v2285 = vtanh.pop %v2284
    %2287 = vrot.lane.b32.xlu0 %v2285, 64
    %v2288 = vpop.permute.xlu0 %2287
    %v2290 = vmul.f32 %v2272, %v2288
    %2292 = vrot.lane.b32.xlu0 %v2290, 32
    %v2293 = vpop.permute.xlu0 %2292
    %s2295 = scalar_lea.vmem [#allocation10], 28
    %2296 = vst.msk [vmem:[%s2295] sm:$0xf] %vm631, %v2293
    %v2297 = vpack.c.bf16 %v2290, %v2290
    %2299 = vrot.lane.b32.xlu0 %v2297, 32
    %v2300 = vpop.permute.xlu0 %2299
    %v2302 = vsel %vm357, %v2300, 0
    %2304 = vmatprep.subr.bf16.mxu0 0
    %2305 = vmatpush1.bf16.msra.mxu0 %v347
    %2306 = vmatprep.subr.bf16.mxu0 0
    %2307 = vmatpush1.bf16.msra.mxu0 %v348
    %2308 = vmatprep.subr.bf16.mxu0 0
    %2309 = vmatpush1.bf16.msra.mxu0 0
    %2310 = vmatprep.subr.bf16.mxu0 0
    %2311 = vmatpush1.bf16.msra.mxu0 0
    %2312 = vmatprep.subr.bf16.mxu0 0
    %2313 = vmatpush1.bf16.msra.mxu0 0
    %2314 = vmatprep.subr.bf16.mxu0 0
    %2315 = vmatpush1.bf16.msra.mxu0 0
    %2316 = vmatprep.subr.bf16.mxu0 0
    %2317 = vmatpush1.bf16.msra.mxu0 0
    %2318 = vmatprep.subr.bf16.mxu0 0
    %2319 = vmatpush1.bf16.msra.mxu0 0
    %2320 = vmatprep.subr.bf16.mxu0 0
    %2321 = vmatpush1.bf16.msra.mxu0 0
    %2322 = vmatprep.subr.bf16.mxu0 0
    %2323 = vmatpush1.bf16.msra.mxu0 0
    %2324 = vmatprep.subr.bf16.mxu0 0
    %2325 = vmatpush1.bf16.msra.mxu0 0
    %2326 = vmatprep.subr.bf16.mxu0 0
    %2327 = vmatpush1.bf16.msra.mxu0 0
    %2328 = vmatprep.subr.bf16.mxu0 0
    %2329 = vmatpush1.bf16.msra.mxu0 0
    %2330 = vmatprep.subr.bf16.mxu0 0
    %2331 = vmatpush1.bf16.msra.mxu0 0
    %2332 = vmatprep.subr.bf16.mxu0 0
    %2333 = vmatpush1.bf16.msra.mxu0 0
    %2334 = vmatprep.subr.bf16.mxu0 0
    %2335 = vmatpush1.bf16.msra.mxu0 0
    %2336 = vmatprep.mubr.bf16.mxu0 0
    %2337 = vmatmul.mubr.bf16.gmra.mrb[0].mxu0 %v2302
    %v2338 = vpop.f32.mrb[0].mxu0
    %v2339 = vadd.f32 %v638, %v2338
    %v2340 = vpop.f32.mrb[0].mxu0
    %v2341 = vpop.f32.mrb[0].mxu0
    %v2342 = vpop.f32.mrb[0].mxu0
    %2343 = vdwg.mxu0
    %s2344 = scalar_lea.vmem %s14, 28
    %2345 = vst.msk [vmem:[%s2344] sm:$0xf] %vm686, %v2339
    %v2346 = vpack.c.bf16 %v2185, %v2185
    %2348 = vrot.lane.b32.xlu0 %v2346, 32
    %v2349 = vpop.permute.xlu0 %2348
    %v2351 = vsel %vm357, %v2349, 0
    %2353 = vmatprep.subr.bf16.mxu0 0
    %2354 = vmatpush1.bf16.msra.mxu0 %v328
    %2355 = vmatprep.subr.bf16.mxu0 0
    %2356 = vmatpush1.bf16.msra.mxu0 %v329
    %2357 = vmatprep.subr.bf16.mxu0 0
    %2358 = vmatpush1.bf16.msra.mxu0 0
    %2359 = vmatprep.subr.bf16.mxu0 0
    %2360 = vmatpush1.bf16.msra.mxu0 0
    %2361 = vmatprep.subr.bf16.mxu0 0
    %2362 = vmatpush1.bf16.msra.mxu0 0
    %2363 = vmatprep.subr.bf16.mxu0 0
    %2364 = vmatpush1.bf16.msra.mxu0 0
    %2365 = vmatprep.subr.bf16.mxu0 0
    %2366 = vmatpush1.bf16.msra.mxu0 0
    %2367 = vmatprep.subr.bf16.mxu0 0
    %2368 = vmatpush1.bf16.msra.mxu0 0
    %2369 = vmatprep.subr.bf16.mxu0 0
    %2370 = vmatpush1.bf16.msra.mxu0 0
    %2371 = vmatprep.subr.bf16.mxu0 0
    %2372 = vmatpush1.bf16.msra.mxu0 0
    %2373 = vmatprep.subr.bf16.mxu0 0
    %2374 = vmatpush1.bf16.msra.mxu0 0
    %2375 = vmatprep.subr.bf16.mxu0 0
    %2376 = vmatpush1.bf16.msra.mxu0 0
    %2377 = vmatprep.subr.bf16.mxu0 0
    %2378 = vmatpush1.bf16.msra.mxu0 0
    %2379 = vmatprep.subr.bf16.mxu0 0
    %2380 = vmatpush1.bf16.msra.mxu0 0
    %2381 = vmatprep.subr.bf16.mxu0 0
    %2382 = vmatpush1.bf16.msra.mxu0 0
    %2383 = vmatprep.subr.bf16.mxu0 0
    %2384 = vmatpush1.bf16.msra.mxu0 0
    %2385 = vmatprep.mubr.bf16.mxu0 0
    %2386 = vmatmul.mubr.bf16.gmra.mrb[0].mxu0 %v2351
    %v2387 = vpop.f32.mrb[0].mxu0
    %v2388 = vadd.f32 0.0, %v2387
    %v2389 = vpop.f32.mrb[0].mxu0
    %v2390 = vpop.f32.mrb[0].mxu0
    %v2391 = vpop.f32.mrb[0].mxu0
    %2392 = vdwg.mxu0
    %v2394 = vrot.slane %v2388, 4
    %v2396 = vadd.f32 %v319, %v2394
    %v2397 = vxor.u32 %v2396, 2147483648
    %v2398 = vmul.f32 %v2397, 1.442695
    %v2399 = vpow.pop %v2398
    %v2400 = vadd.f32 %v2399, 1.0
    %v2401 = vrcp.pop %v2400
    %v2402 = vmul.f32 1.0, %v2401
    %v2403 = vtanh.pop %v2396
    %v2405 = vrot.slane %v2179, 4
    %v2407 = vmul.f32 %v2402, %v2405
    %2409 = vrot.lane.b32.xlu0 %v2403, 64
    %v2410 = vpop.permute.xlu0 %2409
    %v2412 = vmul.f32 %v2402, %v2410
    %2414 = vrot.lane.b32.xlu0 %v2412, 32
    %v2415 = vpop.permute.xlu0 %2414
    %v2417 = vadd.f32 %v2407, %v2415
    %v2418 = vtanh.pop %v2417
    %2420 = vrot.lane.b32.xlu0 %v2418, 64
    %v2421 = vpop.permute.xlu0 %2420
    %v2423 = vmul.f32 %v2402, %v2421
    %2424 = vmatprep.subr.bf16.mxu0 0
    %2425 = vmatpush1.bf16.msra.mxu0 %v334
    %2426 = vmatprep.subr.bf16.mxu0 0
    %2427 = vmatpush1.bf16.msra.mxu0 %v335
    %2428 = vmatprep.subr.bf16.mxu0 0
    %2429 = vmatpush1.bf16.msra.mxu0 0
    %2430 = vmatprep.subr.bf16.mxu0 0
    %2431 = vmatpush1.bf16.msra.mxu0 0
    %2432 = vmatprep.subr.bf16.mxu0 0
    %2433 = vmatpush1.bf16.msra.mxu0 0
    %2434 = vmatprep.subr.bf16.mxu0 0
    %2435 = vmatpush1.bf16.msra.mxu0 0
    %2436 = vmatprep.subr.bf16.mxu0 0
    %2437 = vmatpush1.bf16.msra.mxu0 0
    %2438 = vmatprep.subr.bf16.mxu0 0
    %2439 = vmatpush1.bf16.msra.mxu0 0
    %2440 = vmatprep.subr.bf16.mxu0 0
    %2441 = vmatpush1.bf16.msra.mxu0 0
    %2442 = vmatprep.subr.bf16.mxu0 0
    %2443 = vmatpush1.bf16.msra.mxu0 0
    %2444 = vmatprep.subr.bf16.mxu0 0
    %2445 = vmatpush1.bf16.msra.mxu0 0
    %2446 = vmatprep.subr.bf16.mxu0 0
    %2447 = vmatpush1.bf16.msra.mxu0 0
    %2448 = vmatprep.subr.bf16.mxu0 0
    %2449 = vmatpush1.bf16.msra.mxu0 0
    %2450 = vmatprep.subr.bf16.mxu0 0
    %2451 = vmatpush1.bf16.msra.mxu0 0
    %2452 = vmatprep.subr.bf16.mxu0 0
    %2453 = vmatpush1.bf16.msra.mxu0 0
    %2454 = vmatprep.subr.bf16.mxu0 0
    %2455 = vmatpush1.bf16.msra.mxu0 0
    %2456 = vmatprep.mubr.bf16.mxu0 0
    %2457 = vmatmul.mubr.bf16.gmra.mrb[0].mxu0 %v2351
    %v2458 = vpop.f32.mrb[0].mxu0
    %v2459 = vadd.f32 %v512, %v2458
    %v2460 = vpop.f32.mrb[0].mxu0
    %v2461 = vpop.f32.mrb[0].mxu0
    %v2462 = vpop.f32.mrb[0].mxu0
    %2463 = vdwg.mxu0
    %2464 = vmatprep.subr.bf16.mxu0 0
    %2465 = vmatpush1.bf16.msra.mxu0 %v340
    %2466 = vmatprep.subr.bf16.mxu0 0
    %2467 = vmatpush1.bf16.msra.mxu0 %v341
    %2468 = vmatprep.subr.bf16.mxu0 0
    %2469 = vmatpush1.bf16.msra.mxu0 0
    %2470 = vmatprep.subr.bf16.mxu0 0
    %2471 = vmatpush1.bf16.msra.mxu0 0
    %2472 = vmatprep.subr.bf16.mxu0 0
    %2473 = vmatpush1.bf16.msra.mxu0 0
    %2474 = vmatprep.subr.bf16.mxu0 0
    %2475 = vmatpush1.bf16.msra.mxu0 0
    %2476 = vmatprep.subr.bf16.mxu0 0
    %2477 = vmatpush1.bf16.msra.mxu0 0
    %2478 = vmatprep.subr.bf16.mxu0 0
    %2479 = vmatpush1.bf16.msra.mxu0 0
    %2480 = vmatprep.subr.bf16.mxu0 0
    %2481 = vmatpush1.bf16.msra.mxu0 0
    %2482 = vmatprep.subr.bf16.mxu0 0
    %2483 = vmatpush1.bf16.msra.mxu0 0
    %2484 = vmatprep.subr.bf16.mxu0 0
    %2485 = vmatpush1.bf16.msra.mxu0 0
    %2486 = vmatprep.subr.bf16.mxu0 0
    %2487 = vmatpush1.bf16.msra.mxu0 0
    %2488 = vmatprep.subr.bf16.mxu0 0
    %2489 = vmatpush1.bf16.msra.mxu0 0
    %2490 = vmatprep.subr.bf16.mxu0 0
    %2491 = vmatpush1.bf16.msra.mxu0 0
    %2492 = vmatprep.subr.bf16.mxu0 0
    %2493 = vmatpush1.bf16.msra.mxu0 0
    %2494 = vmatprep.subr.bf16.mxu0 0
    %2495 = vmatpush1.bf16.msra.mxu0 0
    %2496 = vmatprep.mubr.bf16.mxu0 0
    %2497 = vmatmul.mubr.bf16.gmra.mrb[0].mxu0 %v2302
    %v2498 = vpop.f32.mrb[0].mxu0
    %v2499 = vadd.f32 0.0, %v2498
    %v2500 = vpop.f32.mrb[0].mxu0
    %v2501 = vpop.f32.mrb[0].mxu0
    %v2502 = vpop.f32.mrb[0].mxu0
    %2503 = vdwg.mxu0
    %v2504 = vadd.f32 %v2459, %v2499
    %v2505 = vxor.u32 %v2504, 2147483648
    %v2506 = vmul.f32 %v2505, 1.442695
    %v2507 = vpow.pop %v2506
    %v2508 = vadd.f32 %v2507, 1.0
    %v2509 = vrcp.pop %v2508
    %v2510 = vmul.f32 1.0, %v2509
    %v2511 = vtanh.pop %v2504
    %v2512 = vmul.f32 %v2510, %v2284
    %2514 = vrot.lane.b32.xlu0 %v2511, 64
    %v2515 = vpop.permute.xlu0 %2514
    %v2517 = vmul.f32 %v2510, %v2515
    %2519 = vrot.lane.b32.xlu0 %v2517, 32
    %v2520 = vpop.permute.xlu0 %2519
    %v2522 = vadd.f32 %v2512, %v2520
    %v2523 = vtanh.pop %v2522
    %2525 = vrot.lane.b32.xlu0 %v2523, 64
    %v2526 = vpop.permute.xlu0 %2525
    %v2528 = vmul.f32 %v2510, %v2526
    %2530 = vrot.lane.b32.xlu0 %v2528, 32
    %v2531 = vpop.permute.xlu0 %2530
    %s2533 = scalar_lea.vmem [#allocation10], 32
    %2534 = vst.msk [vmem:[%s2533] sm:$0xf] %vm631, %v2531
    %v2535 = vpack.c.bf16 %v2528, %v2528
    %2537 = vrot.lane.b32.xlu0 %v2535, 32
    %v2538 = vpop.permute.xlu0 %2537
    %v2540 = vsel %vm357, %v2538, 0
    %2542 = vmatprep.subr.bf16.mxu0 0
    %2543 = vmatpush1.bf16.msra.mxu0 %v347
    %2544 = vmatprep.subr.bf16.mxu0 0
    %2545 = vmatpush1.bf16.msra.mxu0 %v348
    %2546 = vmatprep.subr.bf16.mxu0 0
    %2547 = vmatpush1.bf16.msra.mxu0 0
    %2548 = vmatprep.subr.bf16.mxu0 0
    %2549 = vmatpush1.bf16.msra.mxu0 0
    %2550 = vmatprep.subr.bf16.mxu0 0
    %2551 = vmatpush1.bf16.msra.mxu0 0
    %2552 = vmatprep.subr.bf16.mxu0 0
    %2553 = vmatpush1.bf16.msra.mxu0 0
    %2554 = vmatprep.subr.bf16.mxu0 0
    %2555 = vmatpush1.bf16.msra.mxu0 0
    %2556 = vmatprep.subr.bf16.mxu0 0
    %2557 = vmatpush1.bf16.msra.mxu0 0
    %2558 = vmatprep.subr.bf16.mxu0 0
    %2559 = vmatpush1.bf16.msra.mxu0 0
    %2560 = vmatprep.subr.bf16.mxu0 0
    %2561 = vmatpush1.bf16.msra.mxu0 0
    %2562 = vmatprep.subr.bf16.mxu0 0
    %2563 = vmatpush1.bf16.msra.mxu0 0
    %2564 = vmatprep.subr.bf16.mxu0 0
    %2565 = vmatpush1.bf16.msra.mxu0 0
    %2566 = vmatprep.subr.bf16.mxu0 0
    %2567 = vmatpush1.bf16.msra.mxu0 0
    %2568 = vmatprep.subr.bf16.mxu0 0
    %2569 = vmatpush1.bf16.msra.mxu0 0
    %2570 = vmatprep.subr.bf16.mxu0 0
    %2571 = vmatpush1.bf16.msra.mxu0 0
    %2572 = vmatprep.subr.bf16.mxu0 0
    %2573 = vmatpush1.bf16.msra.mxu0 0
    %2574 = vmatprep.mubr.bf16.mxu0 0
    %2575 = vmatmul.mubr.bf16.gmra.mrb[0].mxu0 %v2540
    %v2576 = vpop.f32.mrb[0].mxu0
    %v2577 = vadd.f32 %v638, %v2576
    %v2578 = vpop.f32.mrb[0].mxu0
    %v2579 = vpop.f32.mrb[0].mxu0
    %v2580 = vpop.f32.mrb[0].mxu0
    %2581 = vdwg.mxu0
    %s2582 = scalar_lea.vmem %s14, 32
    %2583 = vst.msk [vmem:[%s2582] sm:$0xf] %vm686, %v2577
    %v2584 = vpack.c.bf16 %v2423, %v2423
    %v2586 = vrot.slane %v2584, 2
    %2587 = vrot.lane.b32.xlu0 %v2586, 32
    %v2588 = vpop.permute.xlu0 %2587
    %v2590 = vsel %vm357, %v2588, 0
    %2592 = vmatprep.subr.bf16.mxu0 0
    %2593 = vmatpush1.bf16.msra.mxu0 %v334
    %2594 = vmatprep.subr.bf16.mxu0 0
    %2595 = vmatpush1.bf16.msra.mxu0 %v335
    %2596 = vmatprep.subr.bf16.mxu0 0
    %2597 = vmatpush1.bf16.msra.mxu0 0
    %2598 = vmatprep.subr.bf16.mxu0 0
    %2599 = vmatpush1.bf16.msra.mxu0 0
    %2600 = vmatprep.subr.bf16.mxu0 0
    %2601 = vmatpush1.bf16.msra.mxu0 0
    %2602 = vmatprep.subr.bf16.mxu0 0
    %2603 = vmatpush1.bf16.msra.mxu0 0
    %2604 = vmatprep.subr.bf16.mxu0 0
    %2605 = vmatpush1.bf16.msra.mxu0 0
    %2606 = vmatprep.subr.bf16.mxu0 0
    %2607 = vmatpush1.bf16.msra.mxu0 0
    %2608 = vmatprep.subr.bf16.mxu0 0
    %2609 = vmatpush1.bf16.msra.mxu0 0
    %2610 = vmatprep.subr.bf16.mxu0 0
    %2611 = vmatpush1.bf16.msra.mxu0 0
    %2612 = vmatprep.subr.bf16.mxu0 0
    %2613 = vmatpush1.bf16.msra.mxu0 0
    %2614 = vmatprep.subr.bf16.mxu0 0
    %2615 = vmatpush1.bf16.msra.mxu0 0
    %2616 = vmatprep.subr.bf16.mxu0 0
    %2617 = vmatpush1.bf16.msra.mxu0 0
    %2618 = vmatprep.subr.bf16.mxu0 0
    %2619 = vmatpush1.bf16.msra.mxu0 0
    %2620 = vmatprep.subr.bf16.mxu0 0
    %2621 = vmatpush1.bf16.msra.mxu0 0
    %2622 = vmatprep.subr.bf16.mxu0 0
    %2623 = vmatpush1.bf16.msra.mxu0 0
    %2624 = vmatprep.mubr.bf16.mxu0 0
    %2625 = vmatmul.mubr.bf16.gmra.mrb[0].mxu0 %v2590
    %v2626 = vpop.f32.mrb[0].mxu0
    %v2627 = vadd.f32 %v512, %v2626
    %v2628 = vpop.f32.mrb[0].mxu0
    %v2629 = vpop.f32.mrb[0].mxu0
    %v2630 = vpop.f32.mrb[0].mxu0
    %2631 = vdwg.mxu0
    %2632 = vmatprep.subr.bf16.mxu0 0
    %2633 = vmatpush1.bf16.msra.mxu0 %v340
    %2634 = vmatprep.subr.bf16.mxu0 0
    %2635 = vmatpush1.bf16.msra.mxu0 %v341
    %2636 = vmatprep.subr.bf16.mxu0 0
    %2637 = vmatpush1.bf16.msra.mxu0 0
    %2638 = vmatprep.subr.bf16.mxu0 0
    %2639 = vmatpush1.bf16.msra.mxu0 0
    %2640 = vmatprep.subr.bf16.mxu0 0
    %2641 = vmatpush1.bf16.msra.mxu0 0
    %2642 = vmatprep.subr.bf16.mxu0 0
    %2643 = vmatpush1.bf16.msra.mxu0 0
    %2644 = vmatprep.subr.bf16.mxu0 0
    %2645 = vmatpush1.bf16.msra.mxu0 0
    %2646 = vmatprep.subr.bf16.mxu0 0
    %2647 = vmatpush1.bf16.msra.mxu0 0
    %2648 = vmatprep.subr.bf16.mxu0 0
    %2649 = vmatpush1.bf16.msra.mxu0 0
    %2650 = vmatprep.subr.bf16.mxu0 0
    %2651 = vmatpush1.bf16.msra.mxu0 0
    %2652 = vmatprep.subr.bf16.mxu0 0
    %2653 = vmatpush1.bf16.msra.mxu0 0
    %2654 = vmatprep.subr.bf16.mxu0 0
    %2655 = vmatpush1.bf16.msra.mxu0 0
    %2656 = vmatprep.subr.bf16.mxu0 0
    %2657 = vmatpush1.bf16.msra.mxu0 0
    %2658 = vmatprep.subr.bf16.mxu0 0
    %2659 = vmatpush1.bf16.msra.mxu0 0
    %2660 = vmatprep.subr.bf16.mxu0 0
    %2661 = vmatpush1.bf16.msra.mxu0 0
    %2662 = vmatprep.subr.bf16.mxu0 0
    %2663 = vmatpush1.bf16.msra.mxu0 0
    %2664 = vmatprep.mubr.bf16.mxu0 0
    %2665 = vmatmul.mubr.bf16.gmra.mrb[0].mxu0 %v2540
    %v2666 = vpop.f32.mrb[0].mxu0
    %v2667 = vadd.f32 0.0, %v2666
    %v2668 = vpop.f32.mrb[0].mxu0
    %v2669 = vpop.f32.mrb[0].mxu0
    %v2670 = vpop.f32.mrb[0].mxu0
    %2671 = vdwg.mxu0
    %v2672 = vadd.f32 %v2627, %v2667
    %v2673 = vxor.u32 %v2672, 2147483648
    %v2674 = vmul.f32 %v2673, 1.442695
    %v2675 = vpow.pop %v2674
    %v2676 = vadd.f32 %v2675, 1.0
    %v2677 = vrcp.pop %v2676
    %v2678 = vmul.f32 1.0, %v2677
    %v2679 = vtanh.pop %v2672
    %v2680 = vmul.f32 %v2678, %v2522
    %2682 = vrot.lane.b32.xlu0 %v2679, 64
    %v2683 = vpop.permute.xlu0 %2682
    %v2685 = vmul.f32 %v2678, %v2683
    %2687 = vrot.lane.b32.xlu0 %v2685, 32
    %v2688 = vpop.permute.xlu0 %2687
    %v2690 = vadd.f32 %v2680, %v2688
    %v2691 = vtanh.pop %v2690
    %2693 = vrot.lane.b32.xlu0 %v2691, 64
    %v2694 = vpop.permute.xlu0 %2693
    %v2696 = vmul.f32 %v2678, %v2694
    %2698 = vrot.lane.b32.xlu0 %v2696, 32
    %v2699 = vpop.permute.xlu0 %2698
    %s2701 = scalar_lea.vmem [#allocation10], 36
    %2702 = vst.msk [vmem:[%s2701] sm:$0xf] %vm631, %v2699
    %v2703 = vpack.c.bf16 %v2696, %v2696
    %2705 = vrot.lane.b32.xlu0 %v2703, 32
    %v2706 = vpop.permute.xlu0 %2705
    %v2708 = vsel %vm357, %v2706, 0
    %2710 = vmatprep.subr.bf16.mxu0 0
    %2711 = vmatpush1.bf16.msra.mxu0 %v347
    %2712 = vmatprep.subr.bf16.mxu0 0
    %2713 = vmatpush1.bf16.msra.mxu0 %v348
    %2714 = vmatprep.subr.bf16.mxu0 0
    %2715 = vmatpush1.bf16.msra.mxu0 0
    %2716 = vmatprep.subr.bf16.mxu0 0
    %2717 = vmatpush1.bf16.msra.mxu0 0
    %2718 = vmatprep.subr.bf16.mxu0 0
    %2719 = vmatpush1.bf16.msra.mxu0 0
    %2720 = vmatprep.subr.bf16.mxu0 0
    %2721 = vmatpush1.bf16.msra.mxu0 0
    %2722 = vmatprep.subr.bf16.mxu0 0
    %2723 = vmatpush1.bf16.msra.mxu0 0
    %2724 = vmatprep.subr.bf16.mxu0 0
    %2725 = vmatpush1.bf16.msra.mxu0 0
    %2726 = vmatprep.subr.bf16.mxu0 0
    %2727 = vmatpush1.bf16.msra.mxu0 0
    %2728 = vmatprep.subr.bf16.mxu0 0
    %2729 = vmatpush1.bf16.msra.mxu0 0
    %2730 = vmatprep.subr.bf16.mxu0 0
    %2731 = vmatpush1.bf16.msra.mxu0 0
    %2732 = vmatprep.subr.bf16.mxu0 0
    %2733 = vmatpush1.bf16.msra.mxu0 0
    %2734 = vmatprep.subr.bf16.mxu0 0
    %2735 = vmatpush1.bf16.msra.mxu0 0
    %2736 = vmatprep.subr.bf16.mxu0 0
    %2737 = vmatpush1.bf16.msra.mxu0 0
    %2738 = vmatprep.subr.bf16.mxu0 0
    %2739 = vmatpush1.bf16.msra.mxu0 0
    %2740 = vmatprep.subr.bf16.mxu0 0
    %2741 = vmatpush1.bf16.msra.mxu0 0
    %2742 = vmatprep.mubr.bf16.mxu0 0
    %2743 = vmatmul.mubr.bf16.gmra.mrb[0].mxu0 %v2708
    %v2744 = vpop.f32.mrb[0].mxu0
    %v2745 = vadd.f32 %v638, %v2744
    %v2746 = vpop.f32.mrb[0].mxu0
    %v2747 = vpop.f32.mrb[0].mxu0
    %v2748 = vpop.f32.mrb[0].mxu0
    %2749 = vdwg.mxu0
    %s2750 = scalar_lea.vmem %s14, 36
    %2751 = vst.msk [vmem:[%s2750] sm:$0xf] %vm686, %v2745
    // Predicated region
    $region70: #{dorsal_pathway0_forward.1} parent=1 // pred_check
      _
    $region71: #{dorsal_pathway0_forward.1} parent=1 // pred_check_branch
      %2753 = sbr.rel (0) target = $region73
    $region72: #{dorsal_pathway0_forward.1} parent=1 // pred_region
      %s2755 = ssub.s32 640, 640
      %2756 = vsyncadd [#allocation4], %s2755
      %s2757 = sshll.u32 [#allocation10], 4
      %s2758 = int_to_ptr.vmem [resolvable:$true] %s2757
      %2763 = dma.vmem_to_hbm [thread:$0]  %s2758, 640, %s13, [#allocation4], 64, 64, 4
    $region73: #{dorsal_pathway0_forward.1} parent=1 // pred_fallthru
      _
    // Predicated region
    $region74: #{dorsal_pathway0_forward.1} parent=1 // pred_check
      _
    $region75: #{dorsal_pathway0_forward.1} parent=1 // pred_check_branch
      %2765 = sbr.rel (0) target = $region77
    $region76: #{dorsal_pathway0_forward.1} parent=1 // pred_region
      _
    $region77: #{dorsal_pathway0_forward.1} parent=1 // pred_fallthru
      _
    // Predicated region
    $region78: #{dorsal_pathway0_forward.1} parent=1 // pred_check
      _
    $region79: #{dorsal_pathway0_forward.1} parent=1 // pred_check_branch
      %2767 = sbr.rel (0) target = $region81
    $region80: #{dorsal_pathway0_forward.1} parent=1 // pred_region
      %2768 = dma.done [#allocation4], 640
    $region81: #{dorsal_pathway0_forward.1} parent=1 // pred_fallthru
      _
    // Predicated region
    $region82: #{dorsal_pathway0_forward.1} parent=1 // pred_check
      _
    $region83: #{dorsal_pathway0_forward.1} parent=1 // pred_check_branch
      %2770 = sbr.rel (0) target = $region85
    $region84: #{dorsal_pathway0_forward.1} parent=1 // pred_region
      _
    $region85: #{dorsal_pathway0_forward.1} parent=1 // pred_fallthru
      _
    %2771 = vsyncpa [#allocation3], 1
    %2772 = vsyncpa [#allocation6], 1
    %2773 = vsyncpa [#allocation9], 1
    %2774 = vsyncpa [#allocation4], 1

</llo_original>
